<compile_context>
chip_gen: v7x
topology: tpu7x:2x2x1
jax: 0.10.0
libtpu: 0.0.40
codegen_flags: <defaults>
</compile_context>

<pallas_src>
import itertools

import numpy as np
import jax
import jax.numpy as jnp
from jax.experimental import pallas as pl
from jax.experimental.pallas import tpu as pltpu

# ---------------------------------------------------------------------------
# Geometric algebra Cl(1,3) tables (built once in numpy)
# ---------------------------------------------------------------------------
_METRIC_VEC = [1.0, -1.0, -1.0, -1.0]          # signature (+,-,-,-)
_BLADES = [()]
for _g in range(1, 5):
    _BLADES += list(itertools.combinations(range(4), _g))
_BLADE_INDEX = {b: i for i, b in enumerate(_BLADES)}
BLADE_GRADE = np.array([len(b) for b in _BLADES], dtype=np.int32)   # (16,)


def _gp_blades(a, b):
    lst = list(a) + list(b)
    sign = 1.0
    for i in range(len(lst)):
        for j in range(len(lst) - 1 - i):
            if lst[j] > lst[j + 1]:
                lst[j], lst[j + 1] = lst[j + 1], lst[j]
                sign = -sign
    out = []
    k = 0
    while k < len(lst):
        if k + 1 < len(lst) and lst[k] == lst[k + 1]:
            sign *= _METRIC_VEC[lst[k]]
            k += 2
        else:
            out.append(lst[k])
            k += 1
    return tuple(out), sign


CAYLEY = np.zeros((16, 16, 16), dtype=np.float32)
for _i, _a in enumerate(_BLADES):
    for _j, _b in enumerate(_BLADES):
        _res, _s = _gp_blades(_a, _b)
        CAYLEY[_i, _j, _BLADE_INDEX[_res]] = _s

# Lorentz-invariant blade metric: <e_A, e_A> = rev(e_A) e_A |_scalar
IP_METRIC = np.zeros((16,), dtype=np.float32)
for _b in range(16):
    _g = int(BLADE_GRADE[_b])
    _rev = (-1.0) ** (_g * (_g - 1) // 2)
    IP_METRIC[_b] = _rev * CAYLEY[_b, _b, 0]

_NEG = -1e30     # additive mask value (finite: exp underflows cleanly to 0)


def _round_up(x, m):
    return ((x + m - 1) // m) * m


def _bf16(w):
    return jnp.asarray(np.asarray(w, np.float32)).astype(jnp.bfloat16)


def _f32(w):
    return jnp.asarray(np.asarray(w, np.float32))


# ---------------------------------------------------------------------------
# Packing helpers (XLA glue)
# ---------------------------------------------------------------------------
def pack_pad(mv, s, fp):
    flat = mv.reshape(mv.shape[:-2] + (mv.shape[-2] * 16,))
    x = jnp.concatenate([flat, s], axis=-1)
    pad = fp - x.shape[-1]
    if pad > 0:
        x = jnp.pad(x, [(0, 0)] * (x.ndim - 1) + [(0, pad)])
    return x


# ---------------------------------------------------------------------------
# In-kernel fused EquiLayerNorm (mv channels) + LayerNorm (scalars), lane-dense.
#   sels  : (FP, ceil8(C))   metric-weighted per-channel selector
#   masks : (2, FP)          row 0 = mv-column mask, row 1 = scalar-column mask
# Scalar mean / variance use masked VPU multiplies + XLU row reductions; variance is
# computed mean-subtracted (matches torch.nn.functional.layer_norm numerics better).
# ---------------------------------------------------------------------------
def _equi_norm(x, sels, masks, n_mv, n_s, mv_eps=0.01, s_eps=1e-5):
    mv_mask = masks[0:1, :]
    s_mask = masks[1:2, :]
    sq = x * x
    ch = jnp.dot(sq, sels, preferred_element_type=jnp.float32)        # per-channel <v,v>
    inv_mv = jax.lax.rsqrt(
        jnp.sum(jnp.abs(ch), axis=-1, keepdims=True) * (1.0 / float(n_mv)) + mv_eps)
    mu = jnp.sum(x * s_mask, axis=-1, keepdims=True) * (1.0 / float(n_s))
    xc = (x - mu) * s_mask
    var = jnp.sum(xc * xc, axis=-1, keepdims=True) * (1.0 / float(n_s))
    inv_s = jax.lax.rsqrt(var + s_eps)
    return x * (inv_mv * mv_mask) + xc * inv_s


# ---------------------------------------------------------------------------
# In-kernel multi-head invariant attention over a batch tile.
#   q16/k16/v16 : bf16 (TB*Nq, H*DH) / (TB*Nk, H*DH) / (TB*Nk, H*DH)
#   mask_add    : f32  (TB*Nq, TB*Nk) block-diagonal (0 valid / -1e30 invalid)
#   wo          : bf16 (H*DH, FP) output projection; head outputs are accumulated
#                 straight into the projection (no concat).
# The attention scale is pre-folded into Q and the blade metric into K.
# ---------------------------------------------------------------------------
def _mh_attention(q16, k16, v16, mask_add, wo, H, DH):
    out = None
    for hd in range(H):                                                # static unroll
        q = q16[:, hd * DH:(hd + 1) * DH]
        k = k16[:, hd * DH:(hd + 1) * DH]
        v = v16[:, hd * DH:(hd + 1) * DH]
        logits = jnp.einsum("nd,md->nm", q, k,
                            preferred_element_type=jnp.float32) + mask_add
        mx = jnp.max(logits, axis=-1, keepdims=True)
        e = jnp.exp(logits - mx)
        probs = (e / jnp.sum(e, axis=-1, keepdims=True)).astype(jnp.bfloat16)
        pv = jnp.dot(probs, v, preferred_element_type=jnp.float32)
        contrib = jnp.dot(pv.astype(jnp.bfloat16), wo[hd * DH:(hd + 1) * DH, :],
                          preferred_element_type=jnp.float32)
        out = contrib if out is None else out + contrib
    return out


# ---------------------------------------------------------------------------
# The single fused kernel: self-attention block -> cross-attention block -> geo-MLP block
# ---------------------------------------------------------------------------
def _make_fused_kernel(H, DH, C, S, Cc, Sc):
    HD = H * DH

    def kernel(x_ref, c_ref,
               selsx_ref, masksx_ref, selsc_ref, masksc_ref,
               smask_ref, cmask_ref,
               wqkv_ref, bqkv_ref, wo1_ref, bo1_ref,
               wq_ref, bq_ref, wkv_ref, bkv_ref, wo2_ref, bo2_ref,
               wl_ref, bl_ref, wr_ref, br_ref, ws_ref, bs_ref,
               g_ref, gp_ref, gq_ref, wout_ref, bout_ref,
               o_ref):
        xf = x_ref[...]                                                # (TB*N, FP)  f32
        cf = c_ref[...]                                                # (TB*M, FCP) f32
        selsx = selsx_ref[...]
        masksx = masksx_ref[...]

        # ---- 1) norm -> self-attention -> residual --------------------------------
        h = _equi_norm(xf, selsx, masksx, C, S)
        qkv = jnp.dot(h.astype(jnp.bfloat16), wqkv_ref[...],
                      preferred_element_type=jnp.float32) + bqkv_ref[...]
        qkv16 = qkv.astype(jnp.bfloat16)
        attn = _mh_attention(qkv16[:, :HD], qkv16[:, HD:2 * HD], qkv16[:, 2 * HD:],
                             smask_ref[...], wo1_ref[...], H, DH)
        x1 = xf + attn + bo1_ref[...]

        # ---- 2) norm(x), norm(cond) -> cross-attention -> residual ----------------
        hq = _equi_norm(x1, selsx, masksx, C, S)
        hc = _equi_norm(cf, selsc_ref[...], masksc_ref[...], Cc, Sc)
        qh = (jnp.dot(hq.astype(jnp.bfloat16), wq_ref[...],
                      preferred_element_type=jnp.float32) + bq_ref[...]
              ).astype(jnp.bfloat16)
        kvh = (jnp.dot(hc.astype(jnp.bfloat16), wkv_ref[...],
                       preferred_element_type=jnp.float32) + bkv_ref[...]
               ).astype(jnp.bfloat16)
        attn2 = _mh_attention(qh, kvh[:, :HD], kvh[:, HD:],
                              cmask_ref[...], wo2_ref[...], H, DH)
        x2 = x1 + attn2 + bo2_ref[...]

        # ---- 3) norm -> geometric MLP -> residual ----------------------------------
        hm = _equi_norm(x2, selsx, masksx, C, S)
        hm16 = hm.astype(jnp.bfloat16)
        l = jnp.dot(hm16, wl_ref[...], preferred_element_type=jnp.float32) + bl_ref[...]
        r = jnp.dot(hm16, wr_ref[...], preferred_element_type=jnp.float32) + br_ref[...]
        # geometric product of all channels at once against the block-diag Cayley matrix
        acc = jnp.dot((l * r).astype(jnp.bfloat16), g_ref[...],
                      preferred_element_type=jnp.float32)
        # scalar-gated GeLU: gate = GeLU(per-channel scalar blade), broadcast to 16 blades
        # TODO(synk): PyTorch default GELU is exact erf; tanh approximation used here.
        gate = jnp.dot(
            jax.nn.gelu(jnp.dot(acc, gp_ref[...], preferred_element_type=jnp.float32),
                        approximate=True),
            gq_ref[...], preferred_element_type=jnp.float32)
        spart = jax.nn.gelu(
            jnp.dot(hm16, ws_ref[...], preferred_element_type=jnp.float32) + bs_ref[...],
            approximate=True)
        mid = (gate * acc + spart).astype(jnp.bfloat16)
        x3 = x2 + jnp.dot(mid, wout_ref[...],
                          preferred_element_type=jnp.float32) + bout_ref[...]

        o_ref[...] = x3

    return kernel


# ---------------------------------------------------------------------------
# Parameter construction (deterministic, numpy).  EquiLinear grade-wise mixing, the
# attention scale, and the Lorentz blade metric are folded into padded, head-contiguous
# dense bf16 matrices so the kernel only sees lane-aligned bf16 matmuls.
# ---------------------------------------------------------------------------
def make_equilinear(rng, in_mv, in_s, out_mv, out_s, small=False):
    scale = 0.02 if small else 1.0       # output_init='small'
    wg = rng.normal(size=(5, out_mv, in_mv)).astype(np.float32) / np.sqrt(in_mv) * scale
    ws2mv = rng.normal(size=(out_mv, in_s)).astype(np.float32) / np.sqrt(in_s) * scale
    wmv2s = rng.normal(size=(out_s, in_mv)).astype(np.float32) / np.sqrt(in_mv) * scale
    ws2s = rng.normal(size=(out_s, in_s)).astype(np.float32) / np.sqrt(in_s) * scale

    W = np.zeros((in_mv * 16 + in_s, out_mv * 16 + out_s), np.float32)
    Wmm = np.zeros((in_mv, 16, out_mv, 16), np.float32)
    for b in range(16):                   # grade-wise (Lorentz-equivariant) channel mixing
        Wmm[:, b, :, b] = wg[BLADE_GRADE[b]].T
    W[: in_mv * 16, : out_mv * 16] = Wmm.reshape(in_mv * 16, out_mv * 16)
    Wsm = np.zeros((in_s, out_mv, 16), np.float32)
    Wsm[:, :, 0] = ws2mv.T                # scalars -> scalar blade of mv outputs
    W[in_mv * 16:, : out_mv * 16] = Wsm.reshape(in_s, out_mv * 16)
    Wms = np.zeros((in_mv, 16, out_s), np.float32)
    Wms[:, 0, :] = wmv2s.T                # mv scalar blade -> scalar outputs
    W[: in_mv * 16, out_mv * 16:] = Wms.reshape(in_mv * 16, out_s)
    W[in_mv * 16:, out_mv * 16:] = ws2s.T
    bias = np.zeros((out_mv * 16 + out_s,), np.float32)
    return W, bias


def _pad_rows(W, rows_p):
    out = np.zeros((rows_p, W.shape[1]), np.float32)
    out[: W.shape[0]] = W
    return out


def _pad_cols(W, cols_p):
    out = np.zeros((W.shape[0], cols_p), np.float32)
    out[:, : W.shape[1]] = W
    return out


def _pad_vec(b, n_p):
    out = np.zeros((n_p,), np.float32)
    out[: b.shape[0]] = b
    return out


def _headify_cols(W, b, H, mvh, sh, DH):
    # standard [H*mvh mv (16 each) | H*sh scalars] -> per-head contiguous, padded to DH
    Wn = np.zeros((W.shape[0], H * DH), np.float32)
    bn = np.zeros((H * DH,), np.float32)
    for h in range(H):
        mv_src = slice(h * mvh * 16, (h + 1) * mvh * 16)
        s_src = slice(H * mvh * 16 + h * sh, H * mvh * 16 + (h + 1) * sh)
        Wn[:, h * DH: h * DH + mvh * 16] = W[:, mv_src]
        Wn[:, h * DH + mvh * 16: h * DH + mvh * 16 + sh] = W[:, s_src]
        bn[h * DH: h * DH + mvh * 16] = b[mv_src]
        bn[h * DH + mvh * 16: h * DH + mvh * 16 + sh] = b[s_src]
    return Wn, bn


def _headify_rows(W, H, mvh, sh, DH):
    Wn = np.zeros((H * DH, W.shape[1]), np.float32)
    for h in range(H):
        Wn[h * DH: h * DH + mvh * 16, :] = W[h * mvh * 16:(h + 1) * mvh * 16, :]
        Wn[h * DH + mvh * 16: h * DH + mvh * 16 + sh, :] = \
            W[H * mvh * 16 + h * sh: H * mvh * 16 + (h + 1) * sh, :]
    return Wn


def make_norm_consts(C, S, FP):
    CW = _round_up(C, 8)
    sels = np.zeros((FP, CW), np.float32)
    for c in range(C):
        sels[c * 16:(c + 1) * 16, c] = IP_METRIC
    masks = np.zeros((2, FP), np.float32)
    masks[0, : C * 16] = 1.0
    masks[1, C * 16: C * 16 + S] = 1.0
    return jnp.asarray(sels), jnp.asarray(masks)


def make_mlp_params(rng, C, S, FP):
    HID = 2 * C * 16 + 2 * S
    MIDP = _round_up(C * 16 + 2 * S, 128)
    w_in, b_in = make_equilinear(rng, C, S, 2 * C, 2 * S)
    w_out, b_out = make_equilinear(rng, C, 2 * S, C, S, small=True)

    # expansion matrices so that (h@E)*(h@F) holds all outer products l_c[i]*r_c[j]
    E = np.zeros((HID, C * 256), np.float32)
    F = np.zeros((HID, C * 256), np.float32)
    for c in range(C):
        for i in range(16):
            for j in range(16):
                E[c * 16 + i, c * 256 + i * 16 + j] = 1.0
                F[C * 16 + c * 16 + j, c * 256 + i * 16 + j] = 1.0
    Ssel = np.zeros((HID, MIDP), np.float32)
    for t in range(2 * S):
        Ssel[2 * C * 16 + t, C * 16 + t] = 1.0
    G = np.zeros((C * 256, MIDP), np.float32)        # block-diag Cayley (per channel)
    for c in range(C):
        G[c * 256:(c + 1) * 256, c * 16:(c + 1) * 16] = CAYLEY.reshape(256, 16)
    CG = _round_up(C, 8)
    GP = np.zeros((MIDP, CG), np.float32)            # pick per-channel scalar blade
    GQ = np.zeros((CG, MIDP), np.float32)            # broadcast gate to the 16 blades
    for c in range(C):
        GP[c * 16, c] = 1.0
        GQ[c, c * 16:(c + 1) * 16] = 1.0

    wl = _pad_rows(w_in @ E, FP)
    wr = _pad_rows(w_in @ F, FP)
    ws = _pad_rows(w_in @ Ssel, FP)
    wout = _pad_cols(_pad_rows(w_out, MIDP), FP)
    return dict(
        wl=_bf16(wl), bl=_f32((b_in @ E)[None, :]),
        wr=_bf16(wr), br=_f32((b_in @ F)[None, :]),
        ws=_bf16(ws), bs=_f32((b_in @ Ssel)[None, :]),
        g=_bf16(G), gp=_f32(GP), gq=_f32(GQ),
        wout=_bf16(wout), bout=_f32(_pad_vec(b_out, FP)[None, :]))


def init_params(mv_c, s_c, cond_mv_c, cond_s_c, num_heads, seed=0):
    rng = np.random.default_rng(seed)
    H = num_heads
    mvh, sh = mv_c, s_c
    FP = _round_up(mv_c * 16 + s_c, 128)
    FCP = _round_up(cond_mv_c * 16 + cond_s_c, 128)
    DH = _round_up(mvh * 16 + sh, 128)
    # torch SDPA convention: scale = 1/sqrt(per-head key dim), folded into Q weights.
    scale = 1.0 / float(np.sqrt(mvh * 16 + sh))

    # per-head Lorentz blade metric (applied to K) -> folded into K projection weights
    hmet = np.zeros((DH,), np.float32)
    hmet[: mvh * 16] = np.tile(IP_METRIC, mvh)
    hmet[mvh * 16: mvh * 16 + sh] = 1.0
    kmet = np.tile(hmet, H)[None, :]

    selsx, masksx = make_norm_consts(mv_c, s_c, FP)
    selsc, masksc = make_norm_consts(cond_mv_c, cond_s_c, FCP)

    def build_attn(kv_mv, kv_s, fkv, cross):
        wq, bq = make_equilinear(rng, mv_c, s_c, H * mvh, H * sh)
        wk, bk = make_equilinear(rng, kv_mv, kv_s, H * mvh, H * sh)
        wv, bv = make_equilinear(rng, kv_mv, kv_s, H * mvh, H * sh)
        wo, bo = make_equilinear(rng, H * mvh, H * sh, mv_c, s_c, small=True)
        wq, bq = _headify_cols(wq, bq, H, mvh, sh, DH)
        wk, bk = _headify_cols(wk, bk, H, mvh, sh, DH)
        wv, bv = _headify_cols(wv, bv, H, mvh, sh, DH)
        wq, bq = wq * scale, bq * scale        # fold attention scale into Q
        wk, bk = wk * kmet, bk * kmet[0]       # fold blade metric into K
        wo = _pad_cols(_headify_rows(wo, H, mvh, sh, DH), FP)
        bo = _pad_vec(bo, FP)
        if not cross:
            wqkv = _pad_rows(np.concatenate([wq, wk, wv], axis=1), FP)
            bqkv = np.concatenate([bq, bk, bv])
            return dict(wqkv=_bf16(wqkv), bqkv=_f32(bqkv[None, :]),
                        wo=_bf16(wo), bo=_f32(bo[None, :]))
        wqp = _pad_rows(wq, FP)
        wkv = _pad_rows(np.concatenate([wk, wv], axis=1), fkv)
        bkv = np.concatenate([bk, bv])
        return dict(wq=_bf16(wqp), bq=_f32(bq[None, :]),
                    wkv=_bf16(wkv), bkv=_f32(bkv[None, :]),
                    wo=_bf16(wo), bo=_f32(bo[None, :]))

    attn = build_attn(mv_c, s_c, FP, cross=False)
    xattn = build_attn(cond_mv_c, cond_s_c, FCP, cross=True)
    mlp = make_mlp_params(rng, mv_c, s_c, FP)
    meta = dict(H=H, DH=DH, FP=FP, FCP=FCP,
                n_mv=mv_c, n_s=s_c, nc_mv=cond_mv_c, nc_s=cond_s_c)
    return dict(attn=attn, xattn=xattn, mlp=mlp, meta=meta,
                selsx=selsx, masksx=masksx, selsc=selsc, masksc=masksc)


def _make_block_mask(TB, nq, nk, nk_valid):
    """Block-diagonal additive mask: query rows of batch b may only see the first
    nk_valid key columns of batch b (masks both cross-batch and padded keys)."""
    m = np.full((TB * nq, TB * nk), _NEG, np.float32)
    for b in range(TB):
        m[b * nq:(b + 1) * nq, b * nk: b * nk + nk_valid] = 0.0
    return jnp.asarray(m)


# ---------------------------------------------------------------------------
# ConditionalLGATrBlock forward (ONE fused pallas_call, grid over batch tiles)
# ---------------------------------------------------------------------------
def conditional_lgatr_block(multivectors, multivectors_condition, scalars,
                            scalars_condition, params, num_heads):
    # TODO(synk): optional attention-bias masks (attn_kwargs / crossattn_kwargs) and
    #             dropout are not implemented (eval-mode forward only).
    del num_heads  # heads are baked into params
    meta = params["meta"]
    C, S = meta["n_mv"], meta["n_s"]
    Cc, Sc = meta["nc_mv"], meta["nc_s"]
    FP, FCP, H, DH = meta["FP"], meta["FCP"], meta["H"], meta["DH"]

    B, N = multivectors.shape[0], multivectors.shape[1]
    M = multivectors_condition.shape[1]

    x = pack_pad(multivectors, scalars, FP)                  # (B, N, FP)
    cond = pack_pad(multivectors_condition, scalars_condition, FCP)

    # pad items to multiples of 8 (sublane tile) and batch to a multiple of the batch tile
    N_p, M_p = _round_up(N, 8), _round_up(M, 8)
    TB = max(1, min(B, max(1, 256 // N_p), 8))               # batch elements per grid step
    B_p = _round_up(B, TB)
    x = jnp.pad(x, ((0, B_p - B), (0, N_p - N), (0, 0)))
    cond = jnp.pad(cond, ((0, B_p - B), (0, M_p - M), (0, 0)))
    xr = x.reshape(B_p * N_p, FP)
    cr = cond.reshape(B_p * M_p, FCP)

    smask = _make_block_mask(TB, N_p, N_p, N)                # self-attn mask
    cmask = _make_block_mask(TB, N_p, M_p, M)                # cross-attn mask

    a, xa, m = params["attn"], params["xattn"], params["mlp"]
    consts = [params["selsx"], params["masksx"], params["selsc"], params["masksc"],
              smask, cmask,
              a["wqkv"], a["bqkv"], a["wo"], a["bo"],
              xa["wq"], xa["bq"], xa["wkv"], xa["bkv"], xa["wo"], xa["bo"],
              m["wl"], m["bl"], m["wr"], m["br"], m["ws"], m["bs"],
              m["g"], m["gp"], m["gq"], m["wout"], m["bout"]]

    kernel = _make_fused_kernel(H, DH, C, S, Cc, Sc)

    # explicit VMEM budget: 2x (double-buffered) constants + pipelined I/O tiles + margin
    const_bytes = sum(int(np.prod(w.shape)) * w.dtype.itemsize for w in consts)
    tile_bytes = 4 * (TB * N_p * FP * 2 + TB * M_p * FCP)
    vmem_lim = int(min(64 << 20, max(32 << 20, 2 * (const_bytes + 2 * tile_bytes) + (8 << 20))))

    def _const_spec(w):
        return pl.BlockSpec(w.shape, lambda i, _n=w.ndim: (0,) * _n)

    out = pl.pallas_call(
        kernel,
        out_shape=jax.ShapeDtypeStruct((B_p * N_p, FP), jnp.float32),
        grid=(B_p // TB,),
        in_specs=[pl.BlockSpec((TB * N_p, FP), lambda i: (i, 0)),
                  pl.BlockSpec((TB * M_p, FCP), lambda i: (i, 0))]
                 + [_const_spec(w) for w in consts],
        out_specs=pl.BlockSpec((TB * N_p, FP), lambda i: (i, 0)),
        compiler_params=pltpu.CompilerParams(
            dimension_semantics=("parallel",), vmem_limit_bytes=vmem_lim),
    )(xr, cr, *consts)

    out = out.reshape(B_p, N_p, FP)[:B, :N]
    out_mv = out[..., : C * 16].reshape(B, N, C, 16)
    out_s = out[..., C * 16: C * 16 + S]
    return out_mv, out_s


# ---------------------------------------------------------------------------
if __name__ == "__main__":
    B, N, M = 2, 8, 8               # batch, items, condition items
    MV_C, S_C = 4, 8                # multivector / scalar channels
    CMV_C, CS_C = 4, 8              # condition multivector / scalar channels
    HEADS = 2

    key = jax.random.PRNGKey(0)
    k1, k2, k3, k4 = jax.random.split(key, 4)
    mv = jax.random.normal(k1, (B, N, MV_C, 16), dtype=jnp.float32)
    s = jax.random.normal(k2, (B, N, S_C), dtype=jnp.float32)
    mv_cond = jax.random.normal(k3, (B, M, CMV_C, 16), dtype=jnp.float32)
    s_cond = jax.random.normal(k4, (B, M, CS_C), dtype=jnp.float32)

    params = init_params(MV_C, S_C, CMV_C, CS_C, HEADS, seed=0)

    out_mv, out_s = conditional_lgatr_block(mv, mv_cond, s, s_cond, params, HEADS)
    jax.block_until_ready((out_mv, out_s))

    assert out_mv.shape == (B, N, MV_C, 16)
    assert out_s.shape == (B, N, S_C)
    assert bool(jnp.all(jnp.isfinite(out_mv))) and bool(jnp.all(jnp.isfinite(out_s)))
    print("KERNEL_OK")
</pallas_src>

<mosaic_0001>
module attributes {stable_mosaic.version = 11 : i64} {
  func.func @kernel(%arg0: i32, %arg1: memref<16x128xf32, #tpu.memory_space<vmem>>, %arg2: memref<16x128xf32, #tpu.memory_space<vmem>>, %arg3: memref<128x8xf32, #tpu.memory_space<vmem>>, %arg4: memref<2x128xf32, #tpu.memory_space<vmem>>, %arg5: memref<128x8xf32, #tpu.memory_space<vmem>>, %arg6: memref<2x128xf32, #tpu.memory_space<vmem>>, %arg7: memref<16x16xf32, #tpu.memory_space<vmem>>, %arg8: memref<16x16xf32, #tpu.memory_space<vmem>>, %arg9: memref<128x768xbf16, #tpu.memory_space<vmem>>, %arg10: memref<1x768xf32, #tpu.memory_space<vmem>>, %arg11: memref<256x128xbf16, #tpu.memory_space<vmem>>, %arg12: memref<1x128xf32, #tpu.memory_space<vmem>>, %arg13: memref<128x256xbf16, #tpu.memory_space<vmem>>, %arg14: memref<1x256xf32, #tpu.memory_space<vmem>>, %arg15: memref<128x512xbf16, #tpu.memory_space<vmem>>, %arg16: memref<1x512xf32, #tpu.memory_space<vmem>>, %arg17: memref<256x128xbf16, #tpu.memory_space<vmem>>, %arg18: memref<1x128xf32, #tpu.memory_space<vmem>>, %arg19: memref<128x1024xbf16, #tpu.memory_space<vmem>>, %arg20: memref<1x1024xf32, #tpu.memory_space<vmem>>, %arg21: memref<128x1024xbf16, #tpu.memory_space<vmem>>, %arg22: memref<1x1024xf32, #tpu.memory_space<vmem>>, %arg23: memref<128x128xbf16, #tpu.memory_space<vmem>>, %arg24: memref<1x128xf32, #tpu.memory_space<vmem>>, %arg25: memref<1024x128xbf16, #tpu.memory_space<vmem>>, %arg26: memref<128x8xf32, #tpu.memory_space<vmem>>, %arg27: memref<8x128xf32, #tpu.memory_space<vmem>>, %arg28: memref<128x128xbf16, #tpu.memory_space<vmem>>, %arg29: memref<1x128xf32, #tpu.memory_space<vmem>>, %arg30: memref<16x128xf32, #tpu.memory_space<vmem>>) attributes {dimension_semantics = [#tpu.dimension_semantics<parallel>], iteration_bounds = array<i64: 1>, scalar_prefetch = 0 : i64, scratch_operands = 0 : i64, tpu.core_type = #tpu.core_type<tc>, window_params = [{transform_indices = @transform_0, window_bounds = array<i64: 16, 128>}, {transform_indices = @transform_1, window_bounds = array<i64: 16, 128>}, {pipeline_mode = #tpu.pipeline_mode<synchronous>, transform_indices = @transform_2, window_bounds = array<i64: 128, 8>}, {pipeline_mode = #tpu.pipeline_mode<synchronous>, transform_indices = @transform_3, window_bounds = array<i64: 2, 128>}, {pipeline_mode = #tpu.pipeline_mode<synchronous>, transform_indices = @transform_4, window_bounds = array<i64: 128, 8>}, {pipeline_mode = #tpu.pipeline_mode<synchronous>, transform_indices = @transform_5, window_bounds = array<i64: 2, 128>}, {pipeline_mode = #tpu.pipeline_mode<synchronous>, transform_indices = @transform_6, window_bounds = array<i64: 16, 16>}, {pipeline_mode = #tpu.pipeline_mode<synchronous>, transform_indices = @transform_7, window_bounds = array<i64: 16, 16>}, {pipeline_mode = #tpu.pipeline_mode<synchronous>, transform_indices = @transform_8, window_bounds = array<i64: 128, 768>}, {pipeline_mode = #tpu.pipeline_mode<synchronous>, transform_indices = @transform_9, window_bounds = array<i64: 1, 768>}, {pipeline_mode = #tpu.pipeline_mode<synchronous>, transform_indices = @transform_10, window_bounds = array<i64: 256, 128>}, {pipeline_mode = #tpu.pipeline_mode<synchronous>, transform_indices = @transform_11, window_bounds = array<i64: 1, 128>}, {pipeline_mode = #tpu.pipeline_mode<synchronous>, transform_indices = @transform_12, window_bounds = array<i64: 128, 256>}, {pipeline_mode = #tpu.pipeline_mode<synchronous>, transform_indices = @transform_13, window_bounds = array<i64: 1, 256>}, {pipeline_mode = #tpu.pipeline_mode<synchronous>, transform_indices = @transform_14, window_bounds = array<i64: 128, 512>}, {pipeline_mode = #tpu.pipeline_mode<synchronous>, transform_indices = @transform_15, window_bounds = array<i64: 1, 512>}, {pipeline_mode = #tpu.pipeline_mode<synchronous>, transform_indices = @transform_16, window_bounds = array<i64: 256, 128>}, {pipeline_mode = #tpu.pipeline_mode<synchronous>, transform_indices = @transform_17, window_bounds = array<i64: 1, 128>}, {pipeline_mode = #tpu.pipeline_mode<synchronous>, transform_indices = @transform_18, window_bounds = array<i64: 128, 1024>}, {pipeline_mode = #tpu.pipeline_mode<synchronous>, transform_indices = @transform_19, window_bounds = array<i64: 1, 1024>}, {pipeline_mode = #tpu.pipeline_mode<synchronous>, transform_indices = @transform_20, window_bounds = array<i64: 128, 1024>}, {pipeline_mode = #tpu.pipeline_mode<synchronous>, transform_indices = @transform_21, window_bounds = array<i64: 1, 1024>}, {pipeline_mode = #tpu.pipeline_mode<synchronous>, transform_indices = @transform_22, window_bounds = array<i64: 128, 128>}, {pipeline_mode = #tpu.pipeline_mode<synchronous>, transform_indices = @transform_23, window_bounds = array<i64: 1, 128>}, {pipeline_mode = #tpu.pipeline_mode<synchronous>, transform_indices = @transform_24, window_bounds = array<i64: 1024, 128>}, {pipeline_mode = #tpu.pipeline_mode<synchronous>, transform_indices = @transform_25, window_bounds = array<i64: 128, 8>}, {pipeline_mode = #tpu.pipeline_mode<synchronous>, transform_indices = @transform_26, window_bounds = array<i64: 8, 128>}, {pipeline_mode = #tpu.pipeline_mode<synchronous>, transform_indices = @transform_27, window_bounds = array<i64: 128, 128>}, {pipeline_mode = #tpu.pipeline_mode<synchronous>, transform_indices = @transform_28, window_bounds = array<i64: 1, 128>}, {transform_indices = @transform_29, window_bounds = array<i64: 16, 128>}]} {
    %c0 = arith.constant 0 : index
    %c0_0 = arith.constant 0 : index
    %0 = vector.load %arg1[%c0, %c0_0] : memref<16x128xf32, #tpu.memory_space<vmem>>, vector<16x128xf32>
    %c0_1 = arith.constant 0 : index
    %c0_2 = arith.constant 0 : index
    %1 = vector.load %arg2[%c0_1, %c0_2] : memref<16x128xf32, #tpu.memory_space<vmem>>, vector<16x128xf32>
    %c0_3 = arith.constant 0 : index
    %c0_4 = arith.constant 0 : index
    %2 = vector.load %arg3[%c0_3, %c0_4] : memref<128x8xf32, #tpu.memory_space<vmem>>, vector<128x8xf32>
    %c0_5 = arith.constant 0 : index
    %c0_6 = arith.constant 0 : index
    %3 = vector.load %arg4[%c0_5, %c0_6] : memref<2x128xf32, #tpu.memory_space<vmem>>, vector<2x128xf32>
    %4 = vector.extract_strided_slice %3 {offsets = [0, 0], sizes = [1, 128], strides = [1, 1]} : vector<2x128xf32> to vector<1x128xf32>
    %5 = vector.extract_strided_slice %3 {offsets = [1, 0], sizes = [1, 128], strides = [1, 1]} : vector<2x128xf32> to vector<1x128xf32>
    %6 = arith.mulf %0, %0 : vector<16x128xf32>
    %cst = arith.constant dense<0.000000e+00> : vector<16x8xf32>
    %7 = tpu.matmul %6, %2, %cst {dimension_numbers = #tpu.dot_dimension_numbers<[1], [0], [0], [1], [0, 0, 1, 1], [], []>} : vector<16x128xf32>, vector<128x8xf32>, vector<16x8xf32> -> vector<16x8xf32>
    %8 = math.absf %7 : vector<16x8xf32>
    %cst_7 = arith.constant dense<0.000000e+00> : vector<16xf32>
    %9 = vector.multi_reduction <add>, %8, %cst_7 [1] : vector<16x8xf32> to vector<16xf32>
    %10 = vector.shape_cast %9 : vector<16xf32> to vector<16x1xf32>
    %cst_8 = arith.constant 2.500000e-01 : f32
    %11 = vector.broadcast %cst_8 : f32 to vector<16x1xf32>
    %12 = arith.mulf %10, %11 : vector<16x1xf32>
    %cst_9 = arith.constant 0.00999999977 : f32
    %13 = vector.broadcast %cst_9 : f32 to vector<16x1xf32>
    %14 = arith.addf %12, %13 : vector<16x1xf32>
    %15 = math.rsqrt %14 : vector<16x1xf32>
    %16 = vector.broadcast %5 : vector<1x128xf32> to vector<16x128xf32>
    %17 = arith.mulf %0, %16 : vector<16x128xf32>
    %cst_10 = arith.constant dense<0.000000e+00> : vector<16xf32>
    %18 = vector.multi_reduction <add>, %17, %cst_10 [1] : vector<16x128xf32> to vector<16xf32>
    %19 = vector.shape_cast %18 : vector<16xf32> to vector<16x1xf32>
    %cst_11 = arith.constant 1.250000e-01 : f32
    %20 = vector.broadcast %cst_11 : f32 to vector<16x1xf32>
    %21 = arith.mulf %19, %20 : vector<16x1xf32>
    %22 = vector.broadcast %21 : vector<16x1xf32> to vector<16x128xf32>
    %23 = arith.subf %0, %22 : vector<16x128xf32>
    %24 = vector.broadcast %5 : vector<1x128xf32> to vector<16x128xf32>
    %25 = arith.mulf %23, %24 : vector<16x128xf32>
    %26 = arith.mulf %25, %25 : vector<16x128xf32>
    %cst_12 = arith.constant dense<0.000000e+00> : vector<16xf32>
    %27 = vector.multi_reduction <add>, %26, %cst_12 [1] : vector<16x128xf32> to vector<16xf32>
    %28 = vector.shape_cast %27 : vector<16xf32> to vector<16x1xf32>
    %cst_13 = arith.constant 1.250000e-01 : f32
    %29 = vector.broadcast %cst_13 : f32 to vector<16x1xf32>
    %30 = arith.mulf %28, %29 : vector<16x1xf32>
    %cst_14 = arith.constant 9.99999974E-6 : f32
    %31 = vector.broadcast %cst_14 : f32 to vector<16x1xf32>
    %32 = arith.addf %30, %31 : vector<16x1xf32>
    %33 = math.rsqrt %32 : vector<16x1xf32>
    %34 = vector.broadcast %15 : vector<16x1xf32> to vector<16x128xf32>
    %35 = vector.broadcast %4 : vector<1x128xf32> to vector<16x128xf32>
    %36 = arith.mulf %34, %35 : vector<16x128xf32>
    %37 = arith.mulf %0, %36 : vector<16x128xf32>
    %38 = vector.broadcast %33 : vector<16x1xf32> to vector<16x128xf32>
    %39 = arith.mulf %25, %38 : vector<16x128xf32>
    %40 = arith.addf %37, %39 : vector<16x128xf32>
    %41 = arith.truncf %40 : vector<16x128xf32> to vector<16x128xbf16>
    %c0_15 = arith.constant 0 : index
    %c0_16 = arith.constant 0 : index
    %42 = vector.load %arg9[%c0_15, %c0_16] : memref<128x768xbf16, #tpu.memory_space<vmem>>, vector<128x768xbf16>
    %cst_17 = arith.constant dense<0.000000e+00> : vector<16x768xf32>
    %43 = tpu.matmul %41, %42, %cst_17 {dimension_numbers = #tpu.dot_dimension_numbers<[1], [0], [0], [1], [0, 0, 1, 1], [], []>} : vector<16x128xbf16>, vector<128x768xbf16>, vector<16x768xf32> -> vector<16x768xf32>
    %c0_18 = arith.constant 0 : index
    %c0_19 = arith.constant 0 : index
    %44 = vector.load %arg10[%c0_18, %c0_19] : memref<1x768xf32, #tpu.memory_space<vmem>>, vector<1x768xf32>
    %45 = vector.broadcast %44 : vector<1x768xf32> to vector<16x768xf32>
    %46 = arith.addf %43, %45 : vector<16x768xf32>
    %47 = arith.truncf %46 : vector<16x768xf32> to vector<16x768xbf16>
    %48 = vector.extract_strided_slice %47 {offsets = [0, 0], sizes = [16, 256], strides = [1, 1]} : vector<16x768xbf16> to vector<16x256xbf16>
    %49 = vector.extract_strided_slice %47 {offsets = [0, 256], sizes = [16, 256], strides = [1, 1]} : vector<16x768xbf16> to vector<16x256xbf16>
    %50 = vector.extract_strided_slice %47 {offsets = [0, 512], sizes = [16, 256], strides = [1, 1]} : vector<16x768xbf16> to vector<16x256xbf16>
    %c0_20 = arith.constant 0 : index
    %c0_21 = arith.constant 0 : index
    %51 = vector.load %arg7[%c0_20, %c0_21] : memref<16x16xf32, #tpu.memory_space<vmem>>, vector<16x16xf32>
    %c0_22 = arith.constant 0 : index
    %c0_23 = arith.constant 0 : index
    %52 = vector.load %arg11[%c0_22, %c0_23] : memref<256x128xbf16, #tpu.memory_space<vmem>>, vector<256x128xbf16>
    %53 = vector.extract_strided_slice %48 {offsets = [0, 0], sizes = [16, 128], strides = [1, 1]} : vector<16x256xbf16> to vector<16x128xbf16>
    %54 = vector.extract_strided_slice %49 {offsets = [0, 0], sizes = [16, 128], strides = [1, 1]} : vector<16x256xbf16> to vector<16x128xbf16>
    %55 = vector.extract_strided_slice %50 {offsets = [0, 0], sizes = [16, 128], strides = [1, 1]} : vector<16x256xbf16> to vector<16x128xbf16>
    "tpu.trace_start"() <{level = 10 : i32, message = "nd,md->nm"}> : () -> ()
    %cst_24 = arith.constant dense<0.000000e+00> : vector<16x16xf32>
    %56 = tpu.matmul %53, %54, %cst_24 {dimension_numbers = #tpu.dot_dimension_numbers<[1], [1], [0], [0], [0, 0, 1, 0], [], []>} : vector<16x128xbf16>, vector<16x128xbf16>, vector<16x16xf32> -> vector<16x16xf32>
    "tpu.trace_stop"() : () -> ()
    %57 = arith.addf %56, %51 : vector<16x16xf32>
    %cst_25 = arith.constant dense<0xFF800000> : vector<16xf32>
    %58 = vector.multi_reduction <maximumf>, %57, %cst_25 [1] : vector<16x16xf32> to vector<16xf32>
    %59 = vector.shape_cast %58 : vector<16xf32> to vector<16x1xf32>
    %60 = vector.broadcast %59 : vector<16x1xf32> to vector<16x16xf32>
    %61 = arith.subf %57, %60 : vector<16x16xf32>
    %62 = math.exp %61 : vector<16x16xf32>
    %cst_26 = arith.constant dense<0.000000e+00> : vector<16xf32>
    %63 = vector.multi_reduction <add>, %62, %cst_26 [1] : vector<16x16xf32> to vector<16xf32>
    %64 = vector.shape_cast %63 : vector<16xf32> to vector<16x1xf32>
    %65 = vector.broadcast %64 : vector<16x1xf32> to vector<16x16xf32>
    %66 = arith.divf %62, %65 : vector<16x16xf32>
    %67 = arith.truncf %66 : vector<16x16xf32> to vector<16x16xbf16>
    %cst_27 = arith.constant dense<0.000000e+00> : vector<16x128xf32>
    %68 = tpu.matmul %67, %55, %cst_27 {dimension_numbers = #tpu.dot_dimension_numbers<[1], [0], [0], [1], [0, 0, 1, 1], [], []>} : vector<16x16xbf16>, vector<16x128xbf16>, vector<16x128xf32> -> vector<16x128xf32>
    %69 = arith.truncf %68 : vector<16x128xf32> to vector<16x128xbf16>
    %70 = vector.extract_strided_slice %52 {offsets = [0, 0], sizes = [128, 128], strides = [1, 1]} : vector<256x128xbf16> to vector<128x128xbf16>
    %cst_28 = arith.constant dense<0.000000e+00> : vector<16x128xf32>
    %71 = tpu.matmul %69, %70, %cst_28 {dimension_numbers = #tpu.dot_dimension_numbers<[1], [0], [0], [1], [0, 0, 1, 1], [], []>} : vector<16x128xbf16>, vector<128x128xbf16>, vector<16x128xf32> -> vector<16x128xf32>
    %72 = vector.extract_strided_slice %48 {offsets = [0, 128], sizes = [16, 128], strides = [1, 1]} : vector<16x256xbf16> to vector<16x128xbf16>
    %73 = vector.extract_strided_slice %49 {offsets = [0, 128], sizes = [16, 128], strides = [1, 1]} : vector<16x256xbf16> to vector<16x128xbf16>
    %74 = vector.extract_strided_slice %50 {offsets = [0, 128], sizes = [16, 128], strides = [1, 1]} : vector<16x256xbf16> to vector<16x128xbf16>
    "tpu.trace_start"() <{level = 10 : i32, message = "nd,md->nm"}> : () -> ()
    %cst_29 = arith.constant dense<0.000000e+00> : vector<16x16xf32>
    %75 = tpu.matmul %72, %73, %cst_29 {dimension_numbers = #tpu.dot_dimension_numbers<[1], [1], [0], [0], [0, 0, 1, 0], [], []>} : vector<16x128xbf16>, vector<16x128xbf16>, vector<16x16xf32> -> vector<16x16xf32>
    "tpu.trace_stop"() : () -> ()
    %76 = arith.addf %75, %51 : vector<16x16xf32>
    %cst_30 = arith.constant dense<0xFF800000> : vector<16xf32>
    %77 = vector.multi_reduction <maximumf>, %76, %cst_30 [1] : vector<16x16xf32> to vector<16xf32>
    %78 = vector.shape_cast %77 : vector<16xf32> to vector<16x1xf32>
    %79 = vector.broadcast %78 : vector<16x1xf32> to vector<16x16xf32>
    %80 = arith.subf %76, %79 : vector<16x16xf32>
    %81 = math.exp %80 : vector<16x16xf32>
    %cst_31 = arith.constant dense<0.000000e+00> : vector<16xf32>
    %82 = vector.multi_reduction <add>, %81, %cst_31 [1] : vector<16x16xf32> to vector<16xf32>
    %83 = vector.shape_cast %82 : vector<16xf32> to vector<16x1xf32>
    %84 = vector.broadcast %83 : vector<16x1xf32> to vector<16x16xf32>
    %85 = arith.divf %81, %84 : vector<16x16xf32>
    %86 = arith.truncf %85 : vector<16x16xf32> to vector<16x16xbf16>
    %cst_32 = arith.constant dense<0.000000e+00> : vector<16x128xf32>
    %87 = tpu.matmul %86, %74, %cst_32 {dimension_numbers = #tpu.dot_dimension_numbers<[1], [0], [0], [1], [0, 0, 1, 1], [], []>} : vector<16x16xbf16>, vector<16x128xbf16>, vector<16x128xf32> -> vector<16x128xf32>
    %88 = arith.truncf %87 : vector<16x128xf32> to vector<16x128xbf16>
    %89 = vector.extract_strided_slice %52 {offsets = [128, 0], sizes = [128, 128], strides = [1, 1]} : vector<256x128xbf16> to vector<128x128xbf16>
    %cst_33 = arith.constant dense<0.000000e+00> : vector<16x128xf32>
    %90 = tpu.matmul %88, %89, %cst_33 {dimension_numbers = #tpu.dot_dimension_numbers<[1], [0], [0], [1], [0, 0, 1, 1], [], []>} : vector<16x128xbf16>, vector<128x128xbf16>, vector<16x128xf32> -> vector<16x128xf32>
    %91 = arith.addf %71, %90 : vector<16x128xf32>
    %92 = arith.addf %0, %91 : vector<16x128xf32>
    %c0_34 = arith.constant 0 : index
    %c0_35 = arith.constant 0 : index
    %93 = vector.load %arg12[%c0_34, %c0_35] : memref<1x128xf32, #tpu.memory_space<vmem>>, vector<1x128xf32>
    %94 = vector.broadcast %93 : vector<1x128xf32> to vector<16x128xf32>
    %95 = arith.addf %92, %94 : vector<16x128xf32>
    %96 = vector.extract_strided_slice %3 {offsets = [0, 0], sizes = [1, 128], strides = [1, 1]} : vector<2x128xf32> to vector<1x128xf32>
    %97 = vector.extract_strided_slice %3 {offsets = [1, 0], sizes = [1, 128], strides = [1, 1]} : vector<2x128xf32> to vector<1x128xf32>
    %98 = arith.mulf %95, %95 : vector<16x128xf32>
    %cst_36 = arith.constant dense<0.000000e+00> : vector<16x8xf32>
    %99 = tpu.matmul %98, %2, %cst_36 {dimension_numbers = #tpu.dot_dimension_numbers<[1], [0], [0], [1], [0, 0, 1, 1], [], []>} : vector<16x128xf32>, vector<128x8xf32>, vector<16x8xf32> -> vector<16x8xf32>
    %100 = math.absf %99 : vector<16x8xf32>
    %cst_37 = arith.constant dense<0.000000e+00> : vector<16xf32>
    %101 = vector.multi_reduction <add>, %100, %cst_37 [1] : vector<16x8xf32> to vector<16xf32>
    %102 = vector.shape_cast %101 : vector<16xf32> to vector<16x1xf32>
    %cst_38 = arith.constant 2.500000e-01 : f32
    %103 = vector.broadcast %cst_38 : f32 to vector<16x1xf32>
    %104 = arith.mulf %102, %103 : vector<16x1xf32>
    %cst_39 = arith.constant 0.00999999977 : f32
    %105 = vector.broadcast %cst_39 : f32 to vector<16x1xf32>
    %106 = arith.addf %104, %105 : vector<16x1xf32>
    %107 = math.rsqrt %106 : vector<16x1xf32>
    %108 = vector.broadcast %97 : vector<1x128xf32> to vector<16x128xf32>
    %109 = arith.mulf %95, %108 : vector<16x128xf32>
    %cst_40 = arith.constant dense<0.000000e+00> : vector<16xf32>
    %110 = vector.multi_reduction <add>, %109, %cst_40 [1] : vector<16x128xf32> to vector<16xf32>
    %111 = vector.shape_cast %110 : vector<16xf32> to vector<16x1xf32>
    %cst_41 = arith.constant 1.250000e-01 : f32
    %112 = vector.broadcast %cst_41 : f32 to vector<16x1xf32>
    %113 = arith.mulf %111, %112 : vector<16x1xf32>
    %114 = vector.broadcast %113 : vector<16x1xf32> to vector<16x128xf32>
    %115 = arith.subf %95, %114 : vector<16x128xf32>
    %116 = vector.broadcast %97 : vector<1x128xf32> to vector<16x128xf32>
    %117 = arith.mulf %115, %116 : vector<16x128xf32>
    %118 = arith.mulf %117, %117 : vector<16x128xf32>
    %cst_42 = arith.constant dense<0.000000e+00> : vector<16xf32>
    %119 = vector.multi_reduction <add>, %118, %cst_42 [1] : vector<16x128xf32> to vector<16xf32>
    %120 = vector.shape_cast %119 : vector<16xf32> to vector<16x1xf32>
    %cst_43 = arith.constant 1.250000e-01 : f32
    %121 = vector.broadcast %cst_43 : f32 to vector<16x1xf32>
    %122 = arith.mulf %120, %121 : vector<16x1xf32>
    %cst_44 = arith.constant 9.99999974E-6 : f32
    %123 = vector.broadcast %cst_44 : f32 to vector<16x1xf32>
    %124 = arith.addf %122, %123 : vector<16x1xf32>
    %125 = math.rsqrt %124 : vector<16x1xf32>
    %126 = vector.broadcast %107 : vector<16x1xf32> to vector<16x128xf32>
    %127 = vector.broadcast %96 : vector<1x128xf32> to vector<16x128xf32>
    %128 = arith.mulf %126, %127 : vector<16x128xf32>
    %129 = arith.mulf %95, %128 : vector<16x128xf32>
    %130 = vector.broadcast %125 : vector<16x1xf32> to vector<16x128xf32>
    %131 = arith.mulf %117, %130 : vector<16x128xf32>
    %132 = arith.addf %129, %131 : vector<16x128xf32>
    %c0_45 = arith.constant 0 : index
    %c0_46 = arith.constant 0 : index
    %133 = vector.load %arg5[%c0_45, %c0_46] : memref<128x8xf32, #tpu.memory_space<vmem>>, vector<128x8xf32>
    %c0_47 = arith.constant 0 : index
    %c0_48 = arith.constant 0 : index
    %134 = vector.load %arg6[%c0_47, %c0_48] : memref<2x128xf32, #tpu.memory_space<vmem>>, vector<2x128xf32>
    %135 = vector.extract_strided_slice %134 {offsets = [0, 0], sizes = [1, 128], strides = [1, 1]} : vector<2x128xf32> to vector<1x128xf32>
    %136 = vector.extract_strided_slice %134 {offsets = [1, 0], sizes = [1, 128], strides = [1, 1]} : vector<2x128xf32> to vector<1x128xf32>
    %137 = arith.mulf %1, %1 : vector<16x128xf32>
    %cst_49 = arith.constant dense<0.000000e+00> : vector<16x8xf32>
    %138 = tpu.matmul %137, %133, %cst_49 {dimension_numbers = #tpu.dot_dimension_numbers<[1], [0], [0], [1], [0, 0, 1, 1], [], []>} : vector<16x128xf32>, vector<128x8xf32>, vector<16x8xf32> -> vector<16x8xf32>
    %139 = math.absf %138 : vector<16x8xf32>
    %cst_50 = arith.constant dense<0.000000e+00> : vector<16xf32>
    %140 = vector.multi_reduction <add>, %139, %cst_50 [1] : vector<16x8xf32> to vector<16xf32>
    %141 = vector.shape_cast %140 : vector<16xf32> to vector<16x1xf32>
    %cst_51 = arith.constant 2.500000e-01 : f32
    %142 = vector.broadcast %cst_51 : f32 to vector<16x1xf32>
    %143 = arith.mulf %141, %142 : vector<16x1xf32>
    %cst_52 = arith.constant 0.00999999977 : f32
    %144 = vector.broadcast %cst_52 : f32 to vector<16x1xf32>
    %145 = arith.addf %143, %144 : vector<16x1xf32>
    %146 = math.rsqrt %145 : vector<16x1xf32>
    %147 = vector.broadcast %136 : vector<1x128xf32> to vector<16x128xf32>
    %148 = arith.mulf %1, %147 : vector<16x128xf32>
    %cst_53 = arith.constant dense<0.000000e+00> : vector<16xf32>
    %149 = vector.multi_reduction <add>, %148, %cst_53 [1] : vector<16x128xf32> to vector<16xf32>
    %150 = vector.shape_cast %149 : vector<16xf32> to vector<16x1xf32>
    %cst_54 = arith.constant 1.250000e-01 : f32
    %151 = vector.broadcast %cst_54 : f32 to vector<16x1xf32>
    %152 = arith.mulf %150, %151 : vector<16x1xf32>
    %153 = vector.broadcast %152 : vector<16x1xf32> to vector<16x128xf32>
    %154 = arith.subf %1, %153 : vector<16x128xf32>
    %155 = vector.broadcast %136 : vector<1x128xf32> to vector<16x128xf32>
    %156 = arith.mulf %154, %155 : vector<16x128xf32>
    %157 = arith.mulf %156, %156 : vector<16x128xf32>
    %cst_55 = arith.constant dense<0.000000e+00> : vector<16xf32>
    %158 = vector.multi_reduction <add>, %157, %cst_55 [1] : vector<16x128xf32> to vector<16xf32>
    %159 = vector.shape_cast %158 : vector<16xf32> to vector<16x1xf32>
    %cst_56 = arith.constant 1.250000e-01 : f32
    %160 = vector.broadcast %cst_56 : f32 to vector<16x1xf32>
    %161 = arith.mulf %159, %160 : vector<16x1xf32>
    %cst_57 = arith.constant 9.99999974E-6 : f32
    %162 = vector.broadcast %cst_57 : f32 to vector<16x1xf32>
    %163 = arith.addf %161, %162 : vector<16x1xf32>
    %164 = math.rsqrt %163 : vector<16x1xf32>
    %165 = vector.broadcast %146 : vector<16x1xf32> to vector<16x128xf32>
    %166 = vector.broadcast %135 : vector<1x128xf32> to vector<16x128xf32>
    %167 = arith.mulf %165, %166 : vector<16x128xf32>
    %168 = arith.mulf %1, %167 : vector<16x128xf32>
    %169 = vector.broadcast %164 : vector<16x1xf32> to vector<16x128xf32>
    %170 = arith.mulf %156, %169 : vector<16x128xf32>
    %171 = arith.addf %168, %170 : vector<16x128xf32>
    %172 = arith.truncf %132 : vector<16x128xf32> to vector<16x128xbf16>
    %c0_58 = arith.constant 0 : index
    %c0_59 = arith.constant 0 : index
    %173 = vector.load %arg13[%c0_58, %c0_59] : memref<128x256xbf16, #tpu.memory_space<vmem>>, vector<128x256xbf16>
    %cst_60 = arith.constant dense<0.000000e+00> : vector<16x256xf32>
    %174 = tpu.matmul %172, %173, %cst_60 {dimension_numbers = #tpu.dot_dimension_numbers<[1], [0], [0], [1], [0, 0, 1, 1], [], []>} : vector<16x128xbf16>, vector<128x256xbf16>, vector<16x256xf32> -> vector<16x256xf32>
    %c0_61 = arith.constant 0 : index
    %c0_62 = arith.constant 0 : index
    %175 = vector.load %arg14[%c0_61, %c0_62] : memref<1x256xf32, #tpu.memory_space<vmem>>, vector<1x256xf32>
    %176 = vector.broadcast %175 : vector<1x256xf32> to vector<16x256xf32>
    %177 = arith.addf %174, %176 : vector<16x256xf32>
    %178 = arith.truncf %177 : vector<16x256xf32> to vector<16x256xbf16>
    %179 = arith.truncf %171 : vector<16x128xf32> to vector<16x128xbf16>
    %c0_63 = arith.constant 0 : index
    %c0_64 = arith.constant 0 : index
    %180 = vector.load %arg15[%c0_63, %c0_64] : memref<128x512xbf16, #tpu.memory_space<vmem>>, vector<128x512xbf16>
    %cst_65 = arith.constant dense<0.000000e+00> : vector<16x512xf32>
    %181 = tpu.matmul %179, %180, %cst_65 {dimension_numbers = #tpu.dot_dimension_numbers<[1], [0], [0], [1], [0, 0, 1, 1], [], []>} : vector<16x128xbf16>, vector<128x512xbf16>, vector<16x512xf32> -> vector<16x512xf32>
    %c0_66 = arith.constant 0 : index
    %c0_67 = arith.constant 0 : index
    %182 = vector.load %arg16[%c0_66, %c0_67] : memref<1x512xf32, #tpu.memory_space<vmem>>, vector<1x512xf32>
    %183 = vector.broadcast %182 : vector<1x512xf32> to vector<16x512xf32>
    %184 = arith.addf %181, %183 : vector<16x512xf32>
    %185 = arith.truncf %184 : vector<16x512xf32> to vector<16x512xbf16>
    %186 = vector.extract_strided_slice %185 {offsets = [0, 0], sizes = [16, 256], strides = [1, 1]} : vector<16x512xbf16> to vector<16x256xbf16>
    %187 = vector.extract_strided_slice %185 {offsets = [0, 256], sizes = [16, 256], strides = [1, 1]} : vector<16x512xbf16> to vector<16x256xbf16>
    %c0_68 = arith.constant 0 : index
    %c0_69 = arith.constant 0 : index
    %188 = vector.load %arg8[%c0_68, %c0_69] : memref<16x16xf32, #tpu.memory_space<vmem>>, vector<16x16xf32>
    %c0_70 = arith.constant 0 : index
    %c0_71 = arith.constant 0 : index
    %189 = vector.load %arg17[%c0_70, %c0_71] : memref<256x128xbf16, #tpu.memory_space<vmem>>, vector<256x128xbf16>
    %190 = vector.extract_strided_slice %178 {offsets = [0, 0], sizes = [16, 128], strides = [1, 1]} : vector<16x256xbf16> to vector<16x128xbf16>
    %191 = vector.extract_strided_slice %186 {offsets = [0, 0], sizes = [16, 128], strides = [1, 1]} : vector<16x256xbf16> to vector<16x128xbf16>
    %192 = vector.extract_strided_slice %187 {offsets = [0, 0], sizes = [16, 128], strides = [1, 1]} : vector<16x256xbf16> to vector<16x128xbf16>
    "tpu.trace_start"() <{level = 10 : i32, message = "nd,md->nm"}> : () -> ()
    %cst_72 = arith.constant dense<0.000000e+00> : vector<16x16xf32>
    %193 = tpu.matmul %190, %191, %cst_72 {dimension_numbers = #tpu.dot_dimension_numbers<[1], [1], [0], [0], [0, 0, 1, 0], [], []>} : vector<16x128xbf16>, vector<16x128xbf16>, vector<16x16xf32> -> vector<16x16xf32>
    "tpu.trace_stop"() : () -> ()
    %194 = arith.addf %193, %188 : vector<16x16xf32>
    %cst_73 = arith.constant dense<0xFF800000> : vector<16xf32>
    %195 = vector.multi_reduction <maximumf>, %194, %cst_73 [1] : vector<16x16xf32> to vector<16xf32>
    %196 = vector.shape_cast %195 : vector<16xf32> to vector<16x1xf32>
    %197 = vector.broadcast %196 : vector<16x1xf32> to vector<16x16xf32>
    %198 = arith.subf %194, %197 : vector<16x16xf32>
    %199 = math.exp %198 : vector<16x16xf32>
    %cst_74 = arith.constant dense<0.000000e+00> : vector<16xf32>
    %200 = vector.multi_reduction <add>, %199, %cst_74 [1] : vector<16x16xf32> to vector<16xf32>
    %201 = vector.shape_cast %200 : vector<16xf32> to vector<16x1xf32>
    %202 = vector.broadcast %201 : vector<16x1xf32> to vector<16x16xf32>
    %203 = arith.divf %199, %202 : vector<16x16xf32>
    %204 = arith.truncf %203 : vector<16x16xf32> to vector<16x16xbf16>
    %cst_75 = arith.constant dense<0.000000e+00> : vector<16x128xf32>
    %205 = tpu.matmul %204, %192, %cst_75 {dimension_numbers = #tpu.dot_dimension_numbers<[1], [0], [0], [1], [0, 0, 1, 1], [], []>} : vector<16x16xbf16>, vector<16x128xbf16>, vector<16x128xf32> -> vector<16x128xf32>
    %206 = arith.truncf %205 : vector<16x128xf32> to vector<16x128xbf16>
    %207 = vector.extract_strided_slice %189 {offsets = [0, 0], sizes = [128, 128], strides = [1, 1]} : vector<256x128xbf16> to vector<128x128xbf16>
    %cst_76 = arith.constant dense<0.000000e+00> : vector<16x128xf32>
    %208 = tpu.matmul %206, %207, %cst_76 {dimension_numbers = #tpu.dot_dimension_numbers<[1], [0], [0], [1], [0, 0, 1, 1], [], []>} : vector<16x128xbf16>, vector<128x128xbf16>, vector<16x128xf32> -> vector<16x128xf32>
    %209 = vector.extract_strided_slice %178 {offsets = [0, 128], sizes = [16, 128], strides = [1, 1]} : vector<16x256xbf16> to vector<16x128xbf16>
    %210 = vector.extract_strided_slice %186 {offsets = [0, 128], sizes = [16, 128], strides = [1, 1]} : vector<16x256xbf16> to vector<16x128xbf16>
    %211 = vector.extract_strided_slice %187 {offsets = [0, 128], sizes = [16, 128], strides = [1, 1]} : vector<16x256xbf16> to vector<16x128xbf16>
    "tpu.trace_start"() <{level = 10 : i32, message = "nd,md->nm"}> : () -> ()
    %cst_77 = arith.constant dense<0.000000e+00> : vector<16x16xf32>
    %212 = tpu.matmul %209, %210, %cst_77 {dimension_numbers = #tpu.dot_dimension_numbers<[1], [1], [0], [0], [0, 0, 1, 0], [], []>} : vector<16x128xbf16>, vector<16x128xbf16>, vector<16x16xf32> -> vector<16x16xf32>
    "tpu.trace_stop"() : () -> ()
    %213 = arith.addf %212, %188 : vector<16x16xf32>
    %cst_78 = arith.constant dense<0xFF800000> : vector<16xf32>
    %214 = vector.multi_reduction <maximumf>, %213, %cst_78 [1] : vector<16x16xf32> to vector<16xf32>
    %215 = vector.shape_cast %214 : vector<16xf32> to vector<16x1xf32>
    %216 = vector.broadcast %215 : vector<16x1xf32> to vector<16x16xf32>
    %217 = arith.subf %213, %216 : vector<16x16xf32>
    %218 = math.exp %217 : vector<16x16xf32>
    %cst_79 = arith.constant dense<0.000000e+00> : vector<16xf32>
    %219 = vector.multi_reduction <add>, %218, %cst_79 [1] : vector<16x16xf32> to vector<16xf32>
    %220 = vector.shape_cast %219 : vector<16xf32> to vector<16x1xf32>
    %221 = vector.broadcast %220 : vector<16x1xf32> to vector<16x16xf32>
    %222 = arith.divf %218, %221 : vector<16x16xf32>
    %223 = arith.truncf %222 : vector<16x16xf32> to vector<16x16xbf16>
    %cst_80 = arith.constant dense<0.000000e+00> : vector<16x128xf32>
    %224 = tpu.matmul %223, %211, %cst_80 {dimension_numbers = #tpu.dot_dimension_numbers<[1], [0], [0], [1], [0, 0, 1, 1], [], []>} : vector<16x16xbf16>, vector<16x128xbf16>, vector<16x128xf32> -> vector<16x128xf32>
    %225 = arith.truncf %224 : vector<16x128xf32> to vector<16x128xbf16>
    %226 = vector.extract_strided_slice %189 {offsets = [128, 0], sizes = [128, 128], strides = [1, 1]} : vector<256x128xbf16> to vector<128x128xbf16>
    %cst_81 = arith.constant dense<0.000000e+00> : vector<16x128xf32>
    %227 = tpu.matmul %225, %226, %cst_81 {dimension_numbers = #tpu.dot_dimension_numbers<[1], [0], [0], [1], [0, 0, 1, 1], [], []>} : vector<16x128xbf16>, vector<128x128xbf16>, vector<16x128xf32> -> vector<16x128xf32>
    %228 = arith.addf %208, %227 : vector<16x128xf32>
    %229 = arith.addf %95, %228 : vector<16x128xf32>
    %c0_82 = arith.constant 0 : index
    %c0_83 = arith.constant 0 : index
    %230 = vector.load %arg18[%c0_82, %c0_83] : memref<1x128xf32, #tpu.memory_space<vmem>>, vector<1x128xf32>
    %231 = vector.broadcast %230 : vector<1x128xf32> to vector<16x128xf32>
    %232 = arith.addf %229, %231 : vector<16x128xf32>
    %233 = vector.extract_strided_slice %3 {offsets = [0, 0], sizes = [1, 128], strides = [1, 1]} : vector<2x128xf32> to vector<1x128xf32>
    %234 = vector.extract_strided_slice %3 {offsets = [1, 0], sizes = [1, 128], strides = [1, 1]} : vector<2x128xf32> to vector<1x128xf32>
    %235 = arith.mulf %232, %232 : vector<16x128xf32>
    %cst_84 = arith.constant dense<0.000000e+00> : vector<16x8xf32>
    %236 = tpu.matmul %235, %2, %cst_84 {dimension_numbers = #tpu.dot_dimension_numbers<[1], [0], [0], [1], [0, 0, 1, 1], [], []>} : vector<16x128xf32>, vector<128x8xf32>, vector<16x8xf32> -> vector<16x8xf32>
    %237 = math.absf %236 : vector<16x8xf32>
    %cst_85 = arith.constant dense<0.000000e+00> : vector<16xf32>
    %238 = vector.multi_reduction <add>, %237, %cst_85 [1] : vector<16x8xf32> to vector<16xf32>
    %239 = vector.shape_cast %238 : vector<16xf32> to vector<16x1xf32>
    %cst_86 = arith.constant 2.500000e-01 : f32
    %240 = vector.broadcast %cst_86 : f32 to vector<16x1xf32>
    %241 = arith.mulf %239, %240 : vector<16x1xf32>
    %cst_87 = arith.constant 0.00999999977 : f32
    %242 = vector.broadcast %cst_87 : f32 to vector<16x1xf32>
    %243 = arith.addf %241, %242 : vector<16x1xf32>
    %244 = math.rsqrt %243 : vector<16x1xf32>
    %245 = vector.broadcast %234 : vector<1x128xf32> to vector<16x128xf32>
    %246 = arith.mulf %232, %245 : vector<16x128xf32>
    %cst_88 = arith.constant dense<0.000000e+00> : vector<16xf32>
    %247 = vector.multi_reduction <add>, %246, %cst_88 [1] : vector<16x128xf32> to vector<16xf32>
    %248 = vector.shape_cast %247 : vector<16xf32> to vector<16x1xf32>
    %cst_89 = arith.constant 1.250000e-01 : f32
    %249 = vector.broadcast %cst_89 : f32 to vector<16x1xf32>
    %250 = arith.mulf %248, %249 : vector<16x1xf32>
    %251 = vector.broadcast %250 : vector<16x1xf32> to vector<16x128xf32>
    %252 = arith.subf %232, %251 : vector<16x128xf32>
    %253 = vector.broadcast %234 : vector<1x128xf32> to vector<16x128xf32>
    %254 = arith.mulf %252, %253 : vector<16x128xf32>
    %255 = arith.mulf %254, %254 : vector<16x128xf32>
    %cst_90 = arith.constant dense<0.000000e+00> : vector<16xf32>
    %256 = vector.multi_reduction <add>, %255, %cst_90 [1] : vector<16x128xf32> to vector<16xf32>
    %257 = vector.shape_cast %256 : vector<16xf32> to vector<16x1xf32>
    %cst_91 = arith.constant 1.250000e-01 : f32
    %258 = vector.broadcast %cst_91 : f32 to vector<16x1xf32>
    %259 = arith.mulf %257, %258 : vector<16x1xf32>
    %cst_92 = arith.constant 9.99999974E-6 : f32
    %260 = vector.broadcast %cst_92 : f32 to vector<16x1xf32>
    %261 = arith.addf %259, %260 : vector<16x1xf32>
    %262 = math.rsqrt %261 : vector<16x1xf32>
    %263 = vector.broadcast %244 : vector<16x1xf32> to vector<16x128xf32>
    %264 = vector.broadcast %233 : vector<1x128xf32> to vector<16x128xf32>
    %265 = arith.mulf %263, %264 : vector<16x128xf32>
    %266 = arith.mulf %232, %265 : vector<16x128xf32>
    %267 = vector.broadcast %262 : vector<16x1xf32> to vector<16x128xf32>
    %268 = arith.mulf %254, %267 : vector<16x128xf32>
    %269 = arith.addf %266, %268 : vector<16x128xf32>
    %270 = arith.truncf %269 : vector<16x128xf32> to vector<16x128xbf16>
    %c0_93 = arith.constant 0 : index
    %c0_94 = arith.constant 0 : index
    %271 = vector.load %arg19[%c0_93, %c0_94] : memref<128x1024xbf16, #tpu.memory_space<vmem>>, vector<128x1024xbf16>
    %cst_95 = arith.constant dense<0.000000e+00> : vector<16x1024xf32>
    %272 = tpu.matmul %270, %271, %cst_95 {dimension_numbers = #tpu.dot_dimension_numbers<[1], [0], [0], [1], [0, 0, 1, 1], [], []>} : vector<16x128xbf16>, vector<128x1024xbf16>, vector<16x1024xf32> -> vector<16x1024xf32>
    %c0_96 = arith.constant 0 : index
    %c0_97 = arith.constant 0 : index
    %273 = vector.load %arg20[%c0_96, %c0_97] : memref<1x1024xf32, #tpu.memory_space<vmem>>, vector<1x1024xf32>
    %274 = vector.broadcast %273 : vector<1x1024xf32> to vector<16x1024xf32>
    %275 = arith.addf %272, %274 : vector<16x1024xf32>
    %c0_98 = arith.constant 0 : index
    %c0_99 = arith.constant 0 : index
    %276 = vector.load %arg21[%c0_98, %c0_99] : memref<128x1024xbf16, #tpu.memory_space<vmem>>, vector<128x1024xbf16>
    %cst_100 = arith.constant dense<0.000000e+00> : vector<16x1024xf32>
    %277 = tpu.matmul %270, %276, %cst_100 {dimension_numbers = #tpu.dot_dimension_numbers<[1], [0], [0], [1], [0, 0, 1, 1], [], []>} : vector<16x128xbf16>, vector<128x1024xbf16>, vector<16x1024xf32> -> vector<16x1024xf32>
    %c0_101 = arith.constant 0 : index
    %c0_102 = arith.constant 0 : index
    %278 = vector.load %arg22[%c0_101, %c0_102] : memref<1x1024xf32, #tpu.memory_space<vmem>>, vector<1x1024xf32>
    %279 = vector.broadcast %278 : vector<1x1024xf32> to vector<16x1024xf32>
    %280 = arith.addf %277, %279 : vector<16x1024xf32>
    %281 = arith.mulf %275, %280 : vector<16x1024xf32>
    %282 = arith.truncf %281 : vector<16x1024xf32> to vector<16x1024xbf16>
    %c0_103 = arith.constant 0 : index
    %c0_104 = arith.constant 0 : index
    %283 = vector.load %arg25[%c0_103, %c0_104] : memref<1024x128xbf16, #tpu.memory_space<vmem>>, vector<1024x128xbf16>
    %cst_105 = arith.constant dense<0.000000e+00> : vector<16x128xf32>
    %284 = tpu.matmul %282, %283, %cst_105 {dimension_numbers = #tpu.dot_dimension_numbers<[1], [0], [0], [1], [0, 0, 1, 1], [], []>} : vector<16x1024xbf16>, vector<1024x128xbf16>, vector<16x128xf32> -> vector<16x128xf32>
    %c0_106 = arith.constant 0 : index
    %c0_107 = arith.constant 0 : index
    %285 = vector.load %arg26[%c0_106, %c0_107] : memref<128x8xf32, #tpu.memory_space<vmem>>, vector<128x8xf32>
    %cst_108 = arith.constant dense<0.000000e+00> : vector<16x8xf32>
    %286 = tpu.matmul %284, %285, %cst_108 {dimension_numbers = #tpu.dot_dimension_numbers<[1], [0], [0], [1], [0, 0, 1, 1], [], []>} : vector<16x128xf32>, vector<128x8xf32>, vector<16x8xf32> -> vector<16x8xf32>
    %287 = arith.mulf %286, %286 : vector<16x8xf32>
    %288 = arith.mulf %286, %287 : vector<16x8xf32>
    %cst_109 = arith.constant 4.471500e-02 : f32
    %289 = vector.broadcast %cst_109 : f32 to vector<16x8xf32>
    %290 = arith.mulf %289, %288 : vector<16x8xf32>
    %291 = arith.addf %286, %290 : vector<16x8xf32>
    %cst_110 = arith.constant 0.797884583 : f32
    %292 = vector.broadcast %cst_110 : f32 to vector<16x8xf32>
    %293 = arith.mulf %292, %291 : vector<16x8xf32>
    %294 = math.tanh %293 : vector<16x8xf32>
    %cst_111 = arith.constant 1.000000e+00 : f32
    %295 = vector.broadcast %cst_111 : f32 to vector<16x8xf32>
    %296 = arith.addf %295, %294 : vector<16x8xf32>
    %cst_112 = arith.constant 5.000000e-01 : f32
    %297 = vector.broadcast %cst_112 : f32 to vector<16x8xf32>
    %298 = arith.mulf %297, %296 : vector<16x8xf32>
    %299 = arith.mulf %286, %298 : vector<16x8xf32>
    %c0_113 = arith.constant 0 : index
    %c0_114 = arith.constant 0 : index
    %300 = vector.load %arg27[%c0_113, %c0_114] : memref<8x128xf32, #tpu.memory_space<vmem>>, vector<8x128xf32>
    %cst_115 = arith.constant dense<0.000000e+00> : vector<16x128xf32>
    %301 = tpu.matmul %299, %300, %cst_115 {dimension_numbers = #tpu.dot_dimension_numbers<[1], [0], [0], [1], [0, 0, 1, 1], [], []>} : vector<16x8xf32>, vector<8x128xf32>, vector<16x128xf32> -> vector<16x128xf32>
    %c0_116 = arith.constant 0 : index
    %c0_117 = arith.constant 0 : index
    %302 = vector.load %arg23[%c0_116, %c0_117] : memref<128x128xbf16, #tpu.memory_space<vmem>>, vector<128x128xbf16>
    %cst_118 = arith.constant dense<0.000000e+00> : vector<16x128xf32>
    %303 = tpu.matmul %270, %302, %cst_118 {dimension_numbers = #tpu.dot_dimension_numbers<[1], [0], [0], [1], [0, 0, 1, 1], [], []>} : vector<16x128xbf16>, vector<128x128xbf16>, vector<16x128xf32> -> vector<16x128xf32>
    %c0_119 = arith.constant 0 : index
    %c0_120 = arith.constant 0 : index
    %304 = vector.load %arg24[%c0_119, %c0_120] : memref<1x128xf32, #tpu.memory_space<vmem>>, vector<1x128xf32>
    %305 = vector.broadcast %304 : vector<1x128xf32> to vector<16x128xf32>
    %306 = arith.addf %303, %305 : vector<16x128xf32>
    %307 = arith.mulf %306, %306 : vector<16x128xf32>
    %308 = arith.mulf %306, %307 : vector<16x128xf32>
    %cst_121 = arith.constant 4.471500e-02 : f32
    %309 = vector.broadcast %cst_121 : f32 to vector<16x128xf32>
    %310 = arith.mulf %309, %308 : vector<16x128xf32>
    %311 = arith.addf %306, %310 : vector<16x128xf32>
    %cst_122 = arith.constant 0.797884583 : f32
    %312 = vector.broadcast %cst_122 : f32 to vector<16x128xf32>
    %313 = arith.mulf %312, %311 : vector<16x128xf32>
    %314 = math.tanh %313 : vector<16x128xf32>
    %cst_123 = arith.constant 1.000000e+00 : f32
    %315 = vector.broadcast %cst_123 : f32 to vector<16x128xf32>
    %316 = arith.addf %315, %314 : vector<16x128xf32>
    %cst_124 = arith.constant 5.000000e-01 : f32
    %317 = vector.broadcast %cst_124 : f32 to vector<16x128xf32>
    %318 = arith.mulf %317, %316 : vector<16x128xf32>
    %319 = arith.mulf %306, %318 : vector<16x128xf32>
    %320 = arith.mulf %301, %284 : vector<16x128xf32>
    %321 = arith.addf %320, %319 : vector<16x128xf32>
    %322 = arith.truncf %321 : vector<16x128xf32> to vector<16x128xbf16>
    %c0_125 = arith.constant 0 : index
    %c0_126 = arith.constant 0 : index
    %323 = vector.load %arg28[%c0_125, %c0_126] : memref<128x128xbf16, #tpu.memory_space<vmem>>, vector<128x128xbf16>
    %cst_127 = arith.constant dense<0.000000e+00> : vector<16x128xf32>
    %324 = tpu.matmul %322, %323, %cst_127 {dimension_numbers = #tpu.dot_dimension_numbers<[1], [0], [0], [1], [0, 0, 1, 1], [], []>} : vector<16x128xbf16>, vector<128x128xbf16>, vector<16x128xf32> -> vector<16x128xf32>
    %325 = arith.addf %232, %324 : vector<16x128xf32>
    %c0_128 = arith.constant 0 : index
    %c0_129 = arith.constant 0 : index
    %326 = vector.load %arg29[%c0_128, %c0_129] : memref<1x128xf32, #tpu.memory_space<vmem>>, vector<1x128xf32>
    %327 = vector.broadcast %326 : vector<1x128xf32> to vector<16x128xf32>
    %328 = arith.addf %325, %327 : vector<16x128xf32>
    %c0_130 = arith.constant 0 : index
    %c0_131 = arith.constant 0 : index
    %329 = vector.load %arg30[%c0_130, %c0_131] : memref<16x128xf32, #tpu.memory_space<vmem>>, vector<16x128xf32>
    tpu.vector_store %arg30[%c0_130, %c0_131], %328 {strides = array<i32>} : memref<16x128xf32, #tpu.memory_space<vmem>>, vector<16x128xf32>,
    return
  }
  func.func @transform_0(%arg0: i32) -> (i32, i32) {
    %c0_i32 = arith.constant 0 : i32
    %c0_i32_0 = arith.constant 0 : i32
    return %arg0, %c0_i32 : i32, i32
  }
  func.func @transform_1(%arg0: i32) -> (i32, i32) {
    %c0_i32 = arith.constant 0 : i32
    %c0_i32_0 = arith.constant 0 : i32
    return %arg0, %c0_i32 : i32, i32
  }
  func.func @transform_2(%arg0: i32) -> (i32, i32) {
    %c0_i32 = arith.constant 0 : i32
    %c0_i32_0 = arith.constant 0 : i32
    %c0_i32_1 = arith.constant 0 : i32
    return %c0_i32, %c0_i32_0 : i32, i32
  }
  func.func @transform_3(%arg0: i32) -> (i32, i32) {
    %c0_i32 = arith.constant 0 : i32
    %c0_i32_0 = arith.constant 0 : i32
    %c0_i32_1 = arith.constant 0 : i32
    return %c0_i32, %c0_i32_0 : i32, i32
  }
  func.func @transform_4(%arg0: i32) -> (i32, i32) {
    %c0_i32 = arith.constant 0 : i32
    %c0_i32_0 = arith.constant 0 : i32
    %c0_i32_1 = arith.constant 0 : i32
    return %c0_i32, %c0_i32_0 : i32, i32
  }
  func.func @transform_5(%arg0: i32) -> (i32, i32) {
    %c0_i32 = arith.constant 0 : i32
    %c0_i32_0 = arith.constant 0 : i32
    %c0_i32_1 = arith.constant 0 : i32
    return %c0_i32, %c0_i32_0 : i32, i32
  }
  func.func @transform_6(%arg0: i32) -> (i32, i32) {
    %c0_i32 = arith.constant 0 : i32
    %c0_i32_0 = arith.constant 0 : i32
    %c0_i32_1 = arith.constant 0 : i32
    return %c0_i32, %c0_i32_0 : i32, i32
  }
  func.func @transform_7(%arg0: i32) -> (i32, i32) {
    %c0_i32 = arith.constant 0 : i32
    %c0_i32_0 = arith.constant 0 : i32
    %c0_i32_1 = arith.constant 0 : i32
    return %c0_i32, %c0_i32_0 : i32, i32
  }
  func.func @transform_8(%arg0: i32) -> (i32, i32) {
    %c0_i32 = arith.constant 0 : i32
    %c0_i32_0 = arith.constant 0 : i32
    %c0_i32_1 = arith.constant 0 : i32
    return %c0_i32, %c0_i32_0 : i32, i32
  }
  func.func @transform_9(%arg0: i32) -> (i32, i32) {
    %c0_i32 = arith.constant 0 : i32
    %c0_i32_0 = arith.constant 0 : i32
    %c0_i32_1 = arith.constant 0 : i32
    return %c0_i32, %c0_i32_0 : i32, i32
  }
  func.func @transform_10(%arg0: i32) -> (i32, i32) {
    %c0_i32 = arith.constant 0 : i32
    %c0_i32_0 = arith.constant 0 : i32
    %c0_i32_1 = arith.constant 0 : i32
    return %c0_i32, %c0_i32_0 : i32, i32
  }
  func.func @transform_11(%arg0: i32) -> (i32, i32) {
    %c0_i32 = arith.constant 0 : i32
    %c0_i32_0 = arith.constant 0 : i32
    %c0_i32_1 = arith.constant 0 : i32
    return %c0_i32, %c0_i32_0 : i32, i32
  }
  func.func @transform_12(%arg0: i32) -> (i32, i32) {
    %c0_i32 = arith.constant 0 : i32
    %c0_i32_0 = arith.constant 0 : i32
    %c0_i32_1 = arith.constant 0 : i32
    return %c0_i32, %c0_i32_0 : i32, i32
  }
  func.func @transform_13(%arg0: i32) -> (i32, i32) {
    %c0_i32 = arith.constant 0 : i32
    %c0_i32_0 = arith.constant 0 : i32
    %c0_i32_1 = arith.constant 0 : i32
    return %c0_i32, %c0_i32_0 : i32, i32
  }
  func.func @transform_14(%arg0: i32) -> (i32, i32) {
    %c0_i32 = arith.constant 0 : i32
    %c0_i32_0 = arith.constant 0 : i32
    %c0_i32_1 = arith.constant 0 : i32
    return %c0_i32, %c0_i32_0 : i32, i32
  }
  func.func @transform_15(%arg0: i32) -> (i32, i32) {
    %c0_i32 = arith.constant 0 : i32
    %c0_i32_0 = arith.constant 0 : i32
    %c0_i32_1 = arith.constant 0 : i32
    return %c0_i32, %c0_i32_0 : i32, i32
  }
  func.func @transform_16(%arg0: i32) -> (i32, i32) {
    %c0_i32 = arith.constant 0 : i32
    %c0_i32_0 = arith.constant 0 : i32
    %c0_i32_1 = arith.constant 0 : i32
    return %c0_i32, %c0_i32_0 : i32, i32
  }
  func.func @transform_17(%arg0: i32) -> (i32, i32) {
    %c0_i32 = arith.constant 0 : i32
    %c0_i32_0 = arith.constant 0 : i32
    %c0_i32_1 = arith.constant 0 : i32
    return %c0_i32, %c0_i32_0 : i32, i32
  }
  func.func @transform_18(%arg0: i32) -> (i32, i32) {
    %c0_i32 = arith.constant 0 : i32
    %c0_i32_0 = arith.constant 0 : i32
    %c0_i32_1 = arith.constant 0 : i32
    return %c0_i32, %c0_i32_0 : i32, i32
  }
  func.func @transform_19(%arg0: i32) -> (i32, i32) {
    %c0_i32 = arith.constant 0 : i32
    %c0_i32_0 = arith.constant 0 : i32
    %c0_i32_1 = arith.constant 0 : i32
    return %c0_i32, %c0_i32_0 : i32, i32
  }
  func.func @transform_20(%arg0: i32) -> (i32, i32) {
    %c0_i32 = arith.constant 0 : i32
    %c0_i32_0 = arith.constant 0 : i32
    %c0_i32_1 = arith.constant 0 : i32
    return %c0_i32, %c0_i32_0 : i32, i32
  }
  func.func @transform_21(%arg0: i32) -> (i32, i32) {
    %c0_i32 = arith.constant 0 : i32
    %c0_i32_0 = arith.constant 0 : i32
    %c0_i32_1 = arith.constant 0 : i32
    return %c0_i32, %c0_i32_0 : i32, i32
  }
  func.func @transform_22(%arg0: i32) -> (i32, i32) {
    %c0_i32 = arith.constant 0 : i32
    %c0_i32_0 = arith.constant 0 : i32
    %c0_i32_1 = arith.constant 0 : i32
    return %c0_i32, %c0_i32_0 : i32, i32
  }
  func.func @transform_23(%arg0: i32) -> (i32, i32) {
    %c0_i32 = arith.constant 0 : i32
    %c0_i32_0 = arith.constant 0 : i32
    %c0_i32_1 = arith.constant 0 : i32
    return %c0_i32, %c0_i32_0 : i32, i32
  }
  func.func @transform_24(%arg0: i32) -> (i32, i32) {
    %c0_i32 = arith.constant 0 : i32
    %c0_i32_0 = arith.constant 0 : i32
    %c0_i32_1 = arith.constant 0 : i32
    return %c0_i32, %c0_i32_0 : i32, i32
  }
  func.func @transform_25(%arg0: i32) -> (i32, i32) {
    %c0_i32 = arith.constant 0 : i32
    %c0_i32_0 = arith.constant 0 : i32
    %c0_i32_1 = arith.constant 0 : i32
    return %c0_i32, %c0_i32_0 : i32, i32
  }
  func.func @transform_26(%arg0: i32) -> (i32, i32) {
    %c0_i32 = arith.constant 0 : i32
    %c0_i32_0 = arith.constant 0 : i32
    %c0_i32_1 = arith.constant 0 : i32
    return %c0_i32, %c0_i32_0 : i32, i32
  }
  func.func @transform_27(%arg0: i32) -> (i32, i32) {
    %c0_i32 = arith.constant 0 : i32
    %c0_i32_0 = arith.constant 0 : i32
    %c0_i32_1 = arith.constant 0 : i32
    return %c0_i32, %c0_i32_0 : i32, i32
  }
  func.func @transform_28(%arg0: i32) -> (i32, i32) {
    %c0_i32 = arith.constant 0 : i32
    %c0_i32_0 = arith.constant 0 : i32
    %c0_i32_1 = arith.constant 0 : i32
    return %c0_i32, %c0_i32_0 : i32, i32
  }
  func.func @transform_29(%arg0: i32) -> (i32, i32) {
    %c0_i32 = arith.constant 0 : i32
    %c0_i32_0 = arith.constant 0 : i32
    return %arg0, %c0_i32 : i32, i32
  }
}

</mosaic_0001>

<llo_original>
// kernel: tpu_custom_call.1
$region0: #{tpu_custom_call.1}
  #allocation0 [shape = 'u32[]', space=smem, size = 0x4, offset = 0x4, fixed_abs, tag = 'smem constant byte address 0x4 - core index']
  #allocation1 [shape = 'u32[144,128]{1,0:T(1,128)}', space=vmem, size = 0x12000, scoped, tag = 'internal scratch']
  %s0 = inlined_call_operand.smem [shape: u32[30], index: -1, kind: input, shape index: {}]
  %s1 = sld [smem:[%s0]]
  %s2 = scalar_lea.smem %s0, 1
  %s3 = sld [smem:[%s2]]
  %s4 = scalar_lea.smem %s0, 2
  %s5 = sld [smem:[%s4]]
  %s6 = scalar_lea.smem %s0, 3
  %s7 = sld [smem:[%s6]]
  %s8 = scalar_lea.smem %s0, 4
  %s9 = sld [smem:[%s8]]
  %s10 = scalar_lea.smem %s0, 5
  %s11 = sld [smem:[%s10]]
  %s12 = scalar_lea.smem %s0, 6
  %s13 = sld [smem:[%s12]]
  %s14 = scalar_lea.smem %s0, 7
  %s15 = sld [smem:[%s14]]
  %s16 = scalar_lea.smem %s0, 8
  %s17 = sld [smem:[%s16]]
  %s18 = scalar_lea.smem %s0, 9
  %s19 = sld [smem:[%s18]]
  %s20 = scalar_lea.smem %s0, 10
  %s21 = sld [smem:[%s20]]
  %s22 = scalar_lea.smem %s0, 11
  %s23 = sld [smem:[%s22]]
  %s24 = scalar_lea.smem %s0, 12
  %s25 = sld [smem:[%s24]]
  %s26 = scalar_lea.smem %s0, 13
  %s27 = sld [smem:[%s26]]
  %s28 = scalar_lea.smem %s0, 14
  %s29 = sld [smem:[%s28]]
  %s30 = scalar_lea.smem %s0, 15
  %s31 = sld [smem:[%s30]]
  %s32 = scalar_lea.smem %s0, 16
  %s33 = sld [smem:[%s32]]
  %s34 = scalar_lea.smem %s0, 17
  %s35 = sld [smem:[%s34]]
  %s36 = scalar_lea.smem %s0, 18
  %s37 = sld [smem:[%s36]]
  %s38 = scalar_lea.smem %s0, 19
  %s39 = sld [smem:[%s38]]
  %s40 = scalar_lea.smem %s0, 20
  %s41 = sld [smem:[%s40]]
  %s42 = scalar_lea.smem %s0, 21
  %s43 = sld [smem:[%s42]]
  %s44 = scalar_lea.smem %s0, 22
  %s45 = sld [smem:[%s44]]
  %s46 = scalar_lea.smem %s0, 23
  %s47 = sld [smem:[%s46]]
  %s48 = scalar_lea.smem %s0, 24
  %s49 = sld [smem:[%s48]]
  %s50 = scalar_lea.smem %s0, 25
  %s51 = sld [smem:[%s50]]
  %s52 = scalar_lea.smem %s0, 26
  %s53 = sld [smem:[%s52]]
  %s54 = scalar_lea.smem %s0, 27
  %s55 = sld [smem:[%s54]]
  %s56 = scalar_lea.smem %s0, 28
  %s57 = sld [smem:[%s56]]
  %s58 = scalar_lea.smem %s0, 29
  %s59 = sld [smem:[%s58]]
  %s60 = sld [smem:[#allocation0]]
  $region194: #{tpu_custom_call.1} parent=0
    _
  %s62 = ssub.s32 1, %s60
  %s63 = scalar_select 0, %s62, %s60
  $region1: #{tpu_custom_call.1} parent=0
    #allocation2 [shape = 'u8[8192]{0}', space=vmem, size = 0x2000, scoped, tag = 'input window, operand 0, single buffered']
    #allocation3 [shape = 's32[1]{0}', space=sflag, size = 0x4, scoped, tag = 'scoped memory for tpu_custom_call.1']
    #allocation4 [shape = 's32[1]{0}', space=sflag, size = 0x4, scoped, tag = 'scoped memory for tpu_custom_call.1']
    #allocation5 [shape = 'u8[8192]{0}', space=vmem, size = 0x2000, scoped, tag = 'input window, operand 1, single buffered']
    #allocation6 [shape = 's32[1]{0}', space=sflag, size = 0x4, scoped, tag = 'scoped memory for tpu_custom_call.1']
    #allocation7 [shape = 'u8[1024]{0}', space=vmem, size = 0x400, scoped, tag = 'input window, operand 5, single buffered']
    #allocation8 [shape = 'u8[8192]{0}', space=vmem, size = 0x2000, scoped, tag = 'input window, operand 6, single buffered']
    #allocation9 [shape = 's32[1]{0}', space=sflag, size = 0x4, scoped, tag = 'scoped memory for tpu_custom_call.1']
    #allocation10 [shape = 'u8[8192]{0}', space=vmem, size = 0x2000, scoped, tag = 'input window, operand 7, single buffered']
    #allocation11 [shape = 'u8[3072]{0}', space=vmem, size = 0xc00, scoped, tag = 'input window, operand 9, single buffered']
    #allocation12 [shape = 's32[1]{0}', space=sflag, size = 0x4, scoped, tag = 'scoped memory for tpu_custom_call.1']
    #allocation13 [shape = 'u8[65536]{0}', space=vmem, size = 0x10000, scoped, tag = 'input window, operand 10, single buffered']
    #allocation14 [shape = 'u8[65536]{0}', space=vmem, size = 0x10000, scoped, tag = 'input window, operand 12, single buffered']
    #allocation15 [shape = 's32[1]{0}', space=sflag, size = 0x4, scoped, tag = 'scoped memory for tpu_custom_call.1']
    #allocation16 [shape = 'u8[1024]{0}', space=vmem, size = 0x400, scoped, tag = 'input window, operand 13, single buffered']
    #allocation17 [shape = 'u8[131072]{0}', space=vmem, size = 0x20000, scoped, tag = 'input window, operand 14, single buffered']
    #allocation18 [shape = 's32[1]{0}', space=sflag, size = 0x4, scoped, tag = 'scoped memory for tpu_custom_call.1']
    #allocation19 [shape = 'u8[2048]{0}', space=vmem, size = 0x800, scoped, tag = 'input window, operand 15, single buffered']
    #allocation20 [shape = 'u8[65536]{0}', space=vmem, size = 0x10000, scoped, tag = 'input window, operand 16, single buffered']
    #allocation21 [shape = 's32[1]{0}', space=sflag, size = 0x4, scoped, tag = 'scoped memory for tpu_custom_call.1']
    #allocation22 [shape = 'u8[512]{0}', space=vmem, size = 0x400, scoped, tag = 'input window, operand 17, single buffered']
    #allocation23 [shape = 'u8[262144]{0}', space=vmem, size = 0x40000, scoped, tag = 'input window, operand 18, single buffered']
    #allocation24 [shape = 's32[1]{0}', space=sflag, size = 0x4, scoped, tag = 'scoped memory for tpu_custom_call.1']
    #allocation25 [shape = 'u8[262144]{0}', space=vmem, size = 0x40000, scoped, tag = 'input window, operand 20, single buffered']
    #allocation26 [shape = 'u8[262144]{0}', space=vmem, size = 0x40000, scoped, tag = 'input window, operand 24, single buffered']
    #allocation27 [shape = 's32[1]{0}', space=sflag, size = 0x4, scoped, tag = 'scoped memory for tpu_custom_call.1']
    #allocation28 [shape = 'u8[32768]{0}', space=vmem, size = 0x8000, scoped, tag = 'input window, operand 27, single buffered']
    #allocation29 [shape = 'u8[8192]{0}', space=vmem, size = 0x2000, scoped, tag = 'output window, operand 0, single buffered']
    %64 = vsyncpa [#allocation3], 0
    %65 = vsyncpa [#allocation6], 0
    %66 = vsyncpa [#allocation9], 0
    %67 = vsyncpa [#allocation12], 0
    %68 = vsyncpa [#allocation15], 0
    %69 = vsyncpa [#allocation18], 0
    %70 = vsyncpa [#allocation21], 0
    %71 = vsyncpa [#allocation24], 0
    %72 = vsyncpa [#allocation27], 0
    %73 = vsyncpa [#allocation4], 0
    // Predicated region
    $region2: #{tpu_custom_call.1} parent=1 // pred_check
      _
    $region3: #{tpu_custom_call.1} parent=1 // pred_check_branch
      %75 = sbr.rel (0) target = $region5
    $region4: #{tpu_custom_call.1} parent=1 // pred_region
      %s77 = ssub.s32 256, 256
      %78 = vsyncadd [#allocation3], %s77
      %s79 = sshll.u32 [#allocation2], 4
      %s80 = int_to_ptr.vmem [resolvable:$true] %s79
      %85 = dma.hbm_to_vmem [thread:$0]  %s1, 256, %s80, [#allocation3], 128, 128, 8
    $region5: #{tpu_custom_call.1} parent=1 // pred_fallthru
      _
    // Predicated region
    $region6: #{tpu_custom_call.1} parent=1 // pred_check
      _
    $region7: #{tpu_custom_call.1} parent=1 // pred_check_branch
      %87 = sbr.rel (0) target = $region9
    $region8: #{tpu_custom_call.1} parent=1 // pred_region
      %s89 = ssub.s32 256, 256
      %90 = vsyncadd [#allocation6], %s89
      %s91 = sshll.u32 [#allocation5], 4
      %s92 = int_to_ptr.vmem [resolvable:$true] %s91
      %97 = dma.hbm_to_vmem [thread:$0]  %s3, 256, %s92, [#allocation6], 128, 128, 8
    $region9: #{tpu_custom_call.1} parent=1 // pred_fallthru
      _
    // Predicated region
    $region10: #{tpu_custom_call.1} parent=1 // pred_check
      _
    $region11: #{tpu_custom_call.1} parent=1 // pred_check_branch
      %99 = sbr.rel (0) target = $region13
    $region12: #{tpu_custom_call.1} parent=1 // pred_region
      _
    $region13: #{tpu_custom_call.1} parent=1 // pred_fallthru
      _
    // Predicated region
    $region14: #{tpu_custom_call.1} parent=1 // pred_check
      _
    $region15: #{tpu_custom_call.1} parent=1 // pred_check_branch
      %101 = sbr.rel (0) target = $region17
    $region16: #{tpu_custom_call.1} parent=1 // pred_region
      _
    $region17: #{tpu_custom_call.1} parent=1 // pred_fallthru
      _
    // Predicated region
    $region18: #{tpu_custom_call.1} parent=1 // pred_check
      _
    $region19: #{tpu_custom_call.1} parent=1 // pred_check_branch
      %103 = sbr.rel (0) target = $region21
    $region20: #{tpu_custom_call.1} parent=1 // pred_region
      _
    $region21: #{tpu_custom_call.1} parent=1 // pred_fallthru
      _
    // Predicated region
    $region22: #{tpu_custom_call.1} parent=1 // pred_check
      _
    $region23: #{tpu_custom_call.1} parent=1 // pred_check_branch
      %105 = sbr.rel (0) target = $region25
    $region24: #{tpu_custom_call.1} parent=1 // pred_region
      %s107 = ssub.s32 32, 32
      %108 = vsyncadd [#allocation6], %s107
      %s110 = sshll.u32 [#allocation7], 4
      %s111 = int_to_ptr.vmem [resolvable:$true] %s110
      %113 = dma.hbm_to_vmem [thread:$0]  %s11, 32, %s111, [#allocation6]
    $region25: #{tpu_custom_call.1} parent=1 // pred_fallthru
      _
    // Predicated region
    $region26: #{tpu_custom_call.1} parent=1 // pred_check
      _
    $region27: #{tpu_custom_call.1} parent=1 // pred_check_branch
      %115 = sbr.rel (0) target = $region29
    $region28: #{tpu_custom_call.1} parent=1 // pred_region
      %s117 = ssub.s32 256, 256
      %118 = vsyncadd [#allocation9], %s117
      %s119 = sshll.u32 [#allocation8], 4
      %s120 = int_to_ptr.vmem [resolvable:$true] %s119
      %125 = dma.hbm_to_vmem [thread:$0]  %s13, 256, %s120, [#allocation9], 128, 128, 8
    $region29: #{tpu_custom_call.1} parent=1 // pred_fallthru
      _
    // Predicated region
    $region30: #{tpu_custom_call.1} parent=1 // pred_check
      _
    $region31: #{tpu_custom_call.1} parent=1 // pred_check_branch
      %127 = sbr.rel (0) target = $region33
    $region32: #{tpu_custom_call.1} parent=1 // pred_region
      %s129 = ssub.s32 256, 256
      %130 = vsyncadd [#allocation9], %s129
      %s131 = sshll.u32 [#allocation10], 4
      %s132 = int_to_ptr.vmem [resolvable:$true] %s131
      %137 = dma.hbm_to_vmem [thread:$0]  %s15, 256, %s132, [#allocation9], 128, 128, 8
    $region33: #{tpu_custom_call.1} parent=1 // pred_fallthru
      _
    // Predicated region
    $region34: #{tpu_custom_call.1} parent=1 // pred_check
      _
    $region35: #{tpu_custom_call.1} parent=1 // pred_check_branch
      %139 = sbr.rel (0) target = $region37
    $region36: #{tpu_custom_call.1} parent=1 // pred_region
      _
    $region37: #{tpu_custom_call.1} parent=1 // pred_fallthru
      _
    // Predicated region
    $region38: #{tpu_custom_call.1} parent=1 // pred_check
      _
    $region39: #{tpu_custom_call.1} parent=1 // pred_check_branch
      %141 = sbr.rel (0) target = $region41
    $region40: #{tpu_custom_call.1} parent=1 // pred_region
      %s143 = ssub.s32 96, 96
      %144 = vsyncadd [#allocation12], %s143
      %s146 = sshll.u32 [#allocation11], 4
      %s147 = int_to_ptr.vmem [resolvable:$true] %s146
      %149 = dma.hbm_to_vmem [thread:$0]  %s19, 96, %s147, [#allocation12]
    $region41: #{tpu_custom_call.1} parent=1 // pred_fallthru
      _
    // Predicated region
    $region42: #{tpu_custom_call.1} parent=1 // pred_check
      _
    $region43: #{tpu_custom_call.1} parent=1 // pred_check_branch
      %151 = sbr.rel (0) target = $region45
    $region44: #{tpu_custom_call.1} parent=1 // pred_region
      %s153 = ssub.s32 2048, 2048
      %154 = vsyncadd [#allocation12], %s153
      %s155 = sshll.u32 [#allocation13], 4
      %s156 = int_to_ptr.vmem [resolvable:$true] %s155
      %161 = dma.hbm_to_vmem [thread:$0]  %s21, 2048, %s156, [#allocation12], 64, 64, 4
    $region45: #{tpu_custom_call.1} parent=1 // pred_fallthru
      _
    // Predicated region
    $region46: #{tpu_custom_call.1} parent=1 // pred_check
      _
    $region47: #{tpu_custom_call.1} parent=1 // pred_check_branch
      %163 = sbr.rel (0) target = $region49
    $region48: #{tpu_custom_call.1} parent=1 // pred_region
      _
    $region49: #{tpu_custom_call.1} parent=1 // pred_fallthru
      _
    // Predicated region
    $region50: #{tpu_custom_call.1} parent=1 // pred_check
      _
    $region51: #{tpu_custom_call.1} parent=1 // pred_check_branch
      %165 = sbr.rel (0) target = $region53
    $region52: #{tpu_custom_call.1} parent=1 // pred_region
      %s167 = ssub.s32 2048, 2048
      %168 = vsyncadd [#allocation15], %s167
      %s169 = sshll.u32 [#allocation14], 4
      %s170 = int_to_ptr.vmem [resolvable:$true] %s169
      %175 = dma.hbm_to_vmem [thread:$0]  %s25, 2048, %s170, [#allocation15], 128, 128, 8
    $region53: #{tpu_custom_call.1} parent=1 // pred_fallthru
      _
    // Predicated region
    $region54: #{tpu_custom_call.1} parent=1 // pred_check
      _
    $region55: #{tpu_custom_call.1} parent=1 // pred_check_branch
      %177 = sbr.rel (0) target = $region57
    $region56: #{tpu_custom_call.1} parent=1 // pred_region
      %s179 = ssub.s32 32, 32
      %180 = vsyncadd [#allocation15], %s179
      %s182 = sshll.u32 [#allocation16], 4
      %s183 = int_to_ptr.vmem [resolvable:$true] %s182
      %185 = dma.hbm_to_vmem [thread:$0]  %s27, 32, %s183, [#allocation15]
    $region57: #{tpu_custom_call.1} parent=1 // pred_fallthru
      _
    // Predicated region
    $region58: #{tpu_custom_call.1} parent=1 // pred_check
      _
    $region59: #{tpu_custom_call.1} parent=1 // pred_check_branch
      %187 = sbr.rel (0) target = $region61
    $region60: #{tpu_custom_call.1} parent=1 // pred_region
      %s189 = ssub.s32 4096, 4096
      %190 = vsyncadd [#allocation18], %s189
      %s191 = sshll.u32 [#allocation17], 4
      %s192 = int_to_ptr.vmem [resolvable:$true] %s191
      %197 = dma.hbm_to_vmem [thread:$0]  %s29, 4096, %s192, [#allocation18], 256, 256, 16
    $region61: #{tpu_custom_call.1} parent=1 // pred_fallthru
      _
    // Predicated region
    $region62: #{tpu_custom_call.1} parent=1 // pred_check
      _
    $region63: #{tpu_custom_call.1} parent=1 // pred_check_branch
      %199 = sbr.rel (0) target = $region65
    $region64: #{tpu_custom_call.1} parent=1 // pred_region
      %s201 = ssub.s32 64, 64
      %202 = vsyncadd [#allocation18], %s201
      %s204 = sshll.u32 [#allocation19], 4
      %s205 = int_to_ptr.vmem [resolvable:$true] %s204
      %207 = dma.hbm_to_vmem [thread:$0]  %s31, 64, %s205, [#allocation18]
    $region65: #{tpu_custom_call.1} parent=1 // pred_fallthru
      _
    // Predicated region
    $region66: #{tpu_custom_call.1} parent=1 // pred_check
      _
    $region67: #{tpu_custom_call.1} parent=1 // pred_check_branch
      %209 = sbr.rel (0) target = $region69
    $region68: #{tpu_custom_call.1} parent=1 // pred_region
      %s211 = ssub.s32 2048, 2048
      %212 = vsyncadd [#allocation21], %s211
      %s213 = sshll.u32 [#allocation20], 4
      %s214 = int_to_ptr.vmem [resolvable:$true] %s213
      %219 = dma.hbm_to_vmem [thread:$0]  %s33, 2048, %s214, [#allocation21], 64, 64, 4
    $region69: #{tpu_custom_call.1} parent=1 // pred_fallthru
      _
    // Predicated region
    $region70: #{tpu_custom_call.1} parent=1 // pred_check
      _
    $region71: #{tpu_custom_call.1} parent=1 // pred_check_branch
      %221 = sbr.rel (0) target = $region73
    $region72: #{tpu_custom_call.1} parent=1 // pred_region
      %s223 = ssub.s32 16, 16
      %224 = vsyncadd [#allocation21], %s223
      %s226 = sshll.u32 [#allocation22], 4
      %s227 = int_to_ptr.vmem [resolvable:$true] %s226
      %229 = dma.hbm_to_vmem [thread:$0]  %s35, 16, %s227, [#allocation21]
    $region73: #{tpu_custom_call.1} parent=1 // pred_fallthru
      _
    // Predicated region
    $region74: #{tpu_custom_call.1} parent=1 // pred_check
      _
    $region75: #{tpu_custom_call.1} parent=1 // pred_check_branch
      %231 = sbr.rel (0) target = $region77
    $region76: #{tpu_custom_call.1} parent=1 // pred_region
      %s233 = ssub.s32 8192, 8192
      %234 = vsyncadd [#allocation24], %s233
      %s235 = sshll.u32 [#allocation23], 4
      %s236 = int_to_ptr.vmem [resolvable:$true] %s235
      %241 = dma.hbm_to_vmem [thread:$0]  %s37, 8192, %s236, [#allocation24], 512, 512, 32
    $region77: #{tpu_custom_call.1} parent=1 // pred_fallthru
      _
    // Predicated region
    $region78: #{tpu_custom_call.1} parent=1 // pred_check
      _
    $region79: #{tpu_custom_call.1} parent=1 // pred_check_branch
      %243 = sbr.rel (0) target = $region81
    $region80: #{tpu_custom_call.1} parent=1 // pred_region
      _
    $region81: #{tpu_custom_call.1} parent=1 // pred_fallthru
      _
    // Predicated region
    $region82: #{tpu_custom_call.1} parent=1 // pred_check
      _
    $region83: #{tpu_custom_call.1} parent=1 // pred_check_branch
      %245 = sbr.rel (0) target = $region85
    $region84: #{tpu_custom_call.1} parent=1 // pred_region
      %s247 = ssub.s32 8192, 8192
      %248 = vsyncadd [#allocation24], %s247
      %s249 = sshll.u32 [#allocation25], 4
      %s250 = int_to_ptr.vmem [resolvable:$true] %s249
      %255 = dma.hbm_to_vmem [thread:$0]  %s41, 8192, %s250, [#allocation24], 512, 512, 32
    $region85: #{tpu_custom_call.1} parent=1 // pred_fallthru
      _
    // Predicated region
    $region86: #{tpu_custom_call.1} parent=1 // pred_check
      _
    $region87: #{tpu_custom_call.1} parent=1 // pred_check_branch
      %257 = sbr.rel (0) target = $region89
    $region88: #{tpu_custom_call.1} parent=1 // pred_region
      _
    $region89: #{tpu_custom_call.1} parent=1 // pred_fallthru
      _
    // Predicated region
    $region90: #{tpu_custom_call.1} parent=1 // pred_check
      _
    $region91: #{tpu_custom_call.1} parent=1 // pred_check_branch
      %259 = sbr.rel (0) target = $region93
    $region92: #{tpu_custom_call.1} parent=1 // pred_region
      _
    $region93: #{tpu_custom_call.1} parent=1 // pred_fallthru
      _
    // Predicated region
    $region94: #{tpu_custom_call.1} parent=1 // pred_check
      _
    $region95: #{tpu_custom_call.1} parent=1 // pred_check_branch
      %261 = sbr.rel (0) target = $region97
    $region96: #{tpu_custom_call.1} parent=1 // pred_region
      _
    $region97: #{tpu_custom_call.1} parent=1 // pred_fallthru
      _
    // Predicated region
    $region98: #{tpu_custom_call.1} parent=1 // pred_check
      _
    $region99: #{tpu_custom_call.1} parent=1 // pred_check_branch
      %263 = sbr.rel (0) target = $region101
    $region100: #{tpu_custom_call.1} parent=1 // pred_region
      %s265 = ssub.s32 8192, 8192
      %266 = vsyncadd [#allocation27], %s265
      %s267 = sshll.u32 [#allocation26], 4
      %s268 = int_to_ptr.vmem [resolvable:$true] %s267
      %273 = dma.hbm_to_vmem [thread:$0]  %s49, 8192, %s268, [#allocation27], 64, 64, 4
    $region101: #{tpu_custom_call.1} parent=1 // pred_fallthru
      _
    // Predicated region
    $region102: #{tpu_custom_call.1} parent=1 // pred_check
      _
    $region103: #{tpu_custom_call.1} parent=1 // pred_check_branch
      %275 = sbr.rel (0) target = $region105
    $region104: #{tpu_custom_call.1} parent=1 // pred_region
      _
    $region105: #{tpu_custom_call.1} parent=1 // pred_fallthru
      _
    // Predicated region
    $region106: #{tpu_custom_call.1} parent=1 // pred_check
      _
    $region107: #{tpu_custom_call.1} parent=1 // pred_check_branch
      %277 = sbr.rel (0) target = $region109
    $region108: #{tpu_custom_call.1} parent=1 // pred_region
      _
    $region109: #{tpu_custom_call.1} parent=1 // pred_fallthru
      _
    // Predicated region
    $region110: #{tpu_custom_call.1} parent=1 // pred_check
      _
    $region111: #{tpu_custom_call.1} parent=1 // pred_check_branch
      %279 = sbr.rel (0) target = $region113
    $region112: #{tpu_custom_call.1} parent=1 // pred_region
      %s281 = ssub.s32 1024, 1024
      %282 = vsyncadd [#allocation27], %s281
      %s283 = sshll.u32 [#allocation28], 4
      %s284 = int_to_ptr.vmem [resolvable:$true] %s283
      %289 = dma.hbm_to_vmem [thread:$0]  %s55, 1024, %s284, [#allocation27], 64, 64, 4
    $region113: #{tpu_custom_call.1} parent=1 // pred_fallthru
      _
    // Predicated region
    $region114: #{tpu_custom_call.1} parent=1 // pred_check
      _
    $region115: #{tpu_custom_call.1} parent=1 // pred_check_branch
      %291 = sbr.rel (0) target = $region117
    $region116: #{tpu_custom_call.1} parent=1 // pred_region
      _
    $region117: #{tpu_custom_call.1} parent=1 // pred_fallthru
      _
    // Predicated region
    $region118: #{tpu_custom_call.1} parent=1 // pred_check
      _
    $region119: #{tpu_custom_call.1} parent=1 // pred_check_branch
      %293 = sbr.rel (0) target = $region121
    $region120: #{tpu_custom_call.1} parent=1 // pred_region
      %294 = dma.done [#allocation3], 256
    $region121: #{tpu_custom_call.1} parent=1 // pred_fallthru
      _
    // Predicated region
    $region122: #{tpu_custom_call.1} parent=1 // pred_check
      _
    $region123: #{tpu_custom_call.1} parent=1 // pred_check_branch
      %296 = sbr.rel (0) target = $region125
    $region124: #{tpu_custom_call.1} parent=1 // pred_region
      %297 = dma.done [#allocation6], 256
    $region125: #{tpu_custom_call.1} parent=1 // pred_fallthru
      _
    // Predicated region
    $region126: #{tpu_custom_call.1} parent=1 // pred_check
      _
    $region127: #{tpu_custom_call.1} parent=1 // pred_check_branch
      %299 = sbr.rel (0) target = $region129
    $region128: #{tpu_custom_call.1} parent=1 // pred_region
      %300 = dma.done [#allocation6], 32
    $region129: #{tpu_custom_call.1} parent=1 // pred_fallthru
      _
    // Predicated region
    $region130: #{tpu_custom_call.1} parent=1 // pred_check
      _
    $region131: #{tpu_custom_call.1} parent=1 // pred_check_branch
      %302 = sbr.rel (0) target = $region133
    $region132: #{tpu_custom_call.1} parent=1 // pred_region
      %303 = dma.done [#allocation9], 256
    $region133: #{tpu_custom_call.1} parent=1 // pred_fallthru
      _
    // Predicated region
    $region134: #{tpu_custom_call.1} parent=1 // pred_check
      _
    $region135: #{tpu_custom_call.1} parent=1 // pred_check_branch
      %305 = sbr.rel (0) target = $region137
    $region136: #{tpu_custom_call.1} parent=1 // pred_region
      %306 = dma.done [#allocation9], 256
    $region137: #{tpu_custom_call.1} parent=1 // pred_fallthru
      _
    // Predicated region
    $region138: #{tpu_custom_call.1} parent=1 // pred_check
      _
    $region139: #{tpu_custom_call.1} parent=1 // pred_check_branch
      %308 = sbr.rel (0) target = $region141
    $region140: #{tpu_custom_call.1} parent=1 // pred_region
      %309 = dma.done [#allocation12], 96
    $region141: #{tpu_custom_call.1} parent=1 // pred_fallthru
      _
    // Predicated region
    $region142: #{tpu_custom_call.1} parent=1 // pred_check
      _
    $region143: #{tpu_custom_call.1} parent=1 // pred_check_branch
      %311 = sbr.rel (0) target = $region145
    $region144: #{tpu_custom_call.1} parent=1 // pred_region
      %312 = dma.done [#allocation12], 2048
    $region145: #{tpu_custom_call.1} parent=1 // pred_fallthru
      _
    // Predicated region
    $region146: #{tpu_custom_call.1} parent=1 // pred_check
      _
    $region147: #{tpu_custom_call.1} parent=1 // pred_check_branch
      %314 = sbr.rel (0) target = $region149
    $region148: #{tpu_custom_call.1} parent=1 // pred_region
      %315 = dma.done [#allocation15], 2048
    $region149: #{tpu_custom_call.1} parent=1 // pred_fallthru
      _
    // Predicated region
    $region150: #{tpu_custom_call.1} parent=1 // pred_check
      _
    $region151: #{tpu_custom_call.1} parent=1 // pred_check_branch
      %317 = sbr.rel (0) target = $region153
    $region152: #{tpu_custom_call.1} parent=1 // pred_region
      %318 = dma.done [#allocation15], 32
    $region153: #{tpu_custom_call.1} parent=1 // pred_fallthru
      _
    // Predicated region
    $region154: #{tpu_custom_call.1} parent=1 // pred_check
      _
    $region155: #{tpu_custom_call.1} parent=1 // pred_check_branch
      %320 = sbr.rel (0) target = $region157
    $region156: #{tpu_custom_call.1} parent=1 // pred_region
      %321 = dma.done [#allocation18], 4096
    $region157: #{tpu_custom_call.1} parent=1 // pred_fallthru
      _
    // Predicated region
    $region158: #{tpu_custom_call.1} parent=1 // pred_check
      _
    $region159: #{tpu_custom_call.1} parent=1 // pred_check_branch
      %323 = sbr.rel (0) target = $region161
    $region160: #{tpu_custom_call.1} parent=1 // pred_region
      %324 = dma.done [#allocation18], 64
    $region161: #{tpu_custom_call.1} parent=1 // pred_fallthru
      _
    // Predicated region
    $region162: #{tpu_custom_call.1} parent=1 // pred_check
      _
    $region163: #{tpu_custom_call.1} parent=1 // pred_check_branch
      %326 = sbr.rel (0) target = $region165
    $region164: #{tpu_custom_call.1} parent=1 // pred_region
      %327 = dma.done [#allocation21], 2048
    $region165: #{tpu_custom_call.1} parent=1 // pred_fallthru
      _
    // Predicated region
    $region166: #{tpu_custom_call.1} parent=1 // pred_check
      _
    $region167: #{tpu_custom_call.1} parent=1 // pred_check_branch
      %329 = sbr.rel (0) target = $region169
    $region168: #{tpu_custom_call.1} parent=1 // pred_region
      %330 = dma.done [#allocation21], 16
    $region169: #{tpu_custom_call.1} parent=1 // pred_fallthru
      _
    // Predicated region
    $region170: #{tpu_custom_call.1} parent=1 // pred_check
      _
    $region171: #{tpu_custom_call.1} parent=1 // pred_check_branch
      %332 = sbr.rel (0) target = $region173
    $region172: #{tpu_custom_call.1} parent=1 // pred_region
      %333 = dma.done [#allocation24], 8192
    $region173: #{tpu_custom_call.1} parent=1 // pred_fallthru
      _
    // Predicated region
    $region174: #{tpu_custom_call.1} parent=1 // pred_check
      _
    $region175: #{tpu_custom_call.1} parent=1 // pred_check_branch
      %335 = sbr.rel (0) target = $region177
    $region176: #{tpu_custom_call.1} parent=1 // pred_region
      %336 = dma.done [#allocation24], 8192
    $region177: #{tpu_custom_call.1} parent=1 // pred_fallthru
      _
    // Predicated region
    $region178: #{tpu_custom_call.1} parent=1 // pred_check
      _
    $region179: #{tpu_custom_call.1} parent=1 // pred_check_branch
      %338 = sbr.rel (0) target = $region181
    $region180: #{tpu_custom_call.1} parent=1 // pred_region
      %339 = dma.done [#allocation27], 8192
    $region181: #{tpu_custom_call.1} parent=1 // pred_fallthru
      _
    // Predicated region
    $region182: #{tpu_custom_call.1} parent=1 // pred_check
      _
    $region183: #{tpu_custom_call.1} parent=1 // pred_check_branch
      %341 = sbr.rel (0) target = $region185
    $region184: #{tpu_custom_call.1} parent=1 // pred_region
      %342 = dma.done [#allocation27], 1024
    $region185: #{tpu_custom_call.1} parent=1 // pred_fallthru
      _
    %v344 = vld [vmem:[#allocation2] sm:$0xff]
    %v345 = vld [vmem:[#allocation2 + $0x8] sm:$0xff]
    %v346 = vld [vmem:[#allocation5] sm:$0xff]
    %v347 = vld [vmem:[#allocation5 + $0x8] sm:$0xff]
    %v348 = vld [vmem:[%s5] sm:$0xff]
    %v349 = vld [vmem:[%s5 + $0x8] sm:$0xff]
    %v350 = vld [vmem:[%s5 + $0x10] sm:$0xff]
    %v351 = vld [vmem:[%s5 + $0x18] sm:$0xff]
    %v352 = vld [vmem:[%s5 + $0x20] sm:$0xff]
    %v353 = vld [vmem:[%s5 + $0x28] sm:$0xff]
    %v354 = vld [vmem:[%s5 + $0x30] sm:$0xff]
    %v355 = vld [vmem:[%s5 + $0x38] sm:$0xff]
    %v356 = vld [vmem:[%s5 + $0x40] sm:$0xff]
    %v357 = vld [vmem:[%s5 + $0x48] sm:$0xff]
    %v358 = vld [vmem:[%s5 + $0x50] sm:$0xff]
    %v359 = vld [vmem:[%s5 + $0x58] sm:$0xff]
    %v360 = vld [vmem:[%s5 + $0x60] sm:$0xff]
    %v361 = vld [vmem:[%s5 + $0x68] sm:$0xff]
    %v362 = vld [vmem:[%s5 + $0x70] sm:$0xff]
    %v363 = vld [vmem:[%s5 + $0x78] sm:$0xff]
    %v364 = vld [vmem:[%s7] sm:$0x3]
    %v365 = vmul.f32 %v344, %v344
    %v366 = vmul.f32 %v345, %v345
    %367 = vmatprep.subr.mxu0 0.0
    %368 = vmatpush1.msra.mxu0 %v348
    %369 = vmatprep.subr.mxu0 0.0
    %370 = vmatpush1.msra.mxu0 %v349
    %371 = vmatprep.subr.mxu0 0.0
    %372 = vmatpush1.msra.mxu0 %v350
    %373 = vmatprep.subr.mxu0 0.0
    %374 = vmatpush1.msra.mxu0 %v351
    %375 = vmatprep.subr.mxu0 0.0
    %376 = vmatpush1.msra.mxu0 %v352
    %377 = vmatprep.subr.mxu0 0.0
    %378 = vmatpush1.msra.mxu0 %v353
    %379 = vmatprep.subr.mxu0 0.0
    %380 = vmatpush1.msra.mxu0 %v354
    %381 = vmatprep.subr.mxu0 0.0
    %382 = vmatpush1.msra.mxu0 %v355
    %383 = vmatprep.subr.mxu0 0.0
    %384 = vmatpush1.msra.mxu0 %v356
    %385 = vmatprep.subr.mxu0 0.0
    %386 = vmatpush1.msra.mxu0 %v357
    %387 = vmatprep.subr.mxu0 0.0
    %388 = vmatpush1.msra.mxu0 %v358
    %389 = vmatprep.subr.mxu0 0.0
    %390 = vmatpush1.msra.mxu0 %v359
    %391 = vmatprep.subr.mxu0 0.0
    %392 = vmatpush1.msra.mxu0 %v360
    %393 = vmatprep.subr.mxu0 0.0
    %394 = vmatpush1.msra.mxu0 %v361
    %395 = vmatprep.subr.mxu0 0.0
    %396 = vmatpush1.msra.mxu0 %v362
    %397 = vmatprep.subr.mxu0 0.0
    %398 = vmatpush1.msra.mxu0 %v363
    %399 = vmatprep.subr.mxu0 0.0
    %400 = vmatpush1.msra.mxu0 0.0
    %401 = vmatprep.subr.mxu0 0.0
    %402 = vmatpush1.msra.mxu0 0.0
    %403 = vmatprep.subr.mxu0 0.0
    %404 = vmatpush1.msra.mxu0 0.0
    %405 = vmatprep.subr.mxu0 0.0
    %406 = vmatpush1.msra.mxu0 0.0
    %407 = vmatprep.subr.mxu0 0.0
    %408 = vmatpush1.msra.mxu0 0.0
    %409 = vmatprep.subr.mxu0 0.0
    %410 = vmatpush1.msra.mxu0 0.0
    %411 = vmatprep.subr.mxu0 0.0
    %412 = vmatpush1.msra.mxu0 0.0
    %413 = vmatprep.subr.mxu0 0.0
    %414 = vmatpush1.msra.mxu0 0.0
    %415 = vmatprep.subr.mxu0 0.0
    %416 = vmatpush1.msra.mxu0 0.0
    %417 = vmatprep.subr.mxu0 0.0
    %418 = vmatpush1.msra.mxu0 0.0
    %419 = vmatprep.subr.mxu0 0.0
    %420 = vmatpush1.msra.mxu0 0.0
    %421 = vmatprep.subr.mxu0 0.0
    %422 = vmatpush1.msra.mxu0 0.0
    %423 = vmatprep.subr.mxu0 0.0
    %424 = vmatpush1.msra.mxu0 0.0
    %425 = vmatprep.subr.mxu0 0.0
    %426 = vmatpush1.msra.mxu0 0.0
    %427 = vmatprep.subr.mxu0 0.0
    %428 = vmatpush1.msra.mxu0 0.0
    %429 = vmatprep.subr.mxu0 0.0
    %430 = vmatpush1.msra.mxu0 0.0
    %431 = vmatprep.mubr.f32.mxu0 0.0
    %432 = vmatmul.mubr.f32.gmra.mrb[0].mxu0 %v365
    %v433 = vpop.f32.mrb[0].mxu0
    %v434 = vadd.f32 0.0, %v433
    %v435 = vpop.f32.mrb[0].mxu0
    %436 = vmatprep.mubr.f32.mxu0 0.0
    %437 = vmatmul.mubr.f32.gmra.mrb[0].mxu0 %v366
    %v438 = vpop.f32.mrb[0].mxu0
    %v439 = vadd.f32 0.0, %v438
    %v440 = vpop.f32.mrb[0].mxu0
    %441 = vdwg.mxu0
    %v442 = vand.u32 2147483647, %v434
    %v443 = vand.u32 2147483647, %v439
    %vm444 = vcmask 64512
    %v445 = vsel %vm444, %v442, 0.0
    %446 = vadd.xlane.f32.xlu0 %v445
    %v447 = vpop.xlane.xlu0 %446
    %v448 = vsel %vm444, %v443, 0.0
    %449 = vadd.xlane.f32.xlu0 %v448
    %v450 = vpop.xlane.xlu0 %449
    %v451 = vmul.f32 %v447, 0.25
    %v452 = vmul.f32 %v450, 0.25
    %v453 = vadd.f32 %v451, 0.01
    %v454 = vadd.f32 %v452, 0.01
    %v455 = vrsqrt.pop %v453
    %v456 = vrsqrt.pop %v454
    %v457 = vlaneseq
    %v458 = vshrl.u32 %v457, 7
    %v459 = vsub.s32 1, %v458
    %v460 = vrot.slane %v364, %v459
    %v461 = vmul.f32 %v344, %v460
    %v462 = vmul.f32 %v345, %v460
    %463 = vadd.xlane.f32.xlu0 %v461
    %v464 = vpop.xlane.xlu0 %463
    %465 = vadd.xlane.f32.xlu0 %v462
    %v466 = vpop.xlane.xlu0 %465
    %v467 = vmul.f32 %v464, 0.125
    %v468 = vmul.f32 %v466, 0.125
    %v469 = vsub.f32 %v344, %v467
    %v470 = vsub.f32 %v345, %v468
    %v471 = vmul.f32 %v469, %v460
    %v472 = vmul.f32 %v470, %v460
    %v473 = vmul.f32 %v471, %v471
    %v474 = vmul.f32 %v472, %v472
    %475 = vadd.xlane.f32.xlu0 %v473
    %v476 = vpop.xlane.xlu0 %475
    %477 = vadd.xlane.f32.xlu0 %v474
    %v478 = vpop.xlane.xlu0 %477
    %v479 = vmul.f32 %v476, 0.125
    %v480 = vmul.f32 %v478, 0.125
    %v481 = vadd.f32 %v479, 1e-05
    %v482 = vadd.f32 %v480, 1e-05
    %v483 = vrsqrt.pop %v481
    %v484 = vrsqrt.pop %v482
    %v485 = vlaneseq
    %v486 = vshrl.u32 %v485, 7
    %v487 = vsub.s32 0, %v486
    %v488 = vrot.slane %v364, %v487
    %v489 = vmul.f32 %v455, %v488
    %v490 = vmul.f32 %v456, %v488
    %v491 = vmul.f32 %v344, %v489
    %v492 = vmul.f32 %v345, %v490
    %v493 = vmul.f32 %v471, %v483
    %v494 = vmul.f32 %v472, %v484
    %v495 = vadd.f32 %v491, %v493
    %v496 = vadd.f32 %v492, %v494
    %v497 = vpack.c.bf16 %v496, %v495
    %v498 = vld [vmem:[%s17] sm:$0xff]
    %v499 = vld [vmem:[%s17 + $0x8] sm:$0xff]
    %v500 = vld [vmem:[%s17 + $0x10] sm:$0xff]
    %v501 = vld [vmem:[%s17 + $0x18] sm:$0xff]
    %v502 = vld [vmem:[%s17 + $0x20] sm:$0xff]
    %v503 = vld [vmem:[%s17 + $0x28] sm:$0xff]
    %v504 = vld [vmem:[%s17 + $0x30] sm:$0xff]
    %v505 = vld [vmem:[%s17 + $0x38] sm:$0xff]
    %v506 = vld [vmem:[%s17 + $0x40] sm:$0xff]
    %v507 = vld [vmem:[%s17 + $0x48] sm:$0xff]
    %v508 = vld [vmem:[%s17 + $0x50] sm:$0xff]
    %v509 = vld [vmem:[%s17 + $0x58] sm:$0xff]
    %v510 = vld [vmem:[%s17 + $0x60] sm:$0xff]
    %v511 = vld [vmem:[%s17 + $0x68] sm:$0xff]
    %v512 = vld [vmem:[%s17 + $0x70] sm:$0xff]
    %v513 = vld [vmem:[%s17 + $0x78] sm:$0xff]
    %v514 = vld [vmem:[%s17 + $0x80] sm:$0xff]
    %v515 = vld [vmem:[%s17 + $0x88] sm:$0xff]
    %v516 = vld [vmem:[%s17 + $0x90] sm:$0xff]
    %v517 = vld [vmem:[%s17 + $0x98] sm:$0xff]
    %v518 = vld [vmem:[%s17 + $0xa0] sm:$0xff]
    %v519 = vld [vmem:[%s17 + $0xa8] sm:$0xff]
    %v520 = vld [vmem:[%s17 + $0xb0] sm:$0xff]
    %v521 = vld [vmem:[%s17 + $0xb8] sm:$0xff]
    %v522 = vld [vmem:[%s17 + $0xc0] sm:$0xff]
    %v523 = vld [vmem:[%s17 + $0xc8] sm:$0xff]
    %v524 = vld [vmem:[%s17 + $0xd0] sm:$0xff]
    %v525 = vld [vmem:[%s17 + $0xd8] sm:$0xff]
    %v526 = vld [vmem:[%s17 + $0xe0] sm:$0xff]
    %v527 = vld [vmem:[%s17 + $0xe8] sm:$0xff]
    %v528 = vld [vmem:[%s17 + $0xf0] sm:$0xff]
    %v529 = vld [vmem:[%s17 + $0xf8] sm:$0xff]
    %v530 = vld [vmem:[%s17 + $0x100] sm:$0xff]
    %v531 = vld [vmem:[%s17 + $0x108] sm:$0xff]
    %v532 = vld [vmem:[%s17 + $0x110] sm:$0xff]
    %v533 = vld [vmem:[%s17 + $0x118] sm:$0xff]
    %v534 = vld [vmem:[%s17 + $0x120] sm:$0xff]
    %v535 = vld [vmem:[%s17 + $0x128] sm:$0xff]
    %v536 = vld [vmem:[%s17 + $0x130] sm:$0xff]
    %v537 = vld [vmem:[%s17 + $0x138] sm:$0xff]
    %v538 = vld [vmem:[%s17 + $0x140] sm:$0xff]
    %v539 = vld [vmem:[%s17 + $0x148] sm:$0xff]
    %v540 = vld [vmem:[%s17 + $0x150] sm:$0xff]
    %v541 = vld [vmem:[%s17 + $0x158] sm:$0xff]
    %v542 = vld [vmem:[%s17 + $0x160] sm:$0xff]
    %v543 = vld [vmem:[%s17 + $0x168] sm:$0xff]
    %v544 = vld [vmem:[%s17 + $0x170] sm:$0xff]
    %v545 = vld [vmem:[%s17 + $0x178] sm:$0xff]
    %v546 = vld [vmem:[#allocation11] sm:$0x3f]
    %v548 = vlaneseq
    %v549 = vshrl.u32 %v548, 7
    %v550 = vsub.s32 0, %v549
    %v551 = vrot.slane %v546, %v550
    %v552 = vlaneseq
    %v553 = vshrl.u32 %v552, 7
    %v554 = vsub.s32 1, %v553
    %v555 = vrot.slane %v546, %v554
    %v556 = vlaneseq
    %v557 = vshrl.u32 %v556, 7
    %v558 = vsub.s32 2, %v557
    %v559 = vrot.slane %v546, %v558
    %v560 = vlaneseq
    %v561 = vshrl.u32 %v560, 7
    %v562 = vsub.s32 3, %v561
    %v563 = vrot.slane %v546, %v562
    %v564 = vlaneseq
    %v565 = vshrl.u32 %v564, 7
    %v566 = vsub.s32 4, %v565
    %v567 = vrot.slane %v546, %v566
    %v568 = vlaneseq
    %v569 = vshrl.u32 %v568, 7
    %v570 = vsub.s32 5, %v569
    %v571 = vrot.slane %v546, %v570
    %v626 = vunpack.c.l.b16 %v498
    %v627 = vunpack.c.h.b16 %v498
    %v628 = vunpack.c.l.b16 %v499
    %v629 = vunpack.c.h.b16 %v499
    %v630 = vunpack.c.l.b16 %v500
    %v631 = vunpack.c.h.b16 %v500
    %v632 = vunpack.c.l.b16 %v501
    %v633 = vunpack.c.h.b16 %v501
    %v634 = vunpack.c.l.b16 %v502
    %v635 = vunpack.c.h.b16 %v502
    %v636 = vunpack.c.l.b16 %v503
    %v637 = vunpack.c.h.b16 %v503
    %v638 = vunpack.c.l.b16 %v504
    %v639 = vunpack.c.h.b16 %v504
    %v640 = vunpack.c.l.b16 %v505
    %v641 = vunpack.c.h.b16 %v505
    %v642 = vunpack.c.l.b16 %v506
    %v643 = vunpack.c.h.b16 %v506
    %v644 = vunpack.c.l.b16 %v507
    %v645 = vunpack.c.h.b16 %v507
    %v646 = vunpack.c.l.b16 %v508
    %v647 = vunpack.c.h.b16 %v508
    %v648 = vunpack.c.l.b16 %v509
    %v649 = vunpack.c.h.b16 %v509
    %v650 = vunpack.c.l.b16 %v510
    %v651 = vunpack.c.h.b16 %v510
    %v652 = vunpack.c.l.b16 %v511
    %v653 = vunpack.c.h.b16 %v511
    %v654 = vunpack.c.l.b16 %v512
    %v655 = vunpack.c.h.b16 %v512
    %v656 = vunpack.c.l.b16 %v513
    %v657 = vunpack.c.h.b16 %v513
    %v658 = vunpack.c.l.b16 %v514
    %v659 = vunpack.c.h.b16 %v514
    %v660 = vunpack.c.l.b16 %v515
    %v661 = vunpack.c.h.b16 %v515
    %v662 = vunpack.c.l.b16 %v516
    %v663 = vunpack.c.h.b16 %v516
    %v664 = vunpack.c.l.b16 %v517
    %v665 = vunpack.c.h.b16 %v517
    %v666 = vunpack.c.l.b16 %v518
    %v667 = vunpack.c.h.b16 %v518
    %v668 = vunpack.c.l.b16 %v519
    %v669 = vunpack.c.h.b16 %v519
    %v670 = vunpack.c.l.b16 %v520
    %v671 = vunpack.c.h.b16 %v520
    %v672 = vunpack.c.l.b16 %v521
    %v673 = vunpack.c.h.b16 %v521
    %v674 = vunpack.c.l.b16 %v522
    %v675 = vunpack.c.h.b16 %v522
    %v676 = vunpack.c.l.b16 %v523
    %v677 = vunpack.c.h.b16 %v523
    %v678 = vunpack.c.l.b16 %v524
    %v679 = vunpack.c.h.b16 %v524
    %v680 = vunpack.c.l.b16 %v525
    %v681 = vunpack.c.h.b16 %v525
    %v682 = vunpack.c.l.b16 %v526
    %v683 = vunpack.c.h.b16 %v526
    %v684 = vunpack.c.l.b16 %v527
    %v685 = vunpack.c.h.b16 %v527
    %v686 = vunpack.c.l.b16 %v528
    %v687 = vunpack.c.h.b16 %v528
    %v688 = vunpack.c.l.b16 %v529
    %v689 = vunpack.c.h.b16 %v529
    %v690 = vunpack.c.l.b16 %v530
    %v691 = vunpack.c.h.b16 %v530
    %v692 = vunpack.c.l.b16 %v531
    %v693 = vunpack.c.h.b16 %v531
    %v694 = vunpack.c.l.b16 %v532
    %v695 = vunpack.c.h.b16 %v532
    %v696 = vunpack.c.l.b16 %v533
    %v697 = vunpack.c.h.b16 %v533
    %v698 = vunpack.c.l.b16 %v534
    %v699 = vunpack.c.h.b16 %v534
    %v700 = vunpack.c.l.b16 %v535
    %v701 = vunpack.c.h.b16 %v535
    %v702 = vunpack.c.l.b16 %v536
    %v703 = vunpack.c.h.b16 %v536
    %v704 = vunpack.c.l.b16 %v537
    %v705 = vunpack.c.h.b16 %v537
    %v706 = vunpack.c.l.b16 %v538
    %v707 = vunpack.c.h.b16 %v538
    %v708 = vunpack.c.l.b16 %v539
    %v709 = vunpack.c.h.b16 %v539
    %v710 = vunpack.c.l.b16 %v540
    %v711 = vunpack.c.h.b16 %v540
    %v712 = vunpack.c.l.b16 %v541
    %v713 = vunpack.c.h.b16 %v541
    %v714 = vunpack.c.l.b16 %v542
    %v715 = vunpack.c.h.b16 %v542
    %v716 = vunpack.c.l.b16 %v543
    %v717 = vunpack.c.h.b16 %v543
    %v718 = vunpack.c.l.b16 %v544
    %v719 = vunpack.c.h.b16 %v544
    %v720 = vunpack.c.l.b16 %v545
    %v721 = vunpack.c.h.b16 %v545
    %v722 = vpack.c.b16 %v632, %v626
    %v723 = vpack.c.b16 %v633, %v627
    %v724 = vpack.c.b16 %v634, %v628
    %v725 = vpack.c.b16 %v635, %v629
    %v726 = vpack.c.b16 %v636, %v630
    %v727 = vpack.c.b16 %v637, %v631
    %v728 = vpack.c.b16 %v644, %v638
    %v729 = vpack.c.b16 %v645, %v639
    %v730 = vpack.c.b16 %v646, %v640
    %v731 = vpack.c.b16 %v647, %v641
    %v732 = vpack.c.b16 %v648, %v642
    %v733 = vpack.c.b16 %v649, %v643
    %v734 = vpack.c.b16 %v656, %v650
    %v735 = vpack.c.b16 %v657, %v651
    %v736 = vpack.c.b16 %v658, %v652
    %v737 = vpack.c.b16 %v659, %v653
    %v738 = vpack.c.b16 %v660, %v654
    %v739 = vpack.c.b16 %v661, %v655
    %v740 = vpack.c.b16 %v668, %v662
    %v741 = vpack.c.b16 %v669, %v663
    %v742 = vpack.c.b16 %v670, %v664
    %v743 = vpack.c.b16 %v671, %v665
    %v744 = vpack.c.b16 %v672, %v666
    %v745 = vpack.c.b16 %v673, %v667
    %v746 = vpack.c.b16 %v680, %v674
    %v747 = vpack.c.b16 %v681, %v675
    %v748 = vpack.c.b16 %v682, %v676
    %v749 = vpack.c.b16 %v683, %v677
    %v750 = vpack.c.b16 %v684, %v678
    %v751 = vpack.c.b16 %v685, %v679
    %v752 = vpack.c.b16 %v692, %v686
    %v753 = vpack.c.b16 %v693, %v687
    %v754 = vpack.c.b16 %v694, %v688
    %v755 = vpack.c.b16 %v695, %v689
    %v756 = vpack.c.b16 %v696, %v690
    %v757 = vpack.c.b16 %v697, %v691
    %v758 = vpack.c.b16 %v704, %v698
    %v759 = vpack.c.b16 %v705, %v699
    %v760 = vpack.c.b16 %v706, %v700
    %v761 = vpack.c.b16 %v707, %v701
    %v762 = vpack.c.b16 %v708, %v702
    %v763 = vpack.c.b16 %v709, %v703
    %v764 = vpack.c.b16 %v716, %v710
    %v765 = vpack.c.b16 %v717, %v711
    %v766 = vpack.c.b16 %v718, %v712
    %v767 = vpack.c.b16 %v719, %v713
    %v768 = vpack.c.b16 %v720, %v714
    %v769 = vpack.c.b16 %v721, %v715
    %818 = vmatprep.subr.bf16.mxu0 %v723
    %819 = vmatpush1.bf16.msra.mxu0 %v722
    %820 = vmatprep.subr.bf16.mxu0 %v729
    %821 = vmatpush1.bf16.msra.mxu0 %v728
    %822 = vmatprep.subr.bf16.mxu0 %v735
    %823 = vmatpush1.bf16.msra.mxu0 %v734
    %824 = vmatprep.subr.bf16.mxu0 %v741
    %825 = vmatpush1.bf16.msra.mxu0 %v740
    %826 = vmatprep.subr.bf16.mxu0 %v747
    %827 = vmatpush1.bf16.msra.mxu0 %v746
    %828 = vmatprep.subr.bf16.mxu0 %v753
    %829 = vmatpush1.bf16.msra.mxu0 %v752
    %830 = vmatprep.subr.bf16.mxu0 %v759
    %831 = vmatpush1.bf16.msra.mxu0 %v758
    %832 = vmatprep.subr.bf16.mxu0 %v765
    %833 = vmatpush1.bf16.msra.mxu0 %v764
    %834 = vmatprep.subr.bf16.mxu0 0
    %835 = vmatpush1.bf16.msra.mxu0 0
    %836 = vmatprep.subr.bf16.mxu0 0
    %837 = vmatpush1.bf16.msra.mxu0 0
    %838 = vmatprep.subr.bf16.mxu0 0
    %839 = vmatpush1.bf16.msra.mxu0 0
    %840 = vmatprep.subr.bf16.mxu0 0
    %841 = vmatpush1.bf16.msra.mxu0 0
    %842 = vmatprep.subr.bf16.mxu0 0
    %843 = vmatpush1.bf16.msra.mxu0 0
    %844 = vmatprep.subr.bf16.mxu0 0
    %845 = vmatpush1.bf16.msra.mxu0 0
    %846 = vmatprep.subr.bf16.mxu0 0
    %847 = vmatpush1.bf16.msra.mxu0 0
    %848 = vmatprep.subr.bf16.mxu0 0
    %849 = vmatpush1.bf16.msra.mxu0 0
    %850 = vmatprep.mubr.bf16.mxu0 0
    %851 = vmatmul.mubr.bf16.gmra.mrb[0].mxu0 %v497
    %v852 = vpop.f32.mrb[0].mxu0
    %v853 = vadd.f32 %v551, %v852
    %v854 = vpop.f32.mrb[0].mxu0
    %v855 = vadd.f32 %v555, %v854
    %v856 = vpop.f32.mrb[0].mxu0
    %v857 = vadd.f32 %v551, %v856
    %v858 = vpop.f32.mrb[0].mxu0
    %v859 = vadd.f32 %v555, %v858
    %860 = vdwg.mxu0
    %861 = vmatprep.subr.bf16.mxu0 %v725
    %862 = vmatpush1.bf16.msra.mxu0 %v724
    %863 = vmatprep.subr.bf16.mxu0 %v731
    %864 = vmatpush1.bf16.msra.mxu0 %v730
    %865 = vmatprep.subr.bf16.mxu0 %v737
    %866 = vmatpush1.bf16.msra.mxu0 %v736
    %867 = vmatprep.subr.bf16.mxu0 %v743
    %868 = vmatpush1.bf16.msra.mxu0 %v742
    %869 = vmatprep.subr.bf16.mxu0 %v749
    %870 = vmatpush1.bf16.msra.mxu0 %v748
    %871 = vmatprep.subr.bf16.mxu0 %v755
    %872 = vmatpush1.bf16.msra.mxu0 %v754
    %873 = vmatprep.subr.bf16.mxu0 %v761
    %874 = vmatpush1.bf16.msra.mxu0 %v760
    %875 = vmatprep.subr.bf16.mxu0 %v767
    %876 = vmatpush1.bf16.msra.mxu0 %v766
    %877 = vmatprep.subr.bf16.mxu0 0
    %878 = vmatpush1.bf16.msra.mxu0 0
    %879 = vmatprep.subr.bf16.mxu0 0
    %880 = vmatpush1.bf16.msra.mxu0 0
    %881 = vmatprep.subr.bf16.mxu0 0
    %882 = vmatpush1.bf16.msra.mxu0 0
    %883 = vmatprep.subr.bf16.mxu0 0
    %884 = vmatpush1.bf16.msra.mxu0 0
    %885 = vmatprep.subr.bf16.mxu0 0
    %886 = vmatpush1.bf16.msra.mxu0 0
    %887 = vmatprep.subr.bf16.mxu0 0
    %888 = vmatpush1.bf16.msra.mxu0 0
    %889 = vmatprep.subr.bf16.mxu0 0
    %890 = vmatpush1.bf16.msra.mxu0 0
    %891 = vmatprep.subr.bf16.mxu0 0
    %892 = vmatpush1.bf16.msra.mxu0 0
    %893 = vmatprep.mubr.bf16.mxu0 0
    %894 = vmatmul.mubr.bf16.gmra.mrb[0].mxu0 %v497
    %v895 = vpop.f32.mrb[0].mxu0
    %v896 = vadd.f32 %v559, %v895
    %v897 = vpop.f32.mrb[0].mxu0
    %v898 = vadd.f32 %v563, %v897
    %v899 = vpop.f32.mrb[0].mxu0
    %v900 = vadd.f32 %v559, %v899
    %v901 = vpop.f32.mrb[0].mxu0
    %v902 = vadd.f32 %v563, %v901
    %903 = vdwg.mxu0
    %904 = vmatprep.subr.bf16.mxu0 %v727
    %905 = vmatpush1.bf16.msra.mxu0 %v726
    %906 = vmatprep.subr.bf16.mxu0 %v733
    %907 = vmatpush1.bf16.msra.mxu0 %v732
    %908 = vmatprep.subr.bf16.mxu0 %v739
    %909 = vmatpush1.bf16.msra.mxu0 %v738
    %910 = vmatprep.subr.bf16.mxu0 %v745
    %911 = vmatpush1.bf16.msra.mxu0 %v744
    %912 = vmatprep.subr.bf16.mxu0 %v751
    %913 = vmatpush1.bf16.msra.mxu0 %v750
    %914 = vmatprep.subr.bf16.mxu0 %v757
    %915 = vmatpush1.bf16.msra.mxu0 %v756
    %916 = vmatprep.subr.bf16.mxu0 %v763
    %917 = vmatpush1.bf16.msra.mxu0 %v762
    %918 = vmatprep.subr.bf16.mxu0 %v769
    %919 = vmatpush1.bf16.msra.mxu0 %v768
    %920 = vmatprep.subr.bf16.mxu0 0
    %921 = vmatpush1.bf16.msra.mxu0 0
    %922 = vmatprep.subr.bf16.mxu0 0
    %923 = vmatpush1.bf16.msra.mxu0 0
    %924 = vmatprep.subr.bf16.mxu0 0
    %925 = vmatpush1.bf16.msra.mxu0 0
    %926 = vmatprep.subr.bf16.mxu0 0
    %927 = vmatpush1.bf16.msra.mxu0 0
    %928 = vmatprep.subr.bf16.mxu0 0
    %929 = vmatpush1.bf16.msra.mxu0 0
    %930 = vmatprep.subr.bf16.mxu0 0
    %931 = vmatpush1.bf16.msra.mxu0 0
    %932 = vmatprep.subr.bf16.mxu0 0
    %933 = vmatpush1.bf16.msra.mxu0 0
    %934 = vmatprep.subr.bf16.mxu0 0
    %935 = vmatpush1.bf16.msra.mxu0 0
    %936 = vmatprep.mubr.bf16.mxu0 0
    %937 = vmatmul.mubr.bf16.gmra.mrb[0].mxu0 %v497
    %v938 = vpop.f32.mrb[0].mxu0
    %v939 = vadd.f32 %v567, %v938
    %v940 = vpop.f32.mrb[0].mxu0
    %v941 = vadd.f32 %v571, %v940
    %v942 = vpop.f32.mrb[0].mxu0
    %v943 = vadd.f32 %v567, %v942
    %v944 = vpop.f32.mrb[0].mxu0
    %v945 = vadd.f32 %v571, %v944
    %946 = vdwg.mxu0
    %v947 = vpack.c.bf16 %v857, %v853
    %v948 = vpack.c.bf16 %v859, %v855
    %v949 = vpack.c.bf16 %v900, %v896
    %v950 = vpack.c.bf16 %v902, %v898
    %v951 = vpack.c.bf16 %v943, %v939
    %v952 = vpack.c.bf16 %v945, %v941
    %v953 = vld [vmem:[#allocation8] sm:$0xff]
    %v954 = vld [vmem:[#allocation8 + $0x8] sm:$0xff]
    %v955 = vld [vmem:[#allocation13] sm:$0xf]
    %v956 = vld [vmem:[#allocation13 + $0x4] sm:$0xf]
    %v957 = vld [vmem:[#allocation13 + $0x8] sm:$0xf]
    %v958 = vld [vmem:[#allocation13 + $0xc] sm:$0xf]
    %v959 = vld [vmem:[#allocation13 + $0x10] sm:$0xf]
    %v960 = vld [vmem:[#allocation13 + $0x14] sm:$0xf]
    %v961 = vld [vmem:[#allocation13 + $0x18] sm:$0xf]
    %v962 = vld [vmem:[#allocation13 + $0x1c] sm:$0xf]
    %v963 = vld [vmem:[#allocation13 + $0x20] sm:$0xf]
    %v964 = vld [vmem:[#allocation13 + $0x24] sm:$0xf]
    %v965 = vld [vmem:[#allocation13 + $0x28] sm:$0xf]
    %v966 = vld [vmem:[#allocation13 + $0x2c] sm:$0xf]
    %v967 = vld [vmem:[#allocation13 + $0x30] sm:$0xf]
    %v968 = vld [vmem:[#allocation13 + $0x34] sm:$0xf]
    %v969 = vld [vmem:[#allocation13 + $0x38] sm:$0xf]
    %v970 = vld [vmem:[#allocation13 + $0x3c] sm:$0xf]
    %v971 = vld [vmem:[#allocation13 + $0x40] sm:$0xf]
    %v972 = vld [vmem:[#allocation13 + $0x44] sm:$0xf]
    %v973 = vld [vmem:[#allocation13 + $0x48] sm:$0xf]
    %v974 = vld [vmem:[#allocation13 + $0x4c] sm:$0xf]
    %v975 = vld [vmem:[#allocation13 + $0x50] sm:$0xf]
    %v976 = vld [vmem:[#allocation13 + $0x54] sm:$0xf]
    %v977 = vld [vmem:[#allocation13 + $0x58] sm:$0xf]
    %v978 = vld [vmem:[#allocation13 + $0x5c] sm:$0xf]
    %v979 = vld [vmem:[#allocation13 + $0x60] sm:$0xf]
    %v980 = vld [vmem:[#allocation13 + $0x64] sm:$0xf]
    %v981 = vld [vmem:[#allocation13 + $0x68] sm:$0xf]
    %v982 = vld [vmem:[#allocation13 + $0x6c] sm:$0xf]
    %v983 = vld [vmem:[#allocation13 + $0x70] sm:$0xf]
    %v984 = vld [vmem:[#allocation13 + $0x74] sm:$0xf]
    %v985 = vld [vmem:[#allocation13 + $0x78] sm:$0xf]
    %v986 = vld [vmem:[#allocation13 + $0x7c] sm:$0xf]
    %987 = vmatprep.subr.bf16.mxu0 0
    %988 = vmatpush1.bf16.xpose.msra.mxu0 %v949
    %989 = vmatprep.subr.bf16.mxu0 0
    %990 = vmatpush1.bf16.xpose.msra.mxu0 0
    %991 = vmatprep.subr.bf16.mxu0 0
    %992 = vmatpush1.bf16.xpose.msra.mxu0 0
    %993 = vmatprep.subr.bf16.mxu0 0
    %994 = vmatpush1.bf16.xpose.msra.mxu0 0
    %995 = vmatprep.subr.bf16.mxu0 0
    %996 = vmatpush1.bf16.xpose.msra.mxu0 0
    %997 = vmatprep.subr.bf16.mxu0 0
    %998 = vmatpush1.bf16.xpose.msra.mxu0 0
    %999 = vmatprep.subr.bf16.mxu0 0
    %1000 = vmatpush1.bf16.xpose.msra.mxu0 0
    %1001 = vmatprep.subr.bf16.mxu0 0
    %1002 = vmatpush1.bf16.xpose.msra.mxu0 0
    %1003 = vmatprep.subr.bf16.mxu0 0
    %1004 = vmatpush1.bf16.xpose.msra.mxu0 0
    %1005 = vmatprep.subr.bf16.mxu0 0
    %1006 = vmatpush1.bf16.xpose.msra.mxu0 0
    %1007 = vmatprep.subr.bf16.mxu0 0
    %1008 = vmatpush1.bf16.xpose.msra.mxu0 0
    %1009 = vmatprep.subr.bf16.mxu0 0
    %1010 = vmatpush1.bf16.xpose.msra.mxu0 0
    %1011 = vmatprep.subr.bf16.mxu0 0
    %1012 = vmatpush1.bf16.xpose.msra.mxu0 0
    %1013 = vmatprep.subr.bf16.mxu0 0
    %1014 = vmatpush1.bf16.xpose.msra.mxu0 0
    %1015 = vmatprep.subr.bf16.mxu0 0
    %1016 = vmatpush1.bf16.xpose.msra.mxu0 0
    %1017 = vmatprep.subr.bf16.mxu0 0
    %1018 = vmatpush1.bf16.xpose.msra.mxu0 0
    %1019 = vmatprep.mubr.bf16.mxu0 0
    %1020 = vmatmul.mubr.bf16.gmra.mrb[0].mxu0 %v947
    %v1021 = vpop.f32.mrb[0].mxu0
    %v1022 = vadd.f32 %v953, %v1021
    %v1023 = vpop.f32.mrb[0].mxu0
    %v1024 = vpop.f32.mrb[0].mxu0
    %v1025 = vadd.f32 %v954, %v1024
    %v1026 = vpop.f32.mrb[0].mxu0
    %1027 = vdwg.mxu0
    %vm1028 = vcmask 130048
    %v1029 = vsel %vm1028, %v1022, -inf
    %1030 = vmax.xlane.f32.xlu0 %v1029
    %v1031 = vpop.xlane.xlu0 %1030
    %v1032 = vsel %vm1028, %v1025, -inf
    %1033 = vmax.xlane.f32.xlu0 %v1032
    %v1034 = vpop.xlane.xlu0 %1033
    %v1035 = vsub.f32 %v1022, %v1031
    %v1036 = vsub.f32 %v1025, %v1034
    %v1037 = vmul.f32 %v1035, 1.442695
    %v1038 = vpow.pop %v1037
    %v1039 = vmul.f32 %v1036, 1.442695
    %v1040 = vpow.pop %v1039
    %v1041 = vsel %vm1028, %v1038, 0.0
    %1042 = vadd.xlane.f32.xlu0 %v1041
    %v1043 = vpop.xlane.xlu0 %1042
    %v1044 = vsel %vm1028, %v1040, 0.0
    %1045 = vadd.xlane.f32.xlu0 %v1044
    %v1046 = vpop.xlane.xlu0 %1045
    %v1047 = vrcp.pop %v1043
    %v1048 = vmul.f32 %v1038, %v1047
    %v1049 = vrcp.pop %v1046
    %v1050 = vmul.f32 %v1040, %v1049
    %v1051 = vpack.c.bf16 %v1050, %v1048
    %v1053 = vsel %vm1028, %v1051, 0
    %1055 = vmatprep.subr.bf16.mxu0 0
    %1056 = vmatpush1.bf16.msra.mxu0 %v951
    %1057 = vmatprep.subr.bf16.mxu0 0
    %1058 = vmatpush1.bf16.msra.mxu0 0
    %1059 = vmatprep.subr.bf16.mxu0 0
    %1060 = vmatpush1.bf16.msra.mxu0 0
    %1061 = vmatprep.subr.bf16.mxu0 0
    %1062 = vmatpush1.bf16.msra.mxu0 0
    %1063 = vmatprep.subr.bf16.mxu0 0
    %1064 = vmatpush1.bf16.msra.mxu0 0
    %1065 = vmatprep.subr.bf16.mxu0 0
    %1066 = vmatpush1.bf16.msra.mxu0 0
    %1067 = vmatprep.subr.bf16.mxu0 0
    %1068 = vmatpush1.bf16.msra.mxu0 0
    %1069 = vmatprep.subr.bf16.mxu0 0
    %1070 = vmatpush1.bf16.msra.mxu0 0
    %1071 = vmatprep.subr.bf16.mxu0 0
    %1072 = vmatpush1.bf16.msra.mxu0 0
    %1073 = vmatprep.subr.bf16.mxu0 0
    %1074 = vmatpush1.bf16.msra.mxu0 0
    %1075 = vmatprep.subr.bf16.mxu0 0
    %1076 = vmatpush1.bf16.msra.mxu0 0
    %1077 = vmatprep.subr.bf16.mxu0 0
    %1078 = vmatpush1.bf16.msra.mxu0 0
    %1079 = vmatprep.subr.bf16.mxu0 0
    %1080 = vmatpush1.bf16.msra.mxu0 0
    %1081 = vmatprep.subr.bf16.mxu0 0
    %1082 = vmatpush1.bf16.msra.mxu0 0
    %1083 = vmatprep.subr.bf16.mxu0 0
    %1084 = vmatpush1.bf16.msra.mxu0 0
    %1085 = vmatprep.subr.bf16.mxu0 0
    %1086 = vmatpush1.bf16.msra.mxu0 0
    %1087 = vmatprep.mubr.bf16.mxu0 0
    %1088 = vmatmul.mubr.bf16.gmra.mrb[0].mxu0 %v1053
    %v1089 = vpop.f32.mrb[0].mxu0
    %v1090 = vadd.f32 0.0, %v1089
    %v1091 = vpop.f32.mrb[0].mxu0
    %v1092 = vpop.f32.mrb[0].mxu0
    %v1093 = vadd.f32 0.0, %v1092
    %v1094 = vpop.f32.mrb[0].mxu0
    %1095 = vdwg.mxu0
    %v1096 = vpack.c.bf16 %v1093, %v1090
    %1097 = vmatprep.subr.bf16.mxu0 0
    %1098 = vmatpush1.bf16.xpose.msra.mxu0 %v950
    %1099 = vmatprep.subr.bf16.mxu0 0
    %1100 = vmatpush1.bf16.xpose.msra.mxu0 0
    %1101 = vmatprep.subr.bf16.mxu0 0
    %1102 = vmatpush1.bf16.xpose.msra.mxu0 0
    %1103 = vmatprep.subr.bf16.mxu0 0
    %1104 = vmatpush1.bf16.xpose.msra.mxu0 0
    %1105 = vmatprep.subr.bf16.mxu0 0
    %1106 = vmatpush1.bf16.xpose.msra.mxu0 0
    %1107 = vmatprep.subr.bf16.mxu0 0
    %1108 = vmatpush1.bf16.xpose.msra.mxu0 0
    %1109 = vmatprep.subr.bf16.mxu0 0
    %1110 = vmatpush1.bf16.xpose.msra.mxu0 0
    %1111 = vmatprep.subr.bf16.mxu0 0
    %1112 = vmatpush1.bf16.xpose.msra.mxu0 0
    %1113 = vmatprep.subr.bf16.mxu0 0
    %1114 = vmatpush1.bf16.xpose.msra.mxu0 0
    %1115 = vmatprep.subr.bf16.mxu0 0
    %1116 = vmatpush1.bf16.xpose.msra.mxu0 0
    %1117 = vmatprep.subr.bf16.mxu0 0
    %1118 = vmatpush1.bf16.xpose.msra.mxu0 0
    %1119 = vmatprep.subr.bf16.mxu0 0
    %1120 = vmatpush1.bf16.xpose.msra.mxu0 0
    %1121 = vmatprep.subr.bf16.mxu0 0
    %1122 = vmatpush1.bf16.xpose.msra.mxu0 0
    %1123 = vmatprep.subr.bf16.mxu0 0
    %1124 = vmatpush1.bf16.xpose.msra.mxu0 0
    %1125 = vmatprep.subr.bf16.mxu0 0
    %1126 = vmatpush1.bf16.xpose.msra.mxu0 0
    %1127 = vmatprep.subr.bf16.mxu0 0
    %1128 = vmatpush1.bf16.xpose.msra.mxu0 0
    %1129 = vmatprep.mubr.bf16.mxu0 0
    %1130 = vmatmul.mubr.bf16.gmra.mrb[0].mxu0 %v948
    %v1131 = vpop.f32.mrb[0].mxu0
    %v1132 = vadd.f32 %v953, %v1131
    %v1133 = vpop.f32.mrb[0].mxu0
    %v1134 = vpop.f32.mrb[0].mxu0
    %v1135 = vadd.f32 %v954, %v1134
    %v1136 = vpop.f32.mrb[0].mxu0
    %1137 = vdwg.mxu0
    %v1138 = vsel %vm1028, %v1132, -inf
    %1139 = vmax.xlane.f32.xlu0 %v1138
    %v1140 = vpop.xlane.xlu0 %1139
    %v1141 = vsel %vm1028, %v1135, -inf
    %1142 = vmax.xlane.f32.xlu0 %v1141
    %v1143 = vpop.xlane.xlu0 %1142
    %v1144 = vsub.f32 %v1132, %v1140
    %v1145 = vsub.f32 %v1135, %v1143
    %v1146 = vmul.f32 %v1144, 1.442695
    %v1147 = vpow.pop %v1146
    %v1148 = vmul.f32 %v1145, 1.442695
    %v1149 = vpow.pop %v1148
    %v1150 = vsel %vm1028, %v1147, 0.0
    %1151 = vadd.xlane.f32.xlu0 %v1150
    %v1152 = vpop.xlane.xlu0 %1151
    %v1153 = vsel %vm1028, %v1149, 0.0
    %1154 = vadd.xlane.f32.xlu0 %v1153
    %v1155 = vpop.xlane.xlu0 %1154
    %v1156 = vrcp.pop %v1152
    %v1157 = vmul.f32 %v1147, %v1156
    %v1158 = vrcp.pop %v1155
    %v1159 = vmul.f32 %v1149, %v1158
    %v1160 = vpack.c.bf16 %v1159, %v1157
    %v1162 = vsel %vm1028, %v1160, 0
    %1164 = vmatprep.subr.bf16.mxu0 0
    %1165 = vmatpush1.bf16.msra.mxu0 %v952
    %1166 = vmatprep.subr.bf16.mxu0 0
    %1167 = vmatpush1.bf16.msra.mxu0 0
    %1168 = vmatprep.subr.bf16.mxu0 0
    %1169 = vmatpush1.bf16.msra.mxu0 0
    %1170 = vmatprep.subr.bf16.mxu0 0
    %1171 = vmatpush1.bf16.msra.mxu0 0
    %1172 = vmatprep.subr.bf16.mxu0 0
    %1173 = vmatpush1.bf16.msra.mxu0 0
    %1174 = vmatprep.subr.bf16.mxu0 0
    %1175 = vmatpush1.bf16.msra.mxu0 0
    %1176 = vmatprep.subr.bf16.mxu0 0
    %1177 = vmatpush1.bf16.msra.mxu0 0
    %1178 = vmatprep.subr.bf16.mxu0 0
    %1179 = vmatpush1.bf16.msra.mxu0 0
    %1180 = vmatprep.subr.bf16.mxu0 0
    %1181 = vmatpush1.bf16.msra.mxu0 0
    %1182 = vmatprep.subr.bf16.mxu0 0
    %1183 = vmatpush1.bf16.msra.mxu0 0
    %1184 = vmatprep.subr.bf16.mxu0 0
    %1185 = vmatpush1.bf16.msra.mxu0 0
    %1186 = vmatprep.subr.bf16.mxu0 0
    %1187 = vmatpush1.bf16.msra.mxu0 0
    %1188 = vmatprep.subr.bf16.mxu0 0
    %1189 = vmatpush1.bf16.msra.mxu0 0
    %1190 = vmatprep.subr.bf16.mxu0 0
    %1191 = vmatpush1.bf16.msra.mxu0 0
    %1192 = vmatprep.subr.bf16.mxu0 0
    %1193 = vmatpush1.bf16.msra.mxu0 0
    %1194 = vmatprep.subr.bf16.mxu0 0
    %1195 = vmatpush1.bf16.msra.mxu0 0
    %1196 = vmatprep.mubr.bf16.mxu0 0
    %1197 = vmatmul.mubr.bf16.gmra.mrb[0].mxu0 %v1162
    %v1198 = vpop.f32.mrb[0].mxu0
    %v1199 = vadd.f32 0.0, %v1198
    %v1200 = vpop.f32.mrb[0].mxu0
    %v1201 = vpop.f32.mrb[0].mxu0
    %v1202 = vadd.f32 0.0, %v1201
    %v1203 = vpop.f32.mrb[0].mxu0
    %1204 = vdwg.mxu0
    %v1205 = vpack.c.bf16 %v1202, %v1199
    %v1222 = vunpack.c.l.b16 %v971
    %v1223 = vunpack.c.l.b16 %v972
    %v1224 = vunpack.c.l.b16 %v973
    %v1225 = vunpack.c.l.b16 %v974
    %v1226 = vunpack.c.l.b16 %v975
    %v1227 = vunpack.c.l.b16 %v976
    %v1228 = vunpack.c.l.b16 %v977
    %v1229 = vunpack.c.l.b16 %v978
    %v1230 = vunpack.c.l.b16 %v979
    %v1231 = vunpack.c.l.b16 %v980
    %v1232 = vunpack.c.l.b16 %v981
    %v1233 = vunpack.c.l.b16 %v982
    %v1234 = vunpack.c.l.b16 %v983
    %v1235 = vunpack.c.l.b16 %v984
    %v1236 = vunpack.c.l.b16 %v985
    %v1237 = vunpack.c.l.b16 %v986
    %v1238 = vpack.c.b16 %v1223, %v1222
    %v1239 = vpack.c.b16 %v1225, %v1224
    %v1240 = vpack.c.b16 %v1227, %v1226
    %v1241 = vpack.c.b16 %v1229, %v1228
    %v1242 = vpack.c.b16 %v1231, %v1230
    %v1243 = vpack.c.b16 %v1233, %v1232
    %v1244 = vpack.c.b16 %v1235, %v1234
    %v1245 = vpack.c.b16 %v1237, %v1236
    %1254 = vmatprep.subr.bf16.mxu0 0
    %1255 = vmatpush1.bf16.msra.mxu0 %v1238
    %1256 = vmatprep.subr.bf16.mxu0 0
    %1257 = vmatpush1.bf16.msra.mxu0 %v1239
    %1258 = vmatprep.subr.bf16.mxu0 0
    %1259 = vmatpush1.bf16.msra.mxu0 %v1240
    %1260 = vmatprep.subr.bf16.mxu0 0
    %1261 = vmatpush1.bf16.msra.mxu0 %v1241
    %1262 = vmatprep.subr.bf16.mxu0 0
    %1263 = vmatpush1.bf16.msra.mxu0 %v1242
    %1264 = vmatprep.subr.bf16.mxu0 0
    %1265 = vmatpush1.bf16.msra.mxu0 %v1243
    %1266 = vmatprep.subr.bf16.mxu0 0
    %1267 = vmatpush1.bf16.msra.mxu0 %v1244
    %1268 = vmatprep.subr.bf16.mxu0 0
    %1269 = vmatpush1.bf16.msra.mxu0 %v1245
    %1270 = vmatprep.subr.bf16.mxu0 0
    %1271 = vmatpush1.bf16.msra.mxu0 0
    %1272 = vmatprep.subr.bf16.mxu0 0
    %1273 = vmatpush1.bf16.msra.mxu0 0
    %1274 = vmatprep.subr.bf16.mxu0 0
    %1275 = vmatpush1.bf16.msra.mxu0 0
    %1276 = vmatprep.subr.bf16.mxu0 0
    %1277 = vmatpush1.bf16.msra.mxu0 0
    %1278 = vmatprep.subr.bf16.mxu0 0
    %1279 = vmatpush1.bf16.msra.mxu0 0
    %1280 = vmatprep.subr.bf16.mxu0 0
    %1281 = vmatpush1.bf16.msra.mxu0 0
    %1282 = vmatprep.subr.bf16.mxu0 0
    %1283 = vmatpush1.bf16.msra.mxu0 0
    %1284 = vmatprep.subr.bf16.mxu0 0
    %1285 = vmatpush1.bf16.msra.mxu0 0
    %1286 = vmatprep.mubr.bf16.mxu0 0
    %1287 = vmatmul.mubr.bf16.gmra.mrb[0].mxu0 %v1205
    %v1288 = vpop.f32.mrb[0].mxu0
    %v1289 = vadd.f32 0.0, %v1288
    %v1290 = vpop.f32.mrb[0].mxu0
    %v1291 = vpop.f32.mrb[0].mxu0
    %v1292 = vadd.f32 0.0, %v1291
    %v1293 = vpop.f32.mrb[0].mxu0
    %1294 = vdwg.mxu0
    %v1311 = vunpack.c.l.b16 %v955
    %v1312 = vunpack.c.l.b16 %v956
    %v1313 = vunpack.c.l.b16 %v957
    %v1314 = vunpack.c.l.b16 %v958
    %v1315 = vunpack.c.l.b16 %v959
    %v1316 = vunpack.c.l.b16 %v960
    %v1317 = vunpack.c.l.b16 %v961
    %v1318 = vunpack.c.l.b16 %v962
    %v1319 = vunpack.c.l.b16 %v963
    %v1320 = vunpack.c.l.b16 %v964
    %v1321 = vunpack.c.l.b16 %v965
    %v1322 = vunpack.c.l.b16 %v966
    %v1323 = vunpack.c.l.b16 %v967
    %v1324 = vunpack.c.l.b16 %v968
    %v1325 = vunpack.c.l.b16 %v969
    %v1326 = vunpack.c.l.b16 %v970
    %v1327 = vpack.c.b16 %v1312, %v1311
    %v1328 = vpack.c.b16 %v1314, %v1313
    %v1329 = vpack.c.b16 %v1316, %v1315
    %v1330 = vpack.c.b16 %v1318, %v1317
    %v1331 = vpack.c.b16 %v1320, %v1319
    %v1332 = vpack.c.b16 %v1322, %v1321
    %v1333 = vpack.c.b16 %v1324, %v1323
    %v1334 = vpack.c.b16 %v1326, %v1325
    %1343 = vmatprep.subr.bf16.mxu0 0
    %1344 = vmatpush1.bf16.msra.mxu0 %v1327
    %1345 = vmatprep.subr.bf16.mxu0 0
    %1346 = vmatpush1.bf16.msra.mxu0 %v1328
    %1347 = vmatprep.subr.bf16.mxu0 0
    %1348 = vmatpush1.bf16.msra.mxu0 %v1329
    %1349 = vmatprep.subr.bf16.mxu0 0
    %1350 = vmatpush1.bf16.msra.mxu0 %v1330
    %1351 = vmatprep.subr.bf16.mxu0 0
    %1352 = vmatpush1.bf16.msra.mxu0 %v1331
    %1353 = vmatprep.subr.bf16.mxu0 0
    %1354 = vmatpush1.bf16.msra.mxu0 %v1332
    %1355 = vmatprep.subr.bf16.mxu0 0
    %1356 = vmatpush1.bf16.msra.mxu0 %v1333
    %1357 = vmatprep.subr.bf16.mxu0 0
    %1358 = vmatpush1.bf16.msra.mxu0 %v1334
    %1359 = vmatprep.subr.bf16.mxu0 0
    %1360 = vmatpush1.bf16.msra.mxu0 0
    %1361 = vmatprep.subr.bf16.mxu0 0
    %1362 = vmatpush1.bf16.msra.mxu0 0
    %1363 = vmatprep.subr.bf16.mxu0 0
    %1364 = vmatpush1.bf16.msra.mxu0 0
    %1365 = vmatprep.subr.bf16.mxu0 0
    %1366 = vmatpush1.bf16.msra.mxu0 0
    %1367 = vmatprep.subr.bf16.mxu0 0
    %1368 = vmatpush1.bf16.msra.mxu0 0
    %1369 = vmatprep.subr.bf16.mxu0 0
    %1370 = vmatpush1.bf16.msra.mxu0 0
    %1371 = vmatprep.subr.bf16.mxu0 0
    %1372 = vmatpush1.bf16.msra.mxu0 0
    %1373 = vmatprep.subr.bf16.mxu0 0
    %1374 = vmatpush1.bf16.msra.mxu0 0
    %1375 = vmatprep.mubr.bf16.mxu0 0
    %1376 = vmatmul.mubr.bf16.gmra.mrb[0].mxu0 %v1096
    %v1377 = vpop.f32.mrb[0].mxu0
    %v1378 = vadd.f32 %v1289, %v1377
    %v1379 = vpop.f32.mrb[0].mxu0
    %v1380 = vpop.f32.mrb[0].mxu0
    %v1381 = vadd.f32 %v1292, %v1380
    %v1382 = vpop.f32.mrb[0].mxu0
    %1383 = vdwg.mxu0
    %v1384 = vadd.f32 %v344, %v1378
    %v1385 = vadd.f32 %v345, %v1381
    %v1386 = vld [vmem:[%s23] sm:$0x1]
    %v1388 = vlaneseq
    %v1389 = vshrl.u32 %v1388, 7
    %v1390 = vsub.s32 0, %v1389
    %v1391 = vrot.slane %v1386, %v1390
    %v1393 = vadd.f32 %v1384, %v1391
    %v1394 = vadd.f32 %v1385, %v1391
    %v1395 = vmul.f32 %v1393, %v1393
    %v1396 = vmul.f32 %v1394, %v1394
    %1397 = vmatprep.subr.mxu0 0.0
    %1398 = vmatpush1.msra.mxu0 %v348
    %1399 = vmatprep.subr.mxu0 0.0
    %1400 = vmatpush1.msra.mxu0 %v349
    %1401 = vmatprep.subr.mxu0 0.0
    %1402 = vmatpush1.msra.mxu0 %v350
    %1403 = vmatprep.subr.mxu0 0.0
    %1404 = vmatpush1.msra.mxu0 %v351
    %1405 = vmatprep.subr.mxu0 0.0
    %1406 = vmatpush1.msra.mxu0 %v352
    %1407 = vmatprep.subr.mxu0 0.0
    %1408 = vmatpush1.msra.mxu0 %v353
    %1409 = vmatprep.subr.mxu0 0.0
    %1410 = vmatpush1.msra.mxu0 %v354
    %1411 = vmatprep.subr.mxu0 0.0
    %1412 = vmatpush1.msra.mxu0 %v355
    %1413 = vmatprep.subr.mxu0 0.0
    %1414 = vmatpush1.msra.mxu0 %v356
    %1415 = vmatprep.subr.mxu0 0.0
    %1416 = vmatpush1.msra.mxu0 %v357
    %1417 = vmatprep.subr.mxu0 0.0
    %1418 = vmatpush1.msra.mxu0 %v358
    %1419 = vmatprep.subr.mxu0 0.0
    %1420 = vmatpush1.msra.mxu0 %v359
    %1421 = vmatprep.subr.mxu0 0.0
    %1422 = vmatpush1.msra.mxu0 %v360
    %1423 = vmatprep.subr.mxu0 0.0
    %1424 = vmatpush1.msra.mxu0 %v361
    %1425 = vmatprep.subr.mxu0 0.0
    %1426 = vmatpush1.msra.mxu0 %v362
    %1427 = vmatprep.subr.mxu0 0.0
    %1428 = vmatpush1.msra.mxu0 %v363
    %1429 = vmatprep.subr.mxu0 0.0
    %1430 = vmatpush1.msra.mxu0 0.0
    %1431 = vmatprep.subr.mxu0 0.0
    %1432 = vmatpush1.msra.mxu0 0.0
    %1433 = vmatprep.subr.mxu0 0.0
    %1434 = vmatpush1.msra.mxu0 0.0
    %1435 = vmatprep.subr.mxu0 0.0
    %1436 = vmatpush1.msra.mxu0 0.0
    %1437 = vmatprep.subr.mxu0 0.0
    %1438 = vmatpush1.msra.mxu0 0.0
    %1439 = vmatprep.subr.mxu0 0.0
    %1440 = vmatpush1.msra.mxu0 0.0
    %1441 = vmatprep.subr.mxu0 0.0
    %1442 = vmatpush1.msra.mxu0 0.0
    %1443 = vmatprep.subr.mxu0 0.0
    %1444 = vmatpush1.msra.mxu0 0.0
    %1445 = vmatprep.subr.mxu0 0.0
    %1446 = vmatpush1.msra.mxu0 0.0
    %1447 = vmatprep.subr.mxu0 0.0
    %1448 = vmatpush1.msra.mxu0 0.0
    %1449 = vmatprep.subr.mxu0 0.0
    %1450 = vmatpush1.msra.mxu0 0.0
    %1451 = vmatprep.subr.mxu0 0.0
    %1452 = vmatpush1.msra.mxu0 0.0
    %1453 = vmatprep.subr.mxu0 0.0
    %1454 = vmatpush1.msra.mxu0 0.0
    %1455 = vmatprep.subr.mxu0 0.0
    %1456 = vmatpush1.msra.mxu0 0.0
    %1457 = vmatprep.subr.mxu0 0.0
    %1458 = vmatpush1.msra.mxu0 0.0
    %1459 = vmatprep.subr.mxu0 0.0
    %1460 = vmatpush1.msra.mxu0 0.0
    %1461 = vmatprep.mubr.f32.mxu0 0.0
    %1462 = vmatmul.mubr.f32.gmra.mrb[0].mxu0 %v1395
    %v1463 = vpop.f32.mrb[0].mxu0
    %v1464 = vadd.f32 0.0, %v1463
    %v1465 = vpop.f32.mrb[0].mxu0
    %1466 = vmatprep.mubr.f32.mxu0 0.0
    %1467 = vmatmul.mubr.f32.gmra.mrb[0].mxu0 %v1396
    %v1468 = vpop.f32.mrb[0].mxu0
    %v1469 = vadd.f32 0.0, %v1468
    %v1470 = vpop.f32.mrb[0].mxu0
    %1471 = vdwg.mxu0
    %v1472 = vand.u32 2147483647, %v1464
    %v1473 = vand.u32 2147483647, %v1469
    %v1474 = vsel %vm444, %v1472, 0.0
    %1475 = vadd.xlane.f32.xlu0 %v1474
    %v1476 = vpop.xlane.xlu0 %1475
    %v1477 = vsel %vm444, %v1473, 0.0
    %1478 = vadd.xlane.f32.xlu0 %v1477
    %v1479 = vpop.xlane.xlu0 %1478
    %v1480 = vmul.f32 %v1476, 0.25
    %v1481 = vmul.f32 %v1479, 0.25
    %v1482 = vadd.f32 %v1480, 0.01
    %v1483 = vadd.f32 %v1481, 0.01
    %v1484 = vrsqrt.pop %v1482
    %v1485 = vrsqrt.pop %v1483
    %v1486 = vmul.f32 %v1393, %v460
    %v1487 = vmul.f32 %v1394, %v460
    %1488 = vadd.xlane.f32.xlu0 %v1486
    %v1489 = vpop.xlane.xlu0 %1488
    %1490 = vadd.xlane.f32.xlu0 %v1487
    %v1491 = vpop.xlane.xlu0 %1490
    %v1492 = vmul.f32 %v1489, 0.125
    %v1493 = vmul.f32 %v1491, 0.125
    %v1494 = vsub.f32 %v1393, %v1492
    %v1495 = vsub.f32 %v1394, %v1493
    %v1496 = vmul.f32 %v1494, %v460
    %v1497 = vmul.f32 %v1495, %v460
    %v1498 = vmul.f32 %v1496, %v1496
    %v1499 = vmul.f32 %v1497, %v1497
    %1500 = vadd.xlane.f32.xlu0 %v1498
    %v1501 = vpop.xlane.xlu0 %1500
    %1502 = vadd.xlane.f32.xlu0 %v1499
    %v1503 = vpop.xlane.xlu0 %1502
    %v1504 = vmul.f32 %v1501, 0.125
    %v1505 = vmul.f32 %v1503, 0.125
    %v1506 = vadd.f32 %v1504, 1e-05
    %v1507 = vadd.f32 %v1505, 1e-05
    %v1508 = vrsqrt.pop %v1506
    %v1509 = vrsqrt.pop %v1507
    %v1510 = vmul.f32 %v1484, %v488
    %v1511 = vmul.f32 %v1485, %v488
    %v1512 = vmul.f32 %v1393, %v1510
    %v1513 = vmul.f32 %v1394, %v1511
    %v1514 = vmul.f32 %v1496, %v1508
    %v1515 = vmul.f32 %v1497, %v1509
    %v1516 = vadd.f32 %v1512, %v1514
    %v1517 = vadd.f32 %v1513, %v1515
    %v1518 = vld [vmem:[%s9] sm:$0xff]
    %v1519 = vld [vmem:[%s9 + $0x8] sm:$0xff]
    %v1520 = vld [vmem:[%s9 + $0x10] sm:$0xff]
    %v1521 = vld [vmem:[%s9 + $0x18] sm:$0xff]
    %v1522 = vld [vmem:[%s9 + $0x20] sm:$0xff]
    %v1523 = vld [vmem:[%s9 + $0x28] sm:$0xff]
    %v1524 = vld [vmem:[%s9 + $0x30] sm:$0xff]
    %v1525 = vld [vmem:[%s9 + $0x38] sm:$0xff]
    %v1526 = vld [vmem:[%s9 + $0x40] sm:$0xff]
    %v1527 = vld [vmem:[%s9 + $0x48] sm:$0xff]
    %v1528 = vld [vmem:[%s9 + $0x50] sm:$0xff]
    %v1529 = vld [vmem:[%s9 + $0x58] sm:$0xff]
    %v1530 = vld [vmem:[%s9 + $0x60] sm:$0xff]
    %v1531 = vld [vmem:[%s9 + $0x68] sm:$0xff]
    %v1532 = vld [vmem:[%s9 + $0x70] sm:$0xff]
    %v1533 = vld [vmem:[%s9 + $0x78] sm:$0xff]
    %v1534 = vld [vmem:[#allocation7] sm:$0x3]
    %v1535 = vmul.f32 %v346, %v346
    %v1536 = vmul.f32 %v347, %v347
    %1537 = vmatprep.subr.mxu0 0.0
    %1538 = vmatpush1.msra.mxu0 %v1518
    %1539 = vmatprep.subr.mxu0 0.0
    %1540 = vmatpush1.msra.mxu0 %v1519
    %1541 = vmatprep.subr.mxu0 0.0
    %1542 = vmatpush1.msra.mxu0 %v1520
    %1543 = vmatprep.subr.mxu0 0.0
    %1544 = vmatpush1.msra.mxu0 %v1521
    %1545 = vmatprep.subr.mxu0 0.0
    %1546 = vmatpush1.msra.mxu0 %v1522
    %1547 = vmatprep.subr.mxu0 0.0
    %1548 = vmatpush1.msra.mxu0 %v1523
    %1549 = vmatprep.subr.mxu0 0.0
    %1550 = vmatpush1.msra.mxu0 %v1524
    %1551 = vmatprep.subr.mxu0 0.0
    %1552 = vmatpush1.msra.mxu0 %v1525
    %1553 = vmatprep.subr.mxu0 0.0
    %1554 = vmatpush1.msra.mxu0 %v1526
    %1555 = vmatprep.subr.mxu0 0.0
    %1556 = vmatpush1.msra.mxu0 %v1527
    %1557 = vmatprep.subr.mxu0 0.0
    %1558 = vmatpush1.msra.mxu0 %v1528
    %1559 = vmatprep.subr.mxu0 0.0
    %1560 = vmatpush1.msra.mxu0 %v1529
    %1561 = vmatprep.subr.mxu0 0.0
    %1562 = vmatpush1.msra.mxu0 %v1530
    %1563 = vmatprep.subr.mxu0 0.0
    %1564 = vmatpush1.msra.mxu0 %v1531
    %1565 = vmatprep.subr.mxu0 0.0
    %1566 = vmatpush1.msra.mxu0 %v1532
    %1567 = vmatprep.subr.mxu0 0.0
    %1568 = vmatpush1.msra.mxu0 %v1533
    %1569 = vmatprep.subr.mxu0 0.0
    %1570 = vmatpush1.msra.mxu0 0.0
    %1571 = vmatprep.subr.mxu0 0.0
    %1572 = vmatpush1.msra.mxu0 0.0
    %1573 = vmatprep.subr.mxu0 0.0
    %1574 = vmatpush1.msra.mxu0 0.0
    %1575 = vmatprep.subr.mxu0 0.0
    %1576 = vmatpush1.msra.mxu0 0.0
    %1577 = vmatprep.subr.mxu0 0.0
    %1578 = vmatpush1.msra.mxu0 0.0
    %1579 = vmatprep.subr.mxu0 0.0
    %1580 = vmatpush1.msra.mxu0 0.0
    %1581 = vmatprep.subr.mxu0 0.0
    %1582 = vmatpush1.msra.mxu0 0.0
    %1583 = vmatprep.subr.mxu0 0.0
    %1584 = vmatpush1.msra.mxu0 0.0
    %1585 = vmatprep.subr.mxu0 0.0
    %1586 = vmatpush1.msra.mxu0 0.0
    %1587 = vmatprep.subr.mxu0 0.0
    %1588 = vmatpush1.msra.mxu0 0.0
    %1589 = vmatprep.subr.mxu0 0.0
    %1590 = vmatpush1.msra.mxu0 0.0
    %1591 = vmatprep.subr.mxu0 0.0
    %1592 = vmatpush1.msra.mxu0 0.0
    %1593 = vmatprep.subr.mxu0 0.0
    %1594 = vmatpush1.msra.mxu0 0.0
    %1595 = vmatprep.subr.mxu0 0.0
    %1596 = vmatpush1.msra.mxu0 0.0
    %1597 = vmatprep.subr.mxu0 0.0
    %1598 = vmatpush1.msra.mxu0 0.0
    %1599 = vmatprep.subr.mxu0 0.0
    %1600 = vmatpush1.msra.mxu0 0.0
    %1601 = vmatprep.mubr.f32.mxu0 0.0
    %1602 = vmatmul.mubr.f32.gmra.mrb[0].mxu0 %v1535
    %v1603 = vpop.f32.mrb[0].mxu0
    %v1604 = vadd.f32 0.0, %v1603
    %v1605 = vpop.f32.mrb[0].mxu0
    %1606 = vmatprep.mubr.f32.mxu0 0.0
    %1607 = vmatmul.mubr.f32.gmra.mrb[0].mxu0 %v1536
    %v1608 = vpop.f32.mrb[0].mxu0
    %v1609 = vadd.f32 0.0, %v1608
    %v1610 = vpop.f32.mrb[0].mxu0
    %1611 = vdwg.mxu0
    %v1612 = vand.u32 2147483647, %v1604
    %v1613 = vand.u32 2147483647, %v1609
    %v1614 = vsel %vm444, %v1612, 0.0
    %1615 = vadd.xlane.f32.xlu0 %v1614
    %v1616 = vpop.xlane.xlu0 %1615
    %v1617 = vsel %vm444, %v1613, 0.0
    %1618 = vadd.xlane.f32.xlu0 %v1617
    %v1619 = vpop.xlane.xlu0 %1618
    %v1620 = vmul.f32 %v1616, 0.25
    %v1621 = vmul.f32 %v1619, 0.25
    %v1622 = vadd.f32 %v1620, 0.01
    %v1623 = vadd.f32 %v1621, 0.01
    %v1624 = vrsqrt.pop %v1622
    %v1625 = vrsqrt.pop %v1623
    %v1626 = vlaneseq
    %v1627 = vshrl.u32 %v1626, 7
    %v1628 = vsub.s32 1, %v1627
    %v1629 = vrot.slane %v1534, %v1628
    %v1630 = vmul.f32 %v346, %v1629
    %v1631 = vmul.f32 %v347, %v1629
    %1632 = vadd.xlane.f32.xlu0 %v1630
    %v1633 = vpop.xlane.xlu0 %1632
    %1634 = vadd.xlane.f32.xlu0 %v1631
    %v1635 = vpop.xlane.xlu0 %1634
    %v1636 = vmul.f32 %v1633, 0.125
    %v1637 = vmul.f32 %v1635, 0.125
    %v1638 = vsub.f32 %v346, %v1636
    %v1639 = vsub.f32 %v347, %v1637
    %v1640 = vmul.f32 %v1638, %v1629
    %v1641 = vmul.f32 %v1639, %v1629
    %v1642 = vmul.f32 %v1640, %v1640
    %v1643 = vmul.f32 %v1641, %v1641
    %1644 = vadd.xlane.f32.xlu0 %v1642
    %v1645 = vpop.xlane.xlu0 %1644
    %1646 = vadd.xlane.f32.xlu0 %v1643
    %v1647 = vpop.xlane.xlu0 %1646
    %v1648 = vmul.f32 %v1645, 0.125
    %v1649 = vmul.f32 %v1647, 0.125
    %v1650 = vadd.f32 %v1648, 1e-05
    %v1651 = vadd.f32 %v1649, 1e-05
    %v1652 = vrsqrt.pop %v1650
    %v1653 = vrsqrt.pop %v1651
    %v1654 = vlaneseq
    %v1655 = vshrl.u32 %v1654, 7
    %v1656 = vsub.s32 0, %v1655
    %v1657 = vrot.slane %v1534, %v1656
    %v1658 = vmul.f32 %v1624, %v1657
    %v1659 = vmul.f32 %v1625, %v1657
    %v1660 = vmul.f32 %v346, %v1658
    %v1661 = vmul.f32 %v347, %v1659
    %v1662 = vmul.f32 %v1640, %v1652
    %v1663 = vmul.f32 %v1641, %v1653
    %v1664 = vadd.f32 %v1660, %v1662
    %v1665 = vadd.f32 %v1661, %v1663
    %v1666 = vpack.c.bf16 %v1517, %v1516
    %v1667 = vld [vmem:[#allocation14] sm:$0xff]
    %v1668 = vld [vmem:[#allocation14 + $0x8] sm:$0xff]
    %v1669 = vld [vmem:[#allocation14 + $0x10] sm:$0xff]
    %v1670 = vld [vmem:[#allocation14 + $0x18] sm:$0xff]
    %v1671 = vld [vmem:[#allocation14 + $0x20] sm:$0xff]
    %v1672 = vld [vmem:[#allocation14 + $0x28] sm:$0xff]
    %v1673 = vld [vmem:[#allocation14 + $0x30] sm:$0xff]
    %v1674 = vld [vmem:[#allocation14 + $0x38] sm:$0xff]
    %v1675 = vld [vmem:[#allocation14 + $0x40] sm:$0xff]
    %v1676 = vld [vmem:[#allocation14 + $0x48] sm:$0xff]
    %v1677 = vld [vmem:[#allocation14 + $0x50] sm:$0xff]
    %v1678 = vld [vmem:[#allocation14 + $0x58] sm:$0xff]
    %v1679 = vld [vmem:[#allocation14 + $0x60] sm:$0xff]
    %v1680 = vld [vmem:[#allocation14 + $0x68] sm:$0xff]
    %v1681 = vld [vmem:[#allocation14 + $0x70] sm:$0xff]
    %v1682 = vld [vmem:[#allocation14 + $0x78] sm:$0xff]
    %v1683 = vld [vmem:[#allocation16] sm:$0x3]
    %v1685 = vlaneseq
    %v1686 = vshrl.u32 %v1685, 7
    %v1687 = vsub.s32 0, %v1686
    %v1688 = vrot.slane %v1683, %v1687
    %v1689 = vlaneseq
    %v1690 = vshrl.u32 %v1689, 7
    %v1691 = vsub.s32 1, %v1690
    %v1692 = vrot.slane %v1683, %v1691
    %v1711 = vunpack.c.l.b16 %v1667
    %v1712 = vunpack.c.h.b16 %v1667
    %v1713 = vunpack.c.l.b16 %v1668
    %v1714 = vunpack.c.h.b16 %v1668
    %v1715 = vunpack.c.l.b16 %v1669
    %v1716 = vunpack.c.h.b16 %v1669
    %v1717 = vunpack.c.l.b16 %v1670
    %v1718 = vunpack.c.h.b16 %v1670
    %v1719 = vunpack.c.l.b16 %v1671
    %v1720 = vunpack.c.h.b16 %v1671
    %v1721 = vunpack.c.l.b16 %v1672
    %v1722 = vunpack.c.h.b16 %v1672
    %v1723 = vunpack.c.l.b16 %v1673
    %v1724 = vunpack.c.h.b16 %v1673
    %v1725 = vunpack.c.l.b16 %v1674
    %v1726 = vunpack.c.h.b16 %v1674
    %v1727 = vunpack.c.l.b16 %v1675
    %v1728 = vunpack.c.h.b16 %v1675
    %v1729 = vunpack.c.l.b16 %v1676
    %v1730 = vunpack.c.h.b16 %v1676
    %v1731 = vunpack.c.l.b16 %v1677
    %v1732 = vunpack.c.h.b16 %v1677
    %v1733 = vunpack.c.l.b16 %v1678
    %v1734 = vunpack.c.h.b16 %v1678
    %v1735 = vunpack.c.l.b16 %v1679
    %v1736 = vunpack.c.h.b16 %v1679
    %v1737 = vunpack.c.l.b16 %v1680
    %v1738 = vunpack.c.h.b16 %v1680
    %v1739 = vunpack.c.l.b16 %v1681
    %v1740 = vunpack.c.h.b16 %v1681
    %v1741 = vunpack.c.l.b16 %v1682
    %v1742 = vunpack.c.h.b16 %v1682
    %v1743 = vpack.c.b16 %v1713, %v1711
    %v1744 = vpack.c.b16 %v1714, %v1712
    %v1745 = vpack.c.b16 %v1717, %v1715
    %v1746 = vpack.c.b16 %v1718, %v1716
    %v1747 = vpack.c.b16 %v1721, %v1719
    %v1748 = vpack.c.b16 %v1722, %v1720
    %v1749 = vpack.c.b16 %v1725, %v1723
    %v1750 = vpack.c.b16 %v1726, %v1724
    %v1751 = vpack.c.b16 %v1729, %v1727
    %v1752 = vpack.c.b16 %v1730, %v1728
    %v1753 = vpack.c.b16 %v1733, %v1731
    %v1754 = vpack.c.b16 %v1734, %v1732
    %v1755 = vpack.c.b16 %v1737, %v1735
    %v1756 = vpack.c.b16 %v1738, %v1736
    %v1757 = vpack.c.b16 %v1741, %v1739
    %v1758 = vpack.c.b16 %v1742, %v1740
    %1775 = vmatprep.subr.bf16.mxu0 %v1744
    %1776 = vmatpush1.bf16.msra.mxu0 %v1743
    %1777 = vmatprep.subr.bf16.mxu0 %v1746
    %1778 = vmatpush1.bf16.msra.mxu0 %v1745
    %1779 = vmatprep.subr.bf16.mxu0 %v1748
    %1780 = vmatpush1.bf16.msra.mxu0 %v1747
    %1781 = vmatprep.subr.bf16.mxu0 %v1750
    %1782 = vmatpush1.bf16.msra.mxu0 %v1749
    %1783 = vmatprep.subr.bf16.mxu0 %v1752
    %1784 = vmatpush1.bf16.msra.mxu0 %v1751
    %1785 = vmatprep.subr.bf16.mxu0 %v1754
    %1786 = vmatpush1.bf16.msra.mxu0 %v1753
    %1787 = vmatprep.subr.bf16.mxu0 %v1756
    %1788 = vmatpush1.bf16.msra.mxu0 %v1755
    %1789 = vmatprep.subr.bf16.mxu0 %v1758
    %1790 = vmatpush1.bf16.msra.mxu0 %v1757
    %1791 = vmatprep.subr.bf16.mxu0 0
    %1792 = vmatpush1.bf16.msra.mxu0 0
    %1793 = vmatprep.subr.bf16.mxu0 0
    %1794 = vmatpush1.bf16.msra.mxu0 0
    %1795 = vmatprep.subr.bf16.mxu0 0
    %1796 = vmatpush1.bf16.msra.mxu0 0
    %1797 = vmatprep.subr.bf16.mxu0 0
    %1798 = vmatpush1.bf16.msra.mxu0 0
    %1799 = vmatprep.subr.bf16.mxu0 0
    %1800 = vmatpush1.bf16.msra.mxu0 0
    %1801 = vmatprep.subr.bf16.mxu0 0
    %1802 = vmatpush1.bf16.msra.mxu0 0
    %1803 = vmatprep.subr.bf16.mxu0 0
    %1804 = vmatpush1.bf16.msra.mxu0 0
    %1805 = vmatprep.subr.bf16.mxu0 0
    %1806 = vmatpush1.bf16.msra.mxu0 0
    %1807 = vmatprep.mubr.bf16.mxu0 0
    %1808 = vmatmul.mubr.bf16.gmra.mrb[0].mxu0 %v1666
    %v1809 = vpop.f32.mrb[0].mxu0
    %v1810 = vadd.f32 %v1688, %v1809
    %v1811 = vpop.f32.mrb[0].mxu0
    %v1812 = vadd.f32 %v1692, %v1811
    %v1813 = vpop.f32.mrb[0].mxu0
    %v1814 = vadd.f32 %v1688, %v1813
    %v1815 = vpop.f32.mrb[0].mxu0
    %v1816 = vadd.f32 %v1692, %v1815
    %1817 = vdwg.mxu0
    %v1818 = vpack.c.bf16 %v1814, %v1810
    %v1819 = vpack.c.bf16 %v1816, %v1812
    %v1820 = vpack.c.bf16 %v1665, %v1664
    %v1821 = vld [vmem:[#allocation17] sm:$0xff]
    %v1822 = vld [vmem:[#allocation17 + $0x8] sm:$0xff]
    %v1823 = vld [vmem:[#allocation17 + $0x10] sm:$0xff]
    %v1824 = vld [vmem:[#allocation17 + $0x18] sm:$0xff]
    %v1825 = vld [vmem:[#allocation17 + $0x20] sm:$0xff]
    %v1826 = vld [vmem:[#allocation17 + $0x28] sm:$0xff]
    %v1827 = vld [vmem:[#allocation17 + $0x30] sm:$0xff]
    %v1828 = vld [vmem:[#allocation17 + $0x38] sm:$0xff]
    %v1829 = vld [vmem:[#allocation17 + $0x40] sm:$0xff]
    %v1830 = vld [vmem:[#allocation17 + $0x48] sm:$0xff]
    %v1831 = vld [vmem:[#allocation17 + $0x50] sm:$0xff]
    %v1832 = vld [vmem:[#allocation17 + $0x58] sm:$0xff]
    %v1833 = vld [vmem:[#allocation17 + $0x60] sm:$0xff]
    %v1834 = vld [vmem:[#allocation17 + $0x68] sm:$0xff]
    %v1835 = vld [vmem:[#allocation17 + $0x70] sm:$0xff]
    %v1836 = vld [vmem:[#allocation17 + $0x78] sm:$0xff]
    %v1837 = vld [vmem:[#allocation17 + $0x80] sm:$0xff]
    %v1838 = vld [vmem:[#allocation17 + $0x88] sm:$0xff]
    %v1839 = vld [vmem:[#allocation17 + $0x90] sm:$0xff]
    %v1840 = vld [vmem:[#allocation17 + $0x98] sm:$0xff]
    %v1841 = vld [vmem:[#allocation17 + $0xa0] sm:$0xff]
    %v1842 = vld [vmem:[#allocation17 + $0xa8] sm:$0xff]
    %v1843 = vld [vmem:[#allocation17 + $0xb0] sm:$0xff]
    %v1844 = vld [vmem:[#allocation17 + $0xb8] sm:$0xff]
    %v1845 = vld [vmem:[#allocation17 + $0xc0] sm:$0xff]
    %v1846 = vld [vmem:[#allocation17 + $0xc8] sm:$0xff]
    %v1847 = vld [vmem:[#allocation17 + $0xd0] sm:$0xff]
    %v1848 = vld [vmem:[#allocation17 + $0xd8] sm:$0xff]
    %v1849 = vld [vmem:[#allocation17 + $0xe0] sm:$0xff]
    %v1850 = vld [vmem:[#allocation17 + $0xe8] sm:$0xff]
    %v1851 = vld [vmem:[#allocation17 + $0xf0] sm:$0xff]
    %v1852 = vld [vmem:[#allocation17 + $0xf8] sm:$0xff]
    %v1853 = vld [vmem:[#allocation19] sm:$0xf]
    %v1855 = vlaneseq
    %v1856 = vshrl.u32 %v1855, 7
    %v1857 = vsub.s32 0, %v1856
    %v1858 = vrot.slane %v1853, %v1857
    %v1859 = vlaneseq
    %v1860 = vshrl.u32 %v1859, 7
    %v1861 = vsub.s32 1, %v1860
    %v1862 = vrot.slane %v1853, %v1861
    %v1863 = vlaneseq
    %v1864 = vshrl.u32 %v1863, 7
    %v1865 = vsub.s32 2, %v1864
    %v1866 = vrot.slane %v1853, %v1865
    %v1867 = vlaneseq
    %v1868 = vshrl.u32 %v1867, 7
    %v1869 = vsub.s32 3, %v1868
    %v1870 = vrot.slane %v1853, %v1869
    %v1907 = vunpack.c.l.b16 %v1821
    %v1908 = vunpack.c.h.b16 %v1821
    %v1909 = vunpack.c.l.b16 %v1822
    %v1910 = vunpack.c.h.b16 %v1822
    %v1911 = vunpack.c.l.b16 %v1823
    %v1912 = vunpack.c.h.b16 %v1823
    %v1913 = vunpack.c.l.b16 %v1824
    %v1914 = vunpack.c.h.b16 %v1824
    %v1915 = vunpack.c.l.b16 %v1825
    %v1916 = vunpack.c.h.b16 %v1825
    %v1917 = vunpack.c.l.b16 %v1826
    %v1918 = vunpack.c.h.b16 %v1826
    %v1919 = vunpack.c.l.b16 %v1827
    %v1920 = vunpack.c.h.b16 %v1827
    %v1921 = vunpack.c.l.b16 %v1828
    %v1922 = vunpack.c.h.b16 %v1828
    %v1923 = vunpack.c.l.b16 %v1829
    %v1924 = vunpack.c.h.b16 %v1829
    %v1925 = vunpack.c.l.b16 %v1830
    %v1926 = vunpack.c.h.b16 %v1830
    %v1927 = vunpack.c.l.b16 %v1831
    %v1928 = vunpack.c.h.b16 %v1831
    %v1929 = vunpack.c.l.b16 %v1832
    %v1930 = vunpack.c.h.b16 %v1832
    %v1931 = vunpack.c.l.b16 %v1833
    %v1932 = vunpack.c.h.b16 %v1833
    %v1933 = vunpack.c.l.b16 %v1834
    %v1934 = vunpack.c.h.b16 %v1834
    %v1935 = vunpack.c.l.b16 %v1835
    %v1936 = vunpack.c.h.b16 %v1835
    %v1937 = vunpack.c.l.b16 %v1836
    %v1938 = vunpack.c.h.b16 %v1836
    %v1939 = vunpack.c.l.b16 %v1837
    %v1940 = vunpack.c.h.b16 %v1837
    %v1941 = vunpack.c.l.b16 %v1838
    %v1942 = vunpack.c.h.b16 %v1838
    %v1943 = vunpack.c.l.b16 %v1839
    %v1944 = vunpack.c.h.b16 %v1839
    %v1945 = vunpack.c.l.b16 %v1840
    %v1946 = vunpack.c.h.b16 %v1840
    %v1947 = vunpack.c.l.b16 %v1841
    %v1948 = vunpack.c.h.b16 %v1841
    %v1949 = vunpack.c.l.b16 %v1842
    %v1950 = vunpack.c.h.b16 %v1842
    %v1951 = vunpack.c.l.b16 %v1843
    %v1952 = vunpack.c.h.b16 %v1843
    %v1953 = vunpack.c.l.b16 %v1844
    %v1954 = vunpack.c.h.b16 %v1844
    %v1955 = vunpack.c.l.b16 %v1845
    %v1956 = vunpack.c.h.b16 %v1845
    %v1957 = vunpack.c.l.b16 %v1846
    %v1958 = vunpack.c.h.b16 %v1846
    %v1959 = vunpack.c.l.b16 %v1847
    %v1960 = vunpack.c.h.b16 %v1847
    %v1961 = vunpack.c.l.b16 %v1848
    %v1962 = vunpack.c.h.b16 %v1848
    %v1963 = vunpack.c.l.b16 %v1849
    %v1964 = vunpack.c.h.b16 %v1849
    %v1965 = vunpack.c.l.b16 %v1850
    %v1966 = vunpack.c.h.b16 %v1850
    %v1967 = vunpack.c.l.b16 %v1851
    %v1968 = vunpack.c.h.b16 %v1851
    %v1969 = vunpack.c.l.b16 %v1852
    %v1970 = vunpack.c.h.b16 %v1852
    %v1971 = vpack.c.b16 %v1911, %v1907
    %v1972 = vpack.c.b16 %v1912, %v1908
    %v1973 = vpack.c.b16 %v1913, %v1909
    %v1974 = vpack.c.b16 %v1914, %v1910
    %v1975 = vpack.c.b16 %v1919, %v1915
    %v1976 = vpack.c.b16 %v1920, %v1916
    %v1977 = vpack.c.b16 %v1921, %v1917
    %v1978 = vpack.c.b16 %v1922, %v1918
    %v1979 = vpack.c.b16 %v1927, %v1923
    %v1980 = vpack.c.b16 %v1928, %v1924
    %v1981 = vpack.c.b16 %v1929, %v1925
    %v1982 = vpack.c.b16 %v1930, %v1926
    %v1983 = vpack.c.b16 %v1935, %v1931
    %v1984 = vpack.c.b16 %v1936, %v1932
    %v1985 = vpack.c.b16 %v1937, %v1933
    %v1986 = vpack.c.b16 %v1938, %v1934
    %v1987 = vpack.c.b16 %v1943, %v1939
    %v1988 = vpack.c.b16 %v1944, %v1940
    %v1989 = vpack.c.b16 %v1945, %v1941
    %v1990 = vpack.c.b16 %v1946, %v1942
    %v1991 = vpack.c.b16 %v1951, %v1947
    %v1992 = vpack.c.b16 %v1952, %v1948
    %v1993 = vpack.c.b16 %v1953, %v1949
    %v1994 = vpack.c.b16 %v1954, %v1950
    %v1995 = vpack.c.b16 %v1959, %v1955
    %v1996 = vpack.c.b16 %v1960, %v1956
    %v1997 = vpack.c.b16 %v1961, %v1957
    %v1998 = vpack.c.b16 %v1962, %v1958
    %v1999 = vpack.c.b16 %v1967, %v1963
    %v2000 = vpack.c.b16 %v1968, %v1964
    %v2001 = vpack.c.b16 %v1969, %v1965
    %v2002 = vpack.c.b16 %v1970, %v1966
    %2035 = vmatprep.subr.bf16.mxu0 %v1972
    %2036 = vmatpush1.bf16.msra.mxu0 %v1971
    %2037 = vmatprep.subr.bf16.mxu0 %v1976
    %2038 = vmatpush1.bf16.msra.mxu0 %v1975
    %2039 = vmatprep.subr.bf16.mxu0 %v1980
    %2040 = vmatpush1.bf16.msra.mxu0 %v1979
    %2041 = vmatprep.subr.bf16.mxu0 %v1984
    %2042 = vmatpush1.bf16.msra.mxu0 %v1983
    %2043 = vmatprep.subr.bf16.mxu0 %v1988
    %2044 = vmatpush1.bf16.msra.mxu0 %v1987
    %2045 = vmatprep.subr.bf16.mxu0 %v1992
    %2046 = vmatpush1.bf16.msra.mxu0 %v1991
    %2047 = vmatprep.subr.bf16.mxu0 %v1996
    %2048 = vmatpush1.bf16.msra.mxu0 %v1995
    %2049 = vmatprep.subr.bf16.mxu0 %v2000
    %2050 = vmatpush1.bf16.msra.mxu0 %v1999
    %2051 = vmatprep.subr.bf16.mxu0 0
    %2052 = vmatpush1.bf16.msra.mxu0 0
    %2053 = vmatprep.subr.bf16.mxu0 0
    %2054 = vmatpush1.bf16.msra.mxu0 0
    %2055 = vmatprep.subr.bf16.mxu0 0
    %2056 = vmatpush1.bf16.msra.mxu0 0
    %2057 = vmatprep.subr.bf16.mxu0 0
    %2058 = vmatpush1.bf16.msra.mxu0 0
    %2059 = vmatprep.subr.bf16.mxu0 0
    %2060 = vmatpush1.bf16.msra.mxu0 0
    %2061 = vmatprep.subr.bf16.mxu0 0
    %2062 = vmatpush1.bf16.msra.mxu0 0
    %2063 = vmatprep.subr.bf16.mxu0 0
    %2064 = vmatpush1.bf16.msra.mxu0 0
    %2065 = vmatprep.subr.bf16.mxu0 0
    %2066 = vmatpush1.bf16.msra.mxu0 0
    %2067 = vmatprep.mubr.bf16.mxu0 0
    %2068 = vmatmul.mubr.bf16.gmra.mrb[0].mxu0 %v1820
    %v2069 = vpop.f32.mrb[0].mxu0
    %v2070 = vadd.f32 %v1858, %v2069
    %v2071 = vpop.f32.mrb[0].mxu0
    %v2072 = vadd.f32 %v1862, %v2071
    %v2073 = vpop.f32.mrb[0].mxu0
    %v2074 = vadd.f32 %v1858, %v2073
    %v2075 = vpop.f32.mrb[0].mxu0
    %v2076 = vadd.f32 %v1862, %v2075
    %2077 = vdwg.mxu0
    %2078 = vmatprep.subr.bf16.mxu0 %v1974
    %2079 = vmatpush1.bf16.msra.mxu0 %v1973
    %2080 = vmatprep.subr.bf16.mxu0 %v1978
    %2081 = vmatpush1.bf16.msra.mxu0 %v1977
    %2082 = vmatprep.subr.bf16.mxu0 %v1982
    %2083 = vmatpush1.bf16.msra.mxu0 %v1981
    %2084 = vmatprep.subr.bf16.mxu0 %v1986
    %2085 = vmatpush1.bf16.msra.mxu0 %v1985
    %2086 = vmatprep.subr.bf16.mxu0 %v1990
    %2087 = vmatpush1.bf16.msra.mxu0 %v1989
    %2088 = vmatprep.subr.bf16.mxu0 %v1994
    %2089 = vmatpush1.bf16.msra.mxu0 %v1993
    %2090 = vmatprep.subr.bf16.mxu0 %v1998
    %2091 = vmatpush1.bf16.msra.mxu0 %v1997
    %2092 = vmatprep.subr.bf16.mxu0 %v2002
    %2093 = vmatpush1.bf16.msra.mxu0 %v2001
    %2094 = vmatprep.subr.bf16.mxu0 0
    %2095 = vmatpush1.bf16.msra.mxu0 0
    %2096 = vmatprep.subr.bf16.mxu0 0
    %2097 = vmatpush1.bf16.msra.mxu0 0
    %2098 = vmatprep.subr.bf16.mxu0 0
    %2099 = vmatpush1.bf16.msra.mxu0 0
    %2100 = vmatprep.subr.bf16.mxu0 0
    %2101 = vmatpush1.bf16.msra.mxu0 0
    %2102 = vmatprep.subr.bf16.mxu0 0
    %2103 = vmatpush1.bf16.msra.mxu0 0
    %2104 = vmatprep.subr.bf16.mxu0 0
    %2105 = vmatpush1.bf16.msra.mxu0 0
    %2106 = vmatprep.subr.bf16.mxu0 0
    %2107 = vmatpush1.bf16.msra.mxu0 0
    %2108 = vmatprep.subr.bf16.mxu0 0
    %2109 = vmatpush1.bf16.msra.mxu0 0
    %2110 = vmatprep.mubr.bf16.mxu0 0
    %2111 = vmatmul.mubr.bf16.gmra.mrb[0].mxu0 %v1820
    %v2112 = vpop.f32.mrb[0].mxu0
    %v2113 = vadd.f32 %v1866, %v2112
    %v2114 = vpop.f32.mrb[0].mxu0
    %v2115 = vadd.f32 %v1870, %v2114
    %v2116 = vpop.f32.mrb[0].mxu0
    %v2117 = vadd.f32 %v1866, %v2116
    %v2118 = vpop.f32.mrb[0].mxu0
    %v2119 = vadd.f32 %v1870, %v2118
    %2120 = vdwg.mxu0
    %v2121 = vpack.c.bf16 %v2074, %v2070
    %v2122 = vpack.c.bf16 %v2076, %v2072
    %v2123 = vpack.c.bf16 %v2117, %v2113
    %v2124 = vpack.c.bf16 %v2119, %v2115
    %v2125 = vld [vmem:[#allocation10] sm:$0xff]
    %v2126 = vld [vmem:[#allocation10 + $0x8] sm:$0xff]
    %v2127 = vld [vmem:[#allocation20] sm:$0xf]
    %v2128 = vld [vmem:[#allocation20 + $0x4] sm:$0xf]
    %v2129 = vld [vmem:[#allocation20 + $0x8] sm:$0xf]
    %v2130 = vld [vmem:[#allocation20 + $0xc] sm:$0xf]
    %v2131 = vld [vmem:[#allocation20 + $0x10] sm:$0xf]
    %v2132 = vld [vmem:[#allocation20 + $0x14] sm:$0xf]
    %v2133 = vld [vmem:[#allocation20 + $0x18] sm:$0xf]
    %v2134 = vld [vmem:[#allocation20 + $0x1c] sm:$0xf]
    %v2135 = vld [vmem:[#allocation20 + $0x20] sm:$0xf]
    %v2136 = vld [vmem:[#allocation20 + $0x24] sm:$0xf]
    %v2137 = vld [vmem:[#allocation20 + $0x28] sm:$0xf]
    %v2138 = vld [vmem:[#allocation20 + $0x2c] sm:$0xf]
    %v2139 = vld [vmem:[#allocation20 + $0x30] sm:$0xf]
    %v2140 = vld [vmem:[#allocation20 + $0x34] sm:$0xf]
    %v2141 = vld [vmem:[#allocation20 + $0x38] sm:$0xf]
    %v2142 = vld [vmem:[#allocation20 + $0x3c] sm:$0xf]
    %v2143 = vld [vmem:[#allocation20 + $0x40] sm:$0xf]
    %v2144 = vld [vmem:[#allocation20 + $0x44] sm:$0xf]
    %v2145 = vld [vmem:[#allocation20 + $0x48] sm:$0xf]
    %v2146 = vld [vmem:[#allocation20 + $0x4c] sm:$0xf]
    %v2147 = vld [vmem:[#allocation20 + $0x50] sm:$0xf]
    %v2148 = vld [vmem:[#allocation20 + $0x54] sm:$0xf]
    %v2149 = vld [vmem:[#allocation20 + $0x58] sm:$0xf]
    %v2150 = vld [vmem:[#allocation20 + $0x5c] sm:$0xf]
    %v2151 = vld [vmem:[#allocation20 + $0x60] sm:$0xf]
    %v2152 = vld [vmem:[#allocation20 + $0x64] sm:$0xf]
    %v2153 = vld [vmem:[#allocation20 + $0x68] sm:$0xf]
    %v2154 = vld [vmem:[#allocation20 + $0x6c] sm:$0xf]
    %v2155 = vld [vmem:[#allocation20 + $0x70] sm:$0xf]
    %v2156 = vld [vmem:[#allocation20 + $0x74] sm:$0xf]
    %v2157 = vld [vmem:[#allocation20 + $0x78] sm:$0xf]
    %v2158 = vld [vmem:[#allocation20 + $0x7c] sm:$0xf]
    %2159 = vmatprep.subr.bf16.mxu0 0
    %2160 = vmatpush1.bf16.xpose.msra.mxu0 %v2121
    %2161 = vmatprep.subr.bf16.mxu0 0
    %2162 = vmatpush1.bf16.xpose.msra.mxu0 0
    %2163 = vmatprep.subr.bf16.mxu0 0
    %2164 = vmatpush1.bf16.xpose.msra.mxu0 0
    %2165 = vmatprep.subr.bf16.mxu0 0
    %2166 = vmatpush1.bf16.xpose.msra.mxu0 0
    %2167 = vmatprep.subr.bf16.mxu0 0
    %2168 = vmatpush1.bf16.xpose.msra.mxu0 0
    %2169 = vmatprep.subr.bf16.mxu0 0
    %2170 = vmatpush1.bf16.xpose.msra.mxu0 0
    %2171 = vmatprep.subr.bf16.mxu0 0
    %2172 = vmatpush1.bf16.xpose.msra.mxu0 0
    %2173 = vmatprep.subr.bf16.mxu0 0
    %2174 = vmatpush1.bf16.xpose.msra.mxu0 0
    %2175 = vmatprep.subr.bf16.mxu0 0
    %2176 = vmatpush1.bf16.xpose.msra.mxu0 0
    %2177 = vmatprep.subr.bf16.mxu0 0
    %2178 = vmatpush1.bf16.xpose.msra.mxu0 0
    %2179 = vmatprep.subr.bf16.mxu0 0
    %2180 = vmatpush1.bf16.xpose.msra.mxu0 0
    %2181 = vmatprep.subr.bf16.mxu0 0
    %2182 = vmatpush1.bf16.xpose.msra.mxu0 0
    %2183 = vmatprep.subr.bf16.mxu0 0
    %2184 = vmatpush1.bf16.xpose.msra.mxu0 0
    %2185 = vmatprep.subr.bf16.mxu0 0
    %2186 = vmatpush1.bf16.xpose.msra.mxu0 0
    %2187 = vmatprep.subr.bf16.mxu0 0
    %2188 = vmatpush1.bf16.xpose.msra.mxu0 0
    %2189 = vmatprep.subr.bf16.mxu0 0
    %2190 = vmatpush1.bf16.xpose.msra.mxu0 0
    %2191 = vmatprep.mubr.bf16.mxu0 0
    %2192 = vmatmul.mubr.bf16.gmra.mrb[0].mxu0 %v1818
    %v2193 = vpop.f32.mrb[0].mxu0
    %v2194 = vadd.f32 %v2125, %v2193
    %v2195 = vpop.f32.mrb[0].mxu0
    %v2196 = vpop.f32.mrb[0].mxu0
    %v2197 = vadd.f32 %v2126, %v2196
    %v2198 = vpop.f32.mrb[0].mxu0
    %2199 = vdwg.mxu0
    %v2200 = vsel %vm1028, %v2194, -inf
    %2201 = vmax.xlane.f32.xlu0 %v2200
    %v2202 = vpop.xlane.xlu0 %2201
    %v2203 = vsel %vm1028, %v2197, -inf
    %2204 = vmax.xlane.f32.xlu0 %v2203
    %v2205 = vpop.xlane.xlu0 %2204
    %v2206 = vsub.f32 %v2194, %v2202
    %v2207 = vsub.f32 %v2197, %v2205
    %v2208 = vmul.f32 %v2206, 1.442695
    %v2209 = vpow.pop %v2208
    %v2210 = vmul.f32 %v2207, 1.442695
    %v2211 = vpow.pop %v2210
    %v2212 = vsel %vm1028, %v2209, 0.0
    %2213 = vadd.xlane.f32.xlu0 %v2212
    %v2214 = vpop.xlane.xlu0 %2213
    %v2215 = vsel %vm1028, %v2211, 0.0
    %2216 = vadd.xlane.f32.xlu0 %v2215
    %v2217 = vpop.xlane.xlu0 %2216
    %v2218 = vrcp.pop %v2214
    %v2219 = vmul.f32 %v2209, %v2218
    %v2220 = vrcp.pop %v2217
    %v2221 = vmul.f32 %v2211, %v2220
    %v2222 = vpack.c.bf16 %v2221, %v2219
    %v2224 = vsel %vm1028, %v2222, 0
    %2226 = vmatprep.subr.bf16.mxu0 0
    %2227 = vmatpush1.bf16.msra.mxu0 %v2123
    %2228 = vmatprep.subr.bf16.mxu0 0
    %2229 = vmatpush1.bf16.msra.mxu0 0
    %2230 = vmatprep.subr.bf16.mxu0 0
    %2231 = vmatpush1.bf16.msra.mxu0 0
    %2232 = vmatprep.subr.bf16.mxu0 0
    %2233 = vmatpush1.bf16.msra.mxu0 0
    %2234 = vmatprep.subr.bf16.mxu0 0
    %2235 = vmatpush1.bf16.msra.mxu0 0
    %2236 = vmatprep.subr.bf16.mxu0 0
    %2237 = vmatpush1.bf16.msra.mxu0 0
    %2238 = vmatprep.subr.bf16.mxu0 0
    %2239 = vmatpush1.bf16.msra.mxu0 0
    %2240 = vmatprep.subr.bf16.mxu0 0
    %2241 = vmatpush1.bf16.msra.mxu0 0
    %2242 = vmatprep.subr.bf16.mxu0 0
    %2243 = vmatpush1.bf16.msra.mxu0 0
    %2244 = vmatprep.subr.bf16.mxu0 0
    %2245 = vmatpush1.bf16.msra.mxu0 0
    %2246 = vmatprep.subr.bf16.mxu0 0
    %2247 = vmatpush1.bf16.msra.mxu0 0
    %2248 = vmatprep.subr.bf16.mxu0 0
    %2249 = vmatpush1.bf16.msra.mxu0 0
    %2250 = vmatprep.subr.bf16.mxu0 0
    %2251 = vmatpush1.bf16.msra.mxu0 0
    %2252 = vmatprep.subr.bf16.mxu0 0
    %2253 = vmatpush1.bf16.msra.mxu0 0
    %2254 = vmatprep.subr.bf16.mxu0 0
    %2255 = vmatpush1.bf16.msra.mxu0 0
    %2256 = vmatprep.subr.bf16.mxu0 0
    %2257 = vmatpush1.bf16.msra.mxu0 0
    %2258 = vmatprep.mubr.bf16.mxu0 0
    %2259 = vmatmul.mubr.bf16.gmra.mrb[0].mxu0 %v2224
    %v2260 = vpop.f32.mrb[0].mxu0
    %v2261 = vadd.f32 0.0, %v2260
    %v2262 = vpop.f32.mrb[0].mxu0
    %v2263 = vpop.f32.mrb[0].mxu0
    %v2264 = vadd.f32 0.0, %v2263
    %v2265 = vpop.f32.mrb[0].mxu0
    %2266 = vdwg.mxu0
    %v2267 = vpack.c.bf16 %v2264, %v2261
    %2268 = vmatprep.subr.bf16.mxu0 0
    %2269 = vmatpush1.bf16.xpose.msra.mxu0 %v2122
    %2270 = vmatprep.subr.bf16.mxu0 0
    %2271 = vmatpush1.bf16.xpose.msra.mxu0 0
    %2272 = vmatprep.subr.bf16.mxu0 0
    %2273 = vmatpush1.bf16.xpose.msra.mxu0 0
    %2274 = vmatprep.subr.bf16.mxu0 0
    %2275 = vmatpush1.bf16.xpose.msra.mxu0 0
    %2276 = vmatprep.subr.bf16.mxu0 0
    %2277 = vmatpush1.bf16.xpose.msra.mxu0 0
    %2278 = vmatprep.subr.bf16.mxu0 0
    %2279 = vmatpush1.bf16.xpose.msra.mxu0 0
    %2280 = vmatprep.subr.bf16.mxu0 0
    %2281 = vmatpush1.bf16.xpose.msra.mxu0 0
    %2282 = vmatprep.subr.bf16.mxu0 0
    %2283 = vmatpush1.bf16.xpose.msra.mxu0 0
    %2284 = vmatprep.subr.bf16.mxu0 0
    %2285 = vmatpush1.bf16.xpose.msra.mxu0 0
    %2286 = vmatprep.subr.bf16.mxu0 0
    %2287 = vmatpush1.bf16.xpose.msra.mxu0 0
    %2288 = vmatprep.subr.bf16.mxu0 0
    %2289 = vmatpush1.bf16.xpose.msra.mxu0 0
    %2290 = vmatprep.subr.bf16.mxu0 0
    %2291 = vmatpush1.bf16.xpose.msra.mxu0 0
    %2292 = vmatprep.subr.bf16.mxu0 0
    %2293 = vmatpush1.bf16.xpose.msra.mxu0 0
    %2294 = vmatprep.subr.bf16.mxu0 0
    %2295 = vmatpush1.bf16.xpose.msra.mxu0 0
    %2296 = vmatprep.subr.bf16.mxu0 0
    %2297 = vmatpush1.bf16.xpose.msra.mxu0 0
    %2298 = vmatprep.subr.bf16.mxu0 0
    %2299 = vmatpush1.bf16.xpose.msra.mxu0 0
    %2300 = vmatprep.mubr.bf16.mxu0 0
    %2301 = vmatmul.mubr.bf16.gmra.mrb[0].mxu0 %v1819
    %v2302 = vpop.f32.mrb[0].mxu0
    %v2303 = vadd.f32 %v2125, %v2302
    %v2304 = vpop.f32.mrb[0].mxu0
    %v2305 = vpop.f32.mrb[0].mxu0
    %v2306 = vadd.f32 %v2126, %v2305
    %v2307 = vpop.f32.mrb[0].mxu0
    %2308 = vdwg.mxu0
    %v2309 = vsel %vm1028, %v2303, -inf
    %2310 = vmax.xlane.f32.xlu0 %v2309
    %v2311 = vpop.xlane.xlu0 %2310
    %v2312 = vsel %vm1028, %v2306, -inf
    %2313 = vmax.xlane.f32.xlu0 %v2312
    %v2314 = vpop.xlane.xlu0 %2313
    %v2315 = vsub.f32 %v2303, %v2311
    %v2316 = vsub.f32 %v2306, %v2314
    %v2317 = vmul.f32 %v2315, 1.442695
    %v2318 = vpow.pop %v2317
    %v2319 = vmul.f32 %v2316, 1.442695
    %v2320 = vpow.pop %v2319
    %v2321 = vsel %vm1028, %v2318, 0.0
    %2322 = vadd.xlane.f32.xlu0 %v2321
    %v2323 = vpop.xlane.xlu0 %2322
    %v2324 = vsel %vm1028, %v2320, 0.0
    %2325 = vadd.xlane.f32.xlu0 %v2324
    %v2326 = vpop.xlane.xlu0 %2325
    %v2327 = vrcp.pop %v2323
    %v2328 = vmul.f32 %v2318, %v2327
    %v2329 = vrcp.pop %v2326
    %v2330 = vmul.f32 %v2320, %v2329
    %v2331 = vpack.c.bf16 %v2330, %v2328
    %v2333 = vsel %vm1028, %v2331, 0
    %2335 = vmatprep.subr.bf16.mxu0 0
    %2336 = vmatpush1.bf16.msra.mxu0 %v2124
    %2337 = vmatprep.subr.bf16.mxu0 0
    %2338 = vmatpush1.bf16.msra.mxu0 0
    %2339 = vmatprep.subr.bf16.mxu0 0
    %2340 = vmatpush1.bf16.msra.mxu0 0
    %2341 = vmatprep.subr.bf16.mxu0 0
    %2342 = vmatpush1.bf16.msra.mxu0 0
    %2343 = vmatprep.subr.bf16.mxu0 0
    %2344 = vmatpush1.bf16.msra.mxu0 0
    %2345 = vmatprep.subr.bf16.mxu0 0
    %2346 = vmatpush1.bf16.msra.mxu0 0
    %2347 = vmatprep.subr.bf16.mxu0 0
    %2348 = vmatpush1.bf16.msra.mxu0 0
    %2349 = vmatprep.subr.bf16.mxu0 0
    %2350 = vmatpush1.bf16.msra.mxu0 0
    %2351 = vmatprep.subr.bf16.mxu0 0
    %2352 = vmatpush1.bf16.msra.mxu0 0
    %2353 = vmatprep.subr.bf16.mxu0 0
    %2354 = vmatpush1.bf16.msra.mxu0 0
    %2355 = vmatprep.subr.bf16.mxu0 0
    %2356 = vmatpush1.bf16.msra.mxu0 0
    %2357 = vmatprep.subr.bf16.mxu0 0
    %2358 = vmatpush1.bf16.msra.mxu0 0
    %2359 = vmatprep.subr.bf16.mxu0 0
    %2360 = vmatpush1.bf16.msra.mxu0 0
    %2361 = vmatprep.subr.bf16.mxu0 0
    %2362 = vmatpush1.bf16.msra.mxu0 0
    %2363 = vmatprep.subr.bf16.mxu0 0
    %2364 = vmatpush1.bf16.msra.mxu0 0
    %2365 = vmatprep.subr.bf16.mxu0 0
    %2366 = vmatpush1.bf16.msra.mxu0 0
    %2367 = vmatprep.mubr.bf16.mxu0 0
    %2368 = vmatmul.mubr.bf16.gmra.mrb[0].mxu0 %v2333
    %v2369 = vpop.f32.mrb[0].mxu0
    %v2370 = vadd.f32 0.0, %v2369
    %v2371 = vpop.f32.mrb[0].mxu0
    %v2372 = vpop.f32.mrb[0].mxu0
    %v2373 = vadd.f32 0.0, %v2372
    %v2374 = vpop.f32.mrb[0].mxu0
    %2375 = vdwg.mxu0
    %v2376 = vpack.c.bf16 %v2373, %v2370
    %v2393 = vunpack.c.l.b16 %v2143
    %v2394 = vunpack.c.l.b16 %v2144
    %v2395 = vunpack.c.l.b16 %v2145
    %v2396 = vunpack.c.l.b16 %v2146
    %v2397 = vunpack.c.l.b16 %v2147
    %v2398 = vunpack.c.l.b16 %v2148
    %v2399 = vunpack.c.l.b16 %v2149
    %v2400 = vunpack.c.l.b16 %v2150
    %v2401 = vunpack.c.l.b16 %v2151
    %v2402 = vunpack.c.l.b16 %v2152
    %v2403 = vunpack.c.l.b16 %v2153
    %v2404 = vunpack.c.l.b16 %v2154
    %v2405 = vunpack.c.l.b16 %v2155
    %v2406 = vunpack.c.l.b16 %v2156
    %v2407 = vunpack.c.l.b16 %v2157
    %v2408 = vunpack.c.l.b16 %v2158
    %v2409 = vpack.c.b16 %v2394, %v2393
    %v2410 = vpack.c.b16 %v2396, %v2395
    %v2411 = vpack.c.b16 %v2398, %v2397
    %v2412 = vpack.c.b16 %v2400, %v2399
    %v2413 = vpack.c.b16 %v2402, %v2401
    %v2414 = vpack.c.b16 %v2404, %v2403
    %v2415 = vpack.c.b16 %v2406, %v2405
    %v2416 = vpack.c.b16 %v2408, %v2407
    %2425 = vmatprep.subr.bf16.mxu0 0
    %2426 = vmatpush1.bf16.msra.mxu0 %v2409
    %2427 = vmatprep.subr.bf16.mxu0 0
    %2428 = vmatpush1.bf16.msra.mxu0 %v2410
    %2429 = vmatprep.subr.bf16.mxu0 0
    %2430 = vmatpush1.bf16.msra.mxu0 %v2411
    %2431 = vmatprep.subr.bf16.mxu0 0
    %2432 = vmatpush1.bf16.msra.mxu0 %v2412
    %2433 = vmatprep.subr.bf16.mxu0 0
    %2434 = vmatpush1.bf16.msra.mxu0 %v2413
    %2435 = vmatprep.subr.bf16.mxu0 0
    %2436 = vmatpush1.bf16.msra.mxu0 %v2414
    %2437 = vmatprep.subr.bf16.mxu0 0
    %2438 = vmatpush1.bf16.msra.mxu0 %v2415
    %2439 = vmatprep.subr.bf16.mxu0 0
    %2440 = vmatpush1.bf16.msra.mxu0 %v2416
    %2441 = vmatprep.subr.bf16.mxu0 0
    %2442 = vmatpush1.bf16.msra.mxu0 0
    %2443 = vmatprep.subr.bf16.mxu0 0
    %2444 = vmatpush1.bf16.msra.mxu0 0
    %2445 = vmatprep.subr.bf16.mxu0 0
    %2446 = vmatpush1.bf16.msra.mxu0 0
    %2447 = vmatprep.subr.bf16.mxu0 0
    %2448 = vmatpush1.bf16.msra.mxu0 0
    %2449 = vmatprep.subr.bf16.mxu0 0
    %2450 = vmatpush1.bf16.msra.mxu0 0
    %2451 = vmatprep.subr.bf16.mxu0 0
    %2452 = vmatpush1.bf16.msra.mxu0 0
    %2453 = vmatprep.subr.bf16.mxu0 0
    %2454 = vmatpush1.bf16.msra.mxu0 0
    %2455 = vmatprep.subr.bf16.mxu0 0
    %2456 = vmatpush1.bf16.msra.mxu0 0
    %2457 = vmatprep.mubr.bf16.mxu0 0
    %2458 = vmatmul.mubr.bf16.gmra.mrb[0].mxu0 %v2376
    %v2459 = vpop.f32.mrb[0].mxu0
    %v2460 = vadd.f32 0.0, %v2459
    %v2461 = vpop.f32.mrb[0].mxu0
    %v2462 = vpop.f32.mrb[0].mxu0
    %v2463 = vadd.f32 0.0, %v2462
    %v2464 = vpop.f32.mrb[0].mxu0
    %2465 = vdwg.mxu0
    %v2482 = vunpack.c.l.b16 %v2127
    %v2483 = vunpack.c.l.b16 %v2128
    %v2484 = vunpack.c.l.b16 %v2129
    %v2485 = vunpack.c.l.b16 %v2130
    %v2486 = vunpack.c.l.b16 %v2131
    %v2487 = vunpack.c.l.b16 %v2132
    %v2488 = vunpack.c.l.b16 %v2133
    %v2489 = vunpack.c.l.b16 %v2134
    %v2490 = vunpack.c.l.b16 %v2135
    %v2491 = vunpack.c.l.b16 %v2136
    %v2492 = vunpack.c.l.b16 %v2137
    %v2493 = vunpack.c.l.b16 %v2138
    %v2494 = vunpack.c.l.b16 %v2139
    %v2495 = vunpack.c.l.b16 %v2140
    %v2496 = vunpack.c.l.b16 %v2141
    %v2497 = vunpack.c.l.b16 %v2142
    %v2498 = vpack.c.b16 %v2483, %v2482
    %v2499 = vpack.c.b16 %v2485, %v2484
    %v2500 = vpack.c.b16 %v2487, %v2486
    %v2501 = vpack.c.b16 %v2489, %v2488
    %v2502 = vpack.c.b16 %v2491, %v2490
    %v2503 = vpack.c.b16 %v2493, %v2492
    %v2504 = vpack.c.b16 %v2495, %v2494
    %v2505 = vpack.c.b16 %v2497, %v2496
    %2514 = vmatprep.subr.bf16.mxu0 0
    %2515 = vmatpush1.bf16.msra.mxu0 %v2498
    %2516 = vmatprep.subr.bf16.mxu0 0
    %2517 = vmatpush1.bf16.msra.mxu0 %v2499
    %2518 = vmatprep.subr.bf16.mxu0 0
    %2519 = vmatpush1.bf16.msra.mxu0 %v2500
    %2520 = vmatprep.subr.bf16.mxu0 0
    %2521 = vmatpush1.bf16.msra.mxu0 %v2501
    %2522 = vmatprep.subr.bf16.mxu0 0
    %2523 = vmatpush1.bf16.msra.mxu0 %v2502
    %2524 = vmatprep.subr.bf16.mxu0 0
    %2525 = vmatpush1.bf16.msra.mxu0 %v2503
    %2526 = vmatprep.subr.bf16.mxu0 0
    %2527 = vmatpush1.bf16.msra.mxu0 %v2504
    %2528 = vmatprep.subr.bf16.mxu0 0
    %2529 = vmatpush1.bf16.msra.mxu0 %v2505
    %2530 = vmatprep.subr.bf16.mxu0 0
    %2531 = vmatpush1.bf16.msra.mxu0 0
    %2532 = vmatprep.subr.bf16.mxu0 0
    %2533 = vmatpush1.bf16.msra.mxu0 0
    %2534 = vmatprep.subr.bf16.mxu0 0
    %2535 = vmatpush1.bf16.msra.mxu0 0
    %2536 = vmatprep.subr.bf16.mxu0 0
    %2537 = vmatpush1.bf16.msra.mxu0 0
    %2538 = vmatprep.subr.bf16.mxu0 0
    %2539 = vmatpush1.bf16.msra.mxu0 0
    %2540 = vmatprep.subr.bf16.mxu0 0
    %2541 = vmatpush1.bf16.msra.mxu0 0
    %2542 = vmatprep.subr.bf16.mxu0 0
    %2543 = vmatpush1.bf16.msra.mxu0 0
    %2544 = vmatprep.subr.bf16.mxu0 0
    %2545 = vmatpush1.bf16.msra.mxu0 0
    %2546 = vmatprep.mubr.bf16.mxu0 0
    %2547 = vmatmul.mubr.bf16.gmra.mrb[0].mxu0 %v2267
    %v2548 = vpop.f32.mrb[0].mxu0
    %v2549 = vadd.f32 %v2460, %v2548
    %v2550 = vpop.f32.mrb[0].mxu0
    %v2551 = vpop.f32.mrb[0].mxu0
    %v2552 = vadd.f32 %v2463, %v2551
    %v2553 = vpop.f32.mrb[0].mxu0
    %2554 = vdwg.mxu0
    %v2555 = vadd.f32 %v1393, %v2549
    %v2556 = vadd.f32 %v1394, %v2552
    %v2557 = vld [vmem:[#allocation22] sm:$0x1]
    %v2559 = vlaneseq
    %v2560 = vshrl.u32 %v2559, 7
    %v2561 = vsub.s32 0, %v2560
    %v2562 = vrot.slane %v2557, %v2561
    %v2564 = vadd.f32 %v2555, %v2562
    %v2565 = vadd.f32 %v2556, %v2562
    %v2566 = vmul.f32 %v2564, %v2564
    %v2567 = vmul.f32 %v2565, %v2565
    %2568 = vmatprep.subr.mxu0 0.0
    %2569 = vmatpush1.msra.mxu0 %v348
    %2570 = vmatprep.subr.mxu0 0.0
    %2571 = vmatpush1.msra.mxu0 %v349
    %2572 = vmatprep.subr.mxu0 0.0
    %2573 = vmatpush1.msra.mxu0 %v350
    %2574 = vmatprep.subr.mxu0 0.0
    %2575 = vmatpush1.msra.mxu0 %v351
    %2576 = vmatprep.subr.mxu0 0.0
    %2577 = vmatpush1.msra.mxu0 %v352
    %2578 = vmatprep.subr.mxu0 0.0
    %2579 = vmatpush1.msra.mxu0 %v353
    %2580 = vmatprep.subr.mxu0 0.0
    %2581 = vmatpush1.msra.mxu0 %v354
    %2582 = vmatprep.subr.mxu0 0.0
    %2583 = vmatpush1.msra.mxu0 %v355
    %2584 = vmatprep.subr.mxu0 0.0
    %2585 = vmatpush1.msra.mxu0 %v356
    %2586 = vmatprep.subr.mxu0 0.0
    %2587 = vmatpush1.msra.mxu0 %v357
    %2588 = vmatprep.subr.mxu0 0.0
    %2589 = vmatpush1.msra.mxu0 %v358
    %2590 = vmatprep.subr.mxu0 0.0
    %2591 = vmatpush1.msra.mxu0 %v359
    %2592 = vmatprep.subr.mxu0 0.0
    %2593 = vmatpush1.msra.mxu0 %v360
    %2594 = vmatprep.subr.mxu0 0.0
    %2595 = vmatpush1.msra.mxu0 %v361
    %2596 = vmatprep.subr.mxu0 0.0
    %2597 = vmatpush1.msra.mxu0 %v362
    %2598 = vmatprep.subr.mxu0 0.0
    %2599 = vmatpush1.msra.mxu0 %v363
    %2600 = vmatprep.subr.mxu0 0.0
    %2601 = vmatpush1.msra.mxu0 0.0
    %2602 = vmatprep.subr.mxu0 0.0
    %2603 = vmatpush1.msra.mxu0 0.0
    %2604 = vmatprep.subr.mxu0 0.0
    %2605 = vmatpush1.msra.mxu0 0.0
    %2606 = vmatprep.subr.mxu0 0.0
    %2607 = vmatpush1.msra.mxu0 0.0
    %2608 = vmatprep.subr.mxu0 0.0
    %2609 = vmatpush1.msra.mxu0 0.0
    %2610 = vmatprep.subr.mxu0 0.0
    %2611 = vmatpush1.msra.mxu0 0.0
    %2612 = vmatprep.subr.mxu0 0.0
    %2613 = vmatpush1.msra.mxu0 0.0
    %2614 = vmatprep.subr.mxu0 0.0
    %2615 = vmatpush1.msra.mxu0 0.0
    %2616 = vmatprep.subr.mxu0 0.0
    %2617 = vmatpush1.msra.mxu0 0.0
    %2618 = vmatprep.subr.mxu0 0.0
    %2619 = vmatpush1.msra.mxu0 0.0
    %2620 = vmatprep.subr.mxu0 0.0
    %2621 = vmatpush1.msra.mxu0 0.0
    %2622 = vmatprep.subr.mxu0 0.0
    %2623 = vmatpush1.msra.mxu0 0.0
    %2624 = vmatprep.subr.mxu0 0.0
    %2625 = vmatpush1.msra.mxu0 0.0
    %2626 = vmatprep.subr.mxu0 0.0
    %2627 = vmatpush1.msra.mxu0 0.0
    %2628 = vmatprep.subr.mxu0 0.0
    %2629 = vmatpush1.msra.mxu0 0.0
    %2630 = vmatprep.subr.mxu0 0.0
    %2631 = vmatpush1.msra.mxu0 0.0
    %2632 = vmatprep.mubr.f32.mxu0 0.0
    %2633 = vmatmul.mubr.f32.gmra.mrb[0].mxu0 %v2566
    %v2634 = vpop.f32.mrb[0].mxu0
    %v2635 = vadd.f32 0.0, %v2634
    %v2636 = vpop.f32.mrb[0].mxu0
    %2637 = vmatprep.mubr.f32.mxu0 0.0
    %2638 = vmatmul.mubr.f32.gmra.mrb[0].mxu0 %v2567
    %v2639 = vpop.f32.mrb[0].mxu0
    %v2640 = vadd.f32 0.0, %v2639
    %v2641 = vpop.f32.mrb[0].mxu0
    %2642 = vdwg.mxu0
    %v2643 = vand.u32 2147483647, %v2635
    %v2644 = vand.u32 2147483647, %v2640
    %v2645 = vsel %vm444, %v2643, 0.0
    %2646 = vadd.xlane.f32.xlu0 %v2645
    %v2647 = vpop.xlane.xlu0 %2646
    %v2648 = vsel %vm444, %v2644, 0.0
    %2649 = vadd.xlane.f32.xlu0 %v2648
    %v2650 = vpop.xlane.xlu0 %2649
    %v2651 = vmul.f32 %v2647, 0.25
    %v2652 = vmul.f32 %v2650, 0.25
    %v2653 = vadd.f32 %v2651, 0.01
    %v2654 = vadd.f32 %v2652, 0.01
    %v2655 = vrsqrt.pop %v2653
    %v2656 = vrsqrt.pop %v2654
    %v2657 = vmul.f32 %v2564, %v460
    %v2658 = vmul.f32 %v2565, %v460
    %2659 = vadd.xlane.f32.xlu0 %v2657
    %v2660 = vpop.xlane.xlu0 %2659
    %2661 = vadd.xlane.f32.xlu0 %v2658
    %v2662 = vpop.xlane.xlu0 %2661
    %v2663 = vmul.f32 %v2660, 0.125
    %v2664 = vmul.f32 %v2662, 0.125
    %v2665 = vsub.f32 %v2564, %v2663
    %v2666 = vsub.f32 %v2565, %v2664
    %v2667 = vmul.f32 %v2665, %v460
    %v2668 = vmul.f32 %v2666, %v460
    %v2669 = vmul.f32 %v2667, %v2667
    %v2670 = vmul.f32 %v2668, %v2668
    %2671 = vadd.xlane.f32.xlu0 %v2669
    %v2672 = vpop.xlane.xlu0 %2671
    %2673 = vadd.xlane.f32.xlu0 %v2670
    %v2674 = vpop.xlane.xlu0 %2673
    %v2675 = vmul.f32 %v2672, 0.125
    %v2676 = vmul.f32 %v2674, 0.125
    %v2677 = vadd.f32 %v2675, 1e-05
    %v2678 = vadd.f32 %v2676, 1e-05
    %v2679 = vrsqrt.pop %v2677
    %v2680 = vrsqrt.pop %v2678
    %v2681 = vmul.f32 %v2655, %v488
    %v2682 = vmul.f32 %v2656, %v488
    %v2683 = vmul.f32 %v2564, %v2681
    %v2684 = vmul.f32 %v2565, %v2682
    %v2685 = vmul.f32 %v2667, %v2679
    %v2686 = vmul.f32 %v2668, %v2680
    %v2687 = vadd.f32 %v2683, %v2685
    %v2688 = vadd.f32 %v2684, %v2686
    %v2689 = vpack.c.bf16 %v2688, %v2687
    %v2690 = vld [vmem:[#allocation23] sm:$0xff]
    %v2691 = vld [vmem:[#allocation23 + $0x8] sm:$0xff]
    %v2692 = vld [vmem:[#allocation23 + $0x10] sm:$0xff]
    %v2693 = vld [vmem:[#allocation23 + $0x18] sm:$0xff]
    %v2694 = vld [vmem:[#allocation23 + $0x20] sm:$0xff]
    %v2695 = vld [vmem:[#allocation23 + $0x28] sm:$0xff]
    %v2696 = vld [vmem:[#allocation23 + $0x30] sm:$0xff]
    %v2697 = vld [vmem:[#allocation23 + $0x38] sm:$0xff]
    %v2698 = vld [vmem:[#allocation23 + $0x40] sm:$0xff]
    %v2699 = vld [vmem:[#allocation23 + $0x48] sm:$0xff]
    %v2700 = vld [vmem:[#allocation23 + $0x50] sm:$0xff]
    %v2701 = vld [vmem:[#allocation23 + $0x58] sm:$0xff]
    %v2702 = vld [vmem:[#allocation23 + $0x60] sm:$0xff]
    %v2703 = vld [vmem:[#allocation23 + $0x68] sm:$0xff]
    %v2704 = vld [vmem:[#allocation23 + $0x70] sm:$0xff]
    %v2705 = vld [vmem:[#allocation23 + $0x78] sm:$0xff]
    %v2706 = vld [vmem:[#allocation23 + $0x80] sm:$0xff]
    %v2707 = vld [vmem:[#allocation23 + $0x88] sm:$0xff]
    %v2708 = vld [vmem:[#allocation23 + $0x90] sm:$0xff]
    %v2709 = vld [vmem:[#allocation23 + $0x98] sm:$0xff]
    %v2710 = vld [vmem:[#allocation23 + $0xa0] sm:$0xff]
    %v2711 = vld [vmem:[#allocation23 + $0xa8] sm:$0xff]
    %v2712 = vld [vmem:[#allocation23 + $0xb0] sm:$0xff]
    %v2713 = vld [vmem:[#allocation23 + $0xb8] sm:$0xff]
    %v2714 = vld [vmem:[#allocation23 + $0xc0] sm:$0xff]
    %v2715 = vld [vmem:[#allocation23 + $0xc8] sm:$0xff]
    %v2716 = vld [vmem:[#allocation23 + $0xd0] sm:$0xff]
    %v2717 = vld [vmem:[#allocation23 + $0xd8] sm:$0xff]
    %v2718 = vld [vmem:[#allocation23 + $0xe0] sm:$0xff]
    %v2719 = vld [vmem:[#allocation23 + $0xe8] sm:$0xff]
    %v2720 = vld [vmem:[#allocation23 + $0xf0] sm:$0xff]
    %v2721 = vld [vmem:[#allocation23 + $0xf8] sm:$0xff]
    %v2722 = vld [vmem:[#allocation23 + $0x100] sm:$0xff]
    %v2723 = vld [vmem:[#allocation23 + $0x108] sm:$0xff]
    %v2724 = vld [vmem:[#allocation23 + $0x110] sm:$0xff]
    %v2725 = vld [vmem:[#allocation23 + $0x118] sm:$0xff]
    %v2726 = vld [vmem:[#allocation23 + $0x120] sm:$0xff]
    %v2727 = vld [vmem:[#allocation23 + $0x128] sm:$0xff]
    %v2728 = vld [vmem:[#allocation23 + $0x130] sm:$0xff]
    %v2729 = vld [vmem:[#allocation23 + $0x138] sm:$0xff]
    %v2730 = vld [vmem:[#allocation23 + $0x140] sm:$0xff]
    %v2731 = vld [vmem:[#allocation23 + $0x148] sm:$0xff]
    %v2732 = vld [vmem:[#allocation23 + $0x150] sm:$0xff]
    %v2733 = vld [vmem:[#allocation23 + $0x158] sm:$0xff]
    %v2734 = vld [vmem:[#allocation23 + $0x160] sm:$0xff]
    %v2735 = vld [vmem:[#allocation23 + $0x168] sm:$0xff]
    %v2736 = vld [vmem:[#allocation23 + $0x170] sm:$0xff]
    %v2737 = vld [vmem:[#allocation23 + $0x178] sm:$0xff]
    %v2738 = vld [vmem:[#allocation23 + $0x180] sm:$0xff]
    %v2739 = vld [vmem:[#allocation23 + $0x188] sm:$0xff]
    %v2740 = vld [vmem:[#allocation23 + $0x190] sm:$0xff]
    %v2741 = vld [vmem:[#allocation23 + $0x198] sm:$0xff]
    %v2742 = vld [vmem:[#allocation23 + $0x1a0] sm:$0xff]
    %v2743 = vld [vmem:[#allocation23 + $0x1a8] sm:$0xff]
    %v2744 = vld [vmem:[#allocation23 + $0x1b0] sm:$0xff]
    %v2745 = vld [vmem:[#allocation23 + $0x1b8] sm:$0xff]
    %v2746 = vld [vmem:[#allocation23 + $0x1c0] sm:$0xff]
    %v2747 = vld [vmem:[#allocation23 + $0x1c8] sm:$0xff]
    %v2748 = vld [vmem:[#allocation23 + $0x1d0] sm:$0xff]
    %v2749 = vld [vmem:[#allocation23 + $0x1d8] sm:$0xff]
    %v2750 = vld [vmem:[#allocation23 + $0x1e0] sm:$0xff]
    %v2751 = vld [vmem:[#allocation23 + $0x1e8] sm:$0xff]
    %v2752 = vld [vmem:[#allocation23 + $0x1f0] sm:$0xff]
    %v2753 = vld [vmem:[#allocation23 + $0x1f8] sm:$0xff]
    %v2754 = vld [vmem:[%s39] sm:$0xff]
    %v2756 = vlaneseq
    %v2757 = vshrl.u32 %v2756, 7
    %v2758 = vsub.s32 0, %v2757
    %v2759 = vrot.slane %v2754, %v2758
    %v2760 = vlaneseq
    %v2761 = vshrl.u32 %v2760, 7
    %v2762 = vsub.s32 1, %v2761
    %v2763 = vrot.slane %v2754, %v2762
    %v2764 = vlaneseq
    %v2765 = vshrl.u32 %v2764, 7
    %v2766 = vsub.s32 2, %v2765
    %v2767 = vrot.slane %v2754, %v2766
    %v2768 = vlaneseq
    %v2769 = vshrl.u32 %v2768, 7
    %v2770 = vsub.s32 3, %v2769
    %v2771 = vrot.slane %v2754, %v2770
    %v2772 = vlaneseq
    %v2773 = vshrl.u32 %v2772, 7
    %v2774 = vsub.s32 4, %v2773
    %v2775 = vrot.slane %v2754, %v2774
    %v2776 = vlaneseq
    %v2777 = vshrl.u32 %v2776, 7
    %v2778 = vsub.s32 5, %v2777
    %v2779 = vrot.slane %v2754, %v2778
    %v2780 = vlaneseq
    %v2781 = vshrl.u32 %v2780, 7
    %v2782 = vsub.s32 6, %v2781
    %v2783 = vrot.slane %v2754, %v2782
    %v2784 = vlaneseq
    %v2785 = vshrl.u32 %v2784, 7
    %v2786 = vsub.s32 7, %v2785
    %v2787 = vrot.slane %v2754, %v2786
    %v2860 = vunpack.c.l.b16 %v2690
    %v2861 = vunpack.c.h.b16 %v2690
    %v2862 = vunpack.c.l.b16 %v2691
    %v2863 = vunpack.c.h.b16 %v2691
    %v2864 = vunpack.c.l.b16 %v2692
    %v2865 = vunpack.c.h.b16 %v2692
    %v2866 = vunpack.c.l.b16 %v2693
    %v2867 = vunpack.c.h.b16 %v2693
    %v2868 = vunpack.c.l.b16 %v2694
    %v2869 = vunpack.c.h.b16 %v2694
    %v2870 = vunpack.c.l.b16 %v2695
    %v2871 = vunpack.c.h.b16 %v2695
    %v2872 = vunpack.c.l.b16 %v2696
    %v2873 = vunpack.c.h.b16 %v2696
    %v2874 = vunpack.c.l.b16 %v2697
    %v2875 = vunpack.c.h.b16 %v2697
    %v2876 = vunpack.c.l.b16 %v2698
    %v2877 = vunpack.c.h.b16 %v2698
    %v2878 = vunpack.c.l.b16 %v2699
    %v2879 = vunpack.c.h.b16 %v2699
    %v2880 = vunpack.c.l.b16 %v2700
    %v2881 = vunpack.c.h.b16 %v2700
    %v2882 = vunpack.c.l.b16 %v2701
    %v2883 = vunpack.c.h.b16 %v2701
    %v2884 = vunpack.c.l.b16 %v2702
    %v2885 = vunpack.c.h.b16 %v2702
    %v2886 = vunpack.c.l.b16 %v2703
    %v2887 = vunpack.c.h.b16 %v2703
    %v2888 = vunpack.c.l.b16 %v2704
    %v2889 = vunpack.c.h.b16 %v2704
    %v2890 = vunpack.c.l.b16 %v2705
    %v2891 = vunpack.c.h.b16 %v2705
    %v2892 = vunpack.c.l.b16 %v2706
    %v2893 = vunpack.c.h.b16 %v2706
    %v2894 = vunpack.c.l.b16 %v2707
    %v2895 = vunpack.c.h.b16 %v2707
    %v2896 = vunpack.c.l.b16 %v2708
    %v2897 = vunpack.c.h.b16 %v2708
    %v2898 = vunpack.c.l.b16 %v2709
    %v2899 = vunpack.c.h.b16 %v2709
    %v2900 = vunpack.c.l.b16 %v2710
    %v2901 = vunpack.c.h.b16 %v2710
    %v2902 = vunpack.c.l.b16 %v2711
    %v2903 = vunpack.c.h.b16 %v2711
    %v2904 = vunpack.c.l.b16 %v2712
    %v2905 = vunpack.c.h.b16 %v2712
    %v2906 = vunpack.c.l.b16 %v2713
    %v2907 = vunpack.c.h.b16 %v2713
    %v2908 = vunpack.c.l.b16 %v2714
    %v2909 = vunpack.c.h.b16 %v2714
    %v2910 = vunpack.c.l.b16 %v2715
    %v2911 = vunpack.c.h.b16 %v2715
    %v2912 = vunpack.c.l.b16 %v2716
    %v2913 = vunpack.c.h.b16 %v2716
    %v2914 = vunpack.c.l.b16 %v2717
    %v2915 = vunpack.c.h.b16 %v2717
    %v2916 = vunpack.c.l.b16 %v2718
    %v2917 = vunpack.c.h.b16 %v2718
    %v2918 = vunpack.c.l.b16 %v2719
    %v2919 = vunpack.c.h.b16 %v2719
    %v2920 = vunpack.c.l.b16 %v2720
    %v2921 = vunpack.c.h.b16 %v2720
    %v2922 = vunpack.c.l.b16 %v2721
    %v2923 = vunpack.c.h.b16 %v2721
    %v2924 = vunpack.c.l.b16 %v2722
    %v2925 = vunpack.c.h.b16 %v2722
    %v2926 = vunpack.c.l.b16 %v2723
    %v2927 = vunpack.c.h.b16 %v2723
    %v2928 = vunpack.c.l.b16 %v2724
    %v2929 = vunpack.c.h.b16 %v2724
    %v2930 = vunpack.c.l.b16 %v2725
    %v2931 = vunpack.c.h.b16 %v2725
    %v2932 = vunpack.c.l.b16 %v2726
    %v2933 = vunpack.c.h.b16 %v2726
    %v2934 = vunpack.c.l.b16 %v2727
    %v2935 = vunpack.c.h.b16 %v2727
    %v2936 = vunpack.c.l.b16 %v2728
    %v2937 = vunpack.c.h.b16 %v2728
    %v2938 = vunpack.c.l.b16 %v2729
    %v2939 = vunpack.c.h.b16 %v2729
    %v2940 = vunpack.c.l.b16 %v2730
    %v2941 = vunpack.c.h.b16 %v2730
    %v2942 = vunpack.c.l.b16 %v2731
    %v2943 = vunpack.c.h.b16 %v2731
    %v2944 = vunpack.c.l.b16 %v2732
    %v2945 = vunpack.c.h.b16 %v2732
    %v2946 = vunpack.c.l.b16 %v2733
    %v2947 = vunpack.c.h.b16 %v2733
    %v2948 = vunpack.c.l.b16 %v2734
    %v2949 = vunpack.c.h.b16 %v2734
    %v2950 = vunpack.c.l.b16 %v2735
    %v2951 = vunpack.c.h.b16 %v2735
    %v2952 = vunpack.c.l.b16 %v2736
    %v2953 = vunpack.c.h.b16 %v2736
    %v2954 = vunpack.c.l.b16 %v2737
    %v2955 = vunpack.c.h.b16 %v2737
    %v2956 = vunpack.c.l.b16 %v2738
    %v2957 = vunpack.c.h.b16 %v2738
    %v2958 = vunpack.c.l.b16 %v2739
    %v2959 = vunpack.c.h.b16 %v2739
    %v2960 = vunpack.c.l.b16 %v2740
    %v2961 = vunpack.c.h.b16 %v2740
    %v2962 = vunpack.c.l.b16 %v2741
    %v2963 = vunpack.c.h.b16 %v2741
    %v2964 = vunpack.c.l.b16 %v2742
    %v2965 = vunpack.c.h.b16 %v2742
    %v2966 = vunpack.c.l.b16 %v2743
    %v2967 = vunpack.c.h.b16 %v2743
    %v2968 = vunpack.c.l.b16 %v2744
    %v2969 = vunpack.c.h.b16 %v2744
    %v2970 = vunpack.c.l.b16 %v2745
    %v2971 = vunpack.c.h.b16 %v2745
    %v2972 = vunpack.c.l.b16 %v2746
    %v2973 = vunpack.c.h.b16 %v2746
    %v2974 = vunpack.c.l.b16 %v2747
    %v2975 = vunpack.c.h.b16 %v2747
    %v2976 = vunpack.c.l.b16 %v2748
    %v2977 = vunpack.c.h.b16 %v2748
    %v2978 = vunpack.c.l.b16 %v2749
    %v2979 = vunpack.c.h.b16 %v2749
    %v2980 = vunpack.c.l.b16 %v2750
    %v2981 = vunpack.c.h.b16 %v2750
    %v2982 = vunpack.c.l.b16 %v2751
    %v2983 = vunpack.c.h.b16 %v2751
    %v2984 = vunpack.c.l.b16 %v2752
    %v2985 = vunpack.c.h.b16 %v2752
    %v2986 = vunpack.c.l.b16 %v2753
    %v2987 = vunpack.c.h.b16 %v2753
    %v2988 = vpack.c.b16 %v2868, %v2860
    %v2989 = vpack.c.b16 %v2869, %v2861
    %v2990 = vpack.c.b16 %v2870, %v2862
    %v2991 = vpack.c.b16 %v2871, %v2863
    %v2992 = vpack.c.b16 %v2872, %v2864
    %v2993 = vpack.c.b16 %v2873, %v2865
    %v2994 = vpack.c.b16 %v2874, %v2866
    %v2995 = vpack.c.b16 %v2875, %v2867
    %v2996 = vpack.c.b16 %v2884, %v2876
    %v2997 = vpack.c.b16 %v2885, %v2877
    %v2998 = vpack.c.b16 %v2886, %v2878
    %v2999 = vpack.c.b16 %v2887, %v2879
    %v3000 = vpack.c.b16 %v2888, %v2880
    %v3001 = vpack.c.b16 %v2889, %v2881
    %v3002 = vpack.c.b16 %v2890, %v2882
    %v3003 = vpack.c.b16 %v2891, %v2883
    %v3004 = vpack.c.b16 %v2900, %v2892
    %v3005 = vpack.c.b16 %v2901, %v2893
    %v3006 = vpack.c.b16 %v2902, %v2894
    %v3007 = vpack.c.b16 %v2903, %v2895
    %v3008 = vpack.c.b16 %v2904, %v2896
    %v3009 = vpack.c.b16 %v2905, %v2897
    %v3010 = vpack.c.b16 %v2906, %v2898
    %v3011 = vpack.c.b16 %v2907, %v2899
    %v3012 = vpack.c.b16 %v2916, %v2908
    %v3013 = vpack.c.b16 %v2917, %v2909
    %v3014 = vpack.c.b16 %v2918, %v2910
    %v3015 = vpack.c.b16 %v2919, %v2911
    %v3016 = vpack.c.b16 %v2920, %v2912
    %v3017 = vpack.c.b16 %v2921, %v2913
    %v3018 = vpack.c.b16 %v2922, %v2914
    %v3019 = vpack.c.b16 %v2923, %v2915
    %v3020 = vpack.c.b16 %v2932, %v2924
    %v3021 = vpack.c.b16 %v2933, %v2925
    %v3022 = vpack.c.b16 %v2934, %v2926
    %v3023 = vpack.c.b16 %v2935, %v2927
    %v3024 = vpack.c.b16 %v2936, %v2928
    %v3025 = vpack.c.b16 %v2937, %v2929
    %v3026 = vpack.c.b16 %v2938, %v2930
    %v3027 = vpack.c.b16 %v2939, %v2931
    %v3028 = vpack.c.b16 %v2948, %v2940
    %v3029 = vpack.c.b16 %v2949, %v2941
    %v3030 = vpack.c.b16 %v2950, %v2942
    %v3031 = vpack.c.b16 %v2951, %v2943
    %v3032 = vpack.c.b16 %v2952, %v2944
    %v3033 = vpack.c.b16 %v2953, %v2945
    %v3034 = vpack.c.b16 %v2954, %v2946
    %v3035 = vpack.c.b16 %v2955, %v2947
    %v3036 = vpack.c.b16 %v2964, %v2956
    %v3037 = vpack.c.b16 %v2965, %v2957
    %v3038 = vpack.c.b16 %v2966, %v2958
    %v3039 = vpack.c.b16 %v2967, %v2959
    %v3040 = vpack.c.b16 %v2968, %v2960
    %v3041 = vpack.c.b16 %v2969, %v2961
    %v3042 = vpack.c.b16 %v2970, %v2962
    %v3043 = vpack.c.b16 %v2971, %v2963
    %v3044 = vpack.c.b16 %v2980, %v2972
    %v3045 = vpack.c.b16 %v2981, %v2973
    %v3046 = vpack.c.b16 %v2982, %v2974
    %v3047 = vpack.c.b16 %v2983, %v2975
    %v3048 = vpack.c.b16 %v2984, %v2976
    %v3049 = vpack.c.b16 %v2985, %v2977
    %v3050 = vpack.c.b16 %v2986, %v2978
    %v3051 = vpack.c.b16 %v2987, %v2979
    %3116 = vmatprep.subr.bf16.mxu0 %v2989
    %3117 = vmatpush1.bf16.msra.mxu0 %v2988
    %3118 = vmatprep.subr.bf16.mxu0 %v2997
    %3119 = vmatpush1.bf16.msra.mxu0 %v2996
    %3120 = vmatprep.subr.bf16.mxu0 %v3005
    %3121 = vmatpush1.bf16.msra.mxu0 %v3004
    %3122 = vmatprep.subr.bf16.mxu0 %v3013
    %3123 = vmatpush1.bf16.msra.mxu0 %v3012
    %3124 = vmatprep.subr.bf16.mxu0 %v3021
    %3125 = vmatpush1.bf16.msra.mxu0 %v3020
    %3126 = vmatprep.subr.bf16.mxu0 %v3029
    %3127 = vmatpush1.bf16.msra.mxu0 %v3028
    %3128 = vmatprep.subr.bf16.mxu0 %v3037
    %3129 = vmatpush1.bf16.msra.mxu0 %v3036
    %3130 = vmatprep.subr.bf16.mxu0 %v3045
    %3131 = vmatpush1.bf16.msra.mxu0 %v3044
    %3132 = vmatprep.subr.bf16.mxu0 0
    %3133 = vmatpush1.bf16.msra.mxu0 0
    %3134 = vmatprep.subr.bf16.mxu0 0
    %3135 = vmatpush1.bf16.msra.mxu0 0
    %3136 = vmatprep.subr.bf16.mxu0 0
    %3137 = vmatpush1.bf16.msra.mxu0 0
    %3138 = vmatprep.subr.bf16.mxu0 0
    %3139 = vmatpush1.bf16.msra.mxu0 0
    %3140 = vmatprep.subr.bf16.mxu0 0
    %3141 = vmatpush1.bf16.msra.mxu0 0
    %3142 = vmatprep.subr.bf16.mxu0 0
    %3143 = vmatpush1.bf16.msra.mxu0 0
    %3144 = vmatprep.subr.bf16.mxu0 0
    %3145 = vmatpush1.bf16.msra.mxu0 0
    %3146 = vmatprep.subr.bf16.mxu0 0
    %3147 = vmatpush1.bf16.msra.mxu0 0
    %3148 = vmatprep.mubr.bf16.mxu0 0
    %3149 = vmatmul.mubr.bf16.gmra.mrb[0].mxu0 %v2689
    %v3150 = vpop.f32.mrb[0].mxu0
    %v3151 = vadd.f32 %v2759, %v3150
    %v3152 = vpop.f32.mrb[0].mxu0
    %v3153 = vadd.f32 %v2763, %v3152
    %v3154 = vpop.f32.mrb[0].mxu0
    %v3155 = vadd.f32 %v2759, %v3154
    %v3156 = vpop.f32.mrb[0].mxu0
    %v3157 = vadd.f32 %v2763, %v3156
    %3158 = vdwg.mxu0
    %3159 = vmatprep.subr.bf16.mxu0 %v2991
    %3160 = vmatpush1.bf16.msra.mxu0 %v2990
    %3161 = vmatprep.subr.bf16.mxu0 %v2999
    %3162 = vmatpush1.bf16.msra.mxu0 %v2998
    %3163 = vmatprep.subr.bf16.mxu0 %v3007
    %3164 = vmatpush1.bf16.msra.mxu0 %v3006
    %3165 = vmatprep.subr.bf16.mxu0 %v3015
    %3166 = vmatpush1.bf16.msra.mxu0 %v3014
    %3167 = vmatprep.subr.bf16.mxu0 %v3023
    %3168 = vmatpush1.bf16.msra.mxu0 %v3022
    %3169 = vmatprep.subr.bf16.mxu0 %v3031
    %3170 = vmatpush1.bf16.msra.mxu0 %v3030
    %3171 = vmatprep.subr.bf16.mxu0 %v3039
    %3172 = vmatpush1.bf16.msra.mxu0 %v3038
    %3173 = vmatprep.subr.bf16.mxu0 %v3047
    %3174 = vmatpush1.bf16.msra.mxu0 %v3046
    %3175 = vmatprep.subr.bf16.mxu0 0
    %3176 = vmatpush1.bf16.msra.mxu0 0
    %3177 = vmatprep.subr.bf16.mxu0 0
    %3178 = vmatpush1.bf16.msra.mxu0 0
    %3179 = vmatprep.subr.bf16.mxu0 0
    %3180 = vmatpush1.bf16.msra.mxu0 0
    %3181 = vmatprep.subr.bf16.mxu0 0
    %3182 = vmatpush1.bf16.msra.mxu0 0
    %3183 = vmatprep.subr.bf16.mxu0 0
    %3184 = vmatpush1.bf16.msra.mxu0 0
    %3185 = vmatprep.subr.bf16.mxu0 0
    %3186 = vmatpush1.bf16.msra.mxu0 0
    %3187 = vmatprep.subr.bf16.mxu0 0
    %3188 = vmatpush1.bf16.msra.mxu0 0
    %3189 = vmatprep.subr.bf16.mxu0 0
    %3190 = vmatpush1.bf16.msra.mxu0 0
    %3191 = vmatprep.mubr.bf16.mxu0 0
    %3192 = vmatmul.mubr.bf16.gmra.mrb[0].mxu0 %v2689
    %v3193 = vpop.f32.mrb[0].mxu0
    %v3194 = vadd.f32 %v2767, %v3193
    %v3195 = vpop.f32.mrb[0].mxu0
    %v3196 = vadd.f32 %v2771, %v3195
    %v3197 = vpop.f32.mrb[0].mxu0
    %v3198 = vadd.f32 %v2767, %v3197
    %v3199 = vpop.f32.mrb[0].mxu0
    %v3200 = vadd.f32 %v2771, %v3199
    %3201 = vdwg.mxu0
    %3202 = vmatprep.subr.bf16.mxu0 %v2993
    %3203 = vmatpush1.bf16.msra.mxu0 %v2992
    %3204 = vmatprep.subr.bf16.mxu0 %v3001
    %3205 = vmatpush1.bf16.msra.mxu0 %v3000
    %3206 = vmatprep.subr.bf16.mxu0 %v3009
    %3207 = vmatpush1.bf16.msra.mxu0 %v3008
    %3208 = vmatprep.subr.bf16.mxu0 %v3017
    %3209 = vmatpush1.bf16.msra.mxu0 %v3016
    %3210 = vmatprep.subr.bf16.mxu0 %v3025
    %3211 = vmatpush1.bf16.msra.mxu0 %v3024
    %3212 = vmatprep.subr.bf16.mxu0 %v3033
    %3213 = vmatpush1.bf16.msra.mxu0 %v3032
    %3214 = vmatprep.subr.bf16.mxu0 %v3041
    %3215 = vmatpush1.bf16.msra.mxu0 %v3040
    %3216 = vmatprep.subr.bf16.mxu0 %v3049
    %3217 = vmatpush1.bf16.msra.mxu0 %v3048
    %3218 = vmatprep.subr.bf16.mxu0 0
    %3219 = vmatpush1.bf16.msra.mxu0 0
    %3220 = vmatprep.subr.bf16.mxu0 0
    %3221 = vmatpush1.bf16.msra.mxu0 0
    %3222 = vmatprep.subr.bf16.mxu0 0
    %3223 = vmatpush1.bf16.msra.mxu0 0
    %3224 = vmatprep.subr.bf16.mxu0 0
    %3225 = vmatpush1.bf16.msra.mxu0 0
    %3226 = vmatprep.subr.bf16.mxu0 0
    %3227 = vmatpush1.bf16.msra.mxu0 0
    %3228 = vmatprep.subr.bf16.mxu0 0
    %3229 = vmatpush1.bf16.msra.mxu0 0
    %3230 = vmatprep.subr.bf16.mxu0 0
    %3231 = vmatpush1.bf16.msra.mxu0 0
    %3232 = vmatprep.subr.bf16.mxu0 0
    %3233 = vmatpush1.bf16.msra.mxu0 0
    %3234 = vmatprep.mubr.bf16.mxu0 0
    %3235 = vmatmul.mubr.bf16.gmra.mrb[0].mxu0 %v2689
    %v3236 = vpop.f32.mrb[0].mxu0
    %v3237 = vadd.f32 %v2775, %v3236
    %v3238 = vpop.f32.mrb[0].mxu0
    %v3239 = vadd.f32 %v2779, %v3238
    %v3240 = vpop.f32.mrb[0].mxu0
    %v3241 = vadd.f32 %v2775, %v3240
    %v3242 = vpop.f32.mrb[0].mxu0
    %v3243 = vadd.f32 %v2779, %v3242
    %3244 = vdwg.mxu0
    %3245 = vmatprep.subr.bf16.mxu0 %v2995
    %3246 = vmatpush1.bf16.msra.mxu0 %v2994
    %3247 = vmatprep.subr.bf16.mxu0 %v3003
    %3248 = vmatpush1.bf16.msra.mxu0 %v3002
    %3249 = vmatprep.subr.bf16.mxu0 %v3011
    %3250 = vmatpush1.bf16.msra.mxu0 %v3010
    %3251 = vmatprep.subr.bf16.mxu0 %v3019
    %3252 = vmatpush1.bf16.msra.mxu0 %v3018
    %3253 = vmatprep.subr.bf16.mxu0 %v3027
    %3254 = vmatpush1.bf16.msra.mxu0 %v3026
    %3255 = vmatprep.subr.bf16.mxu0 %v3035
    %3256 = vmatpush1.bf16.msra.mxu0 %v3034
    %3257 = vmatprep.subr.bf16.mxu0 %v3043
    %3258 = vmatpush1.bf16.msra.mxu0 %v3042
    %3259 = vmatprep.subr.bf16.mxu0 %v3051
    %3260 = vmatpush1.bf16.msra.mxu0 %v3050
    %3261 = vmatprep.subr.bf16.mxu0 0
    %3262 = vmatpush1.bf16.msra.mxu0 0
    %3263 = vmatprep.subr.bf16.mxu0 0
    %3264 = vmatpush1.bf16.msra.mxu0 0
    %3265 = vmatprep.subr.bf16.mxu0 0
    %3266 = vmatpush1.bf16.msra.mxu0 0
    %3267 = vmatprep.subr.bf16.mxu0 0
    %3268 = vmatpush1.bf16.msra.mxu0 0
    %3269 = vmatprep.subr.bf16.mxu0 0
    %3270 = vmatpush1.bf16.msra.mxu0 0
    %3271 = vmatprep.subr.bf16.mxu0 0
    %3272 = vmatpush1.bf16.msra.mxu0 0
    %3273 = vmatprep.subr.bf16.mxu0 0
    %3274 = vmatpush1.bf16.msra.mxu0 0
    %3275 = vmatprep.subr.bf16.mxu0 0
    %3276 = vmatpush1.bf16.msra.mxu0 0
    %3277 = vmatprep.mubr.bf16.mxu0 0
    %3278 = vmatmul.mubr.bf16.gmra.mrb[0].mxu0 %v2689
    %v3279 = vpop.f32.mrb[0].mxu0
    %v3280 = vadd.f32 %v2783, %v3279
    %v3281 = vpop.f32.mrb[0].mxu0
    %v3282 = vadd.f32 %v2787, %v3281
    %v3283 = vpop.f32.mrb[0].mxu0
    %v3284 = vadd.f32 %v2783, %v3283
    %v3285 = vpop.f32.mrb[0].mxu0
    %v3286 = vadd.f32 %v2787, %v3285
    %3287 = vdwg.mxu0
    %v3288 = vld [vmem:[#allocation25] sm:$0xff]
    %v3289 = vld [vmem:[#allocation25 + $0x8] sm:$0xff]
    %v3290 = vld [vmem:[#allocation25 + $0x10] sm:$0xff]
    %v3291 = vld [vmem:[#allocation25 + $0x18] sm:$0xff]
    %v3292 = vld [vmem:[#allocation25 + $0x20] sm:$0xff]
    %v3293 = vld [vmem:[#allocation25 + $0x28] sm:$0xff]
    %v3294 = vld [vmem:[#allocation25 + $0x30] sm:$0xff]
    %v3295 = vld [vmem:[#allocation25 + $0x38] sm:$0xff]
    %v3296 = vld [vmem:[#allocation25 + $0x40] sm:$0xff]
    %v3297 = vld [vmem:[#allocation25 + $0x48] sm:$0xff]
    %v3298 = vld [vmem:[#allocation25 + $0x50] sm:$0xff]
    %v3299 = vld [vmem:[#allocation25 + $0x58] sm:$0xff]
    %v3300 = vld [vmem:[#allocation25 + $0x60] sm:$0xff]
    %v3301 = vld [vmem:[#allocation25 + $0x68] sm:$0xff]
    %v3302 = vld [vmem:[#allocation25 + $0x70] sm:$0xff]
    %v3303 = vld [vmem:[#allocation25 + $0x78] sm:$0xff]
    %v3304 = vld [vmem:[#allocation25 + $0x80] sm:$0xff]
    %v3305 = vld [vmem:[#allocation25 + $0x88] sm:$0xff]
    %v3306 = vld [vmem:[#allocation25 + $0x90] sm:$0xff]
    %v3307 = vld [vmem:[#allocation25 + $0x98] sm:$0xff]
    %v3308 = vld [vmem:[#allocation25 + $0xa0] sm:$0xff]
    %v3309 = vld [vmem:[#allocation25 + $0xa8] sm:$0xff]
    %v3310 = vld [vmem:[#allocation25 + $0xb0] sm:$0xff]
    %v3311 = vld [vmem:[#allocation25 + $0xb8] sm:$0xff]
    %v3312 = vld [vmem:[#allocation25 + $0xc0] sm:$0xff]
    %v3313 = vld [vmem:[#allocation25 + $0xc8] sm:$0xff]
    %v3314 = vld [vmem:[#allocation25 + $0xd0] sm:$0xff]
    %v3315 = vld [vmem:[#allocation25 + $0xd8] sm:$0xff]
    %v3316 = vld [vmem:[#allocation25 + $0xe0] sm:$0xff]
    %v3317 = vld [vmem:[#allocation25 + $0xe8] sm:$0xff]
    %v3318 = vld [vmem:[#allocation25 + $0xf0] sm:$0xff]
    %v3319 = vld [vmem:[#allocation25 + $0xf8] sm:$0xff]
    %v3320 = vld [vmem:[#allocation25 + $0x100] sm:$0xff]
    %v3321 = vld [vmem:[#allocation25 + $0x108] sm:$0xff]
    %v3322 = vld [vmem:[#allocation25 + $0x110] sm:$0xff]
    %v3323 = vld [vmem:[#allocation25 + $0x118] sm:$0xff]
    %v3324 = vld [vmem:[#allocation25 + $0x120] sm:$0xff]
    %v3325 = vld [vmem:[#allocation25 + $0x128] sm:$0xff]
    %v3326 = vld [vmem:[#allocation25 + $0x130] sm:$0xff]
    %v3327 = vld [vmem:[#allocation25 + $0x138] sm:$0xff]
    %v3328 = vld [vmem:[#allocation25 + $0x140] sm:$0xff]
    %v3329 = vld [vmem:[#allocation25 + $0x148] sm:$0xff]
    %v3330 = vld [vmem:[#allocation25 + $0x150] sm:$0xff]
    %v3331 = vld [vmem:[#allocation25 + $0x158] sm:$0xff]
    %v3332 = vld [vmem:[#allocation25 + $0x160] sm:$0xff]
    %v3333 = vld [vmem:[#allocation25 + $0x168] sm:$0xff]
    %v3334 = vld [vmem:[#allocation25 + $0x170] sm:$0xff]
    %v3335 = vld [vmem:[#allocation25 + $0x178] sm:$0xff]
    %v3336 = vld [vmem:[#allocation25 + $0x180] sm:$0xff]
    %v3337 = vld [vmem:[#allocation25 + $0x188] sm:$0xff]
    %v3338 = vld [vmem:[#allocation25 + $0x190] sm:$0xff]
    %v3339 = vld [vmem:[#allocation25 + $0x198] sm:$0xff]
    %v3340 = vld [vmem:[#allocation25 + $0x1a0] sm:$0xff]
    %v3341 = vld [vmem:[#allocation25 + $0x1a8] sm:$0xff]
    %v3342 = vld [vmem:[#allocation25 + $0x1b0] sm:$0xff]
    %v3343 = vld [vmem:[#allocation25 + $0x1b8] sm:$0xff]
    %v3344 = vld [vmem:[#allocation25 + $0x1c0] sm:$0xff]
    %v3345 = vld [vmem:[#allocation25 + $0x1c8] sm:$0xff]
    %v3346 = vld [vmem:[#allocation25 + $0x1d0] sm:$0xff]
    %v3347 = vld [vmem:[#allocation25 + $0x1d8] sm:$0xff]
    %v3348 = vld [vmem:[#allocation25 + $0x1e0] sm:$0xff]
    %v3349 = vld [vmem:[#allocation25 + $0x1e8] sm:$0xff]
    %v3350 = vld [vmem:[#allocation25 + $0x1f0] sm:$0xff]
    %v3351 = vld [vmem:[#allocation25 + $0x1f8] sm:$0xff]
    %v3352 = vld [vmem:[%s43] sm:$0xff]
    %v3354 = vlaneseq
    %v3355 = vshrl.u32 %v3354, 7
    %v3356 = vsub.s32 0, %v3355
    %v3357 = vrot.slane %v3352, %v3356
    %v3358 = vlaneseq
    %v3359 = vshrl.u32 %v3358, 7
    %v3360 = vsub.s32 1, %v3359
    %v3361 = vrot.slane %v3352, %v3360
    %v3362 = vlaneseq
    %v3363 = vshrl.u32 %v3362, 7
    %v3364 = vsub.s32 2, %v3363
    %v3365 = vrot.slane %v3352, %v3364
    %v3366 = vlaneseq
    %v3367 = vshrl.u32 %v3366, 7
    %v3368 = vsub.s32 3, %v3367
    %v3369 = vrot.slane %v3352, %v3368
    %v3370 = vlaneseq
    %v3371 = vshrl.u32 %v3370, 7
    %v3372 = vsub.s32 4, %v3371
    %v3373 = vrot.slane %v3352, %v3372
    %v3374 = vlaneseq
    %v3375 = vshrl.u32 %v3374, 7
    %v3376 = vsub.s32 5, %v3375
    %v3377 = vrot.slane %v3352, %v3376
    %v3378 = vlaneseq
    %v3379 = vshrl.u32 %v3378, 7
    %v3380 = vsub.s32 6, %v3379
    %v3381 = vrot.slane %v3352, %v3380
    %v3382 = vlaneseq
    %v3383 = vshrl.u32 %v3382, 7
    %v3384 = vsub.s32 7, %v3383
    %v3385 = vrot.slane %v3352, %v3384
    %v3458 = vunpack.c.l.b16 %v3288
    %v3459 = vunpack.c.h.b16 %v3288
    %v3460 = vunpack.c.l.b16 %v3289
    %v3461 = vunpack.c.h.b16 %v3289
    %v3462 = vunpack.c.l.b16 %v3290
    %v3463 = vunpack.c.h.b16 %v3290
    %v3464 = vunpack.c.l.b16 %v3291
    %v3465 = vunpack.c.h.b16 %v3291
    %v3466 = vunpack.c.l.b16 %v3292
    %v3467 = vunpack.c.h.b16 %v3292
    %v3468 = vunpack.c.l.b16 %v3293
    %v3469 = vunpack.c.h.b16 %v3293
    %v3470 = vunpack.c.l.b16 %v3294
    %v3471 = vunpack.c.h.b16 %v3294
    %v3472 = vunpack.c.l.b16 %v3295
    %v3473 = vunpack.c.h.b16 %v3295
    %v3474 = vunpack.c.l.b16 %v3296
    %v3475 = vunpack.c.h.b16 %v3296
    %v3476 = vunpack.c.l.b16 %v3297
    %v3477 = vunpack.c.h.b16 %v3297
    %v3478 = vunpack.c.l.b16 %v3298
    %v3479 = vunpack.c.h.b16 %v3298
    %v3480 = vunpack.c.l.b16 %v3299
    %v3481 = vunpack.c.h.b16 %v3299
    %v3482 = vunpack.c.l.b16 %v3300
    %v3483 = vunpack.c.h.b16 %v3300
    %v3484 = vunpack.c.l.b16 %v3301
    %v3485 = vunpack.c.h.b16 %v3301
    %v3486 = vunpack.c.l.b16 %v3302
    %v3487 = vunpack.c.h.b16 %v3302
    %v3488 = vunpack.c.l.b16 %v3303
    %v3489 = vunpack.c.h.b16 %v3303
    %v3490 = vunpack.c.l.b16 %v3304
    %v3491 = vunpack.c.h.b16 %v3304
    %v3492 = vunpack.c.l.b16 %v3305
    %v3493 = vunpack.c.h.b16 %v3305
    %v3494 = vunpack.c.l.b16 %v3306
    %v3495 = vunpack.c.h.b16 %v3306
    %v3496 = vunpack.c.l.b16 %v3307
    %v3497 = vunpack.c.h.b16 %v3307
    %v3498 = vunpack.c.l.b16 %v3308
    %v3499 = vunpack.c.h.b16 %v3308
    %v3500 = vunpack.c.l.b16 %v3309
    %v3501 = vunpack.c.h.b16 %v3309
    %v3502 = vunpack.c.l.b16 %v3310
    %v3503 = vunpack.c.h.b16 %v3310
    %v3504 = vunpack.c.l.b16 %v3311
    %v3505 = vunpack.c.h.b16 %v3311
    %v3506 = vunpack.c.l.b16 %v3312
    %v3507 = vunpack.c.h.b16 %v3312
    %v3508 = vunpack.c.l.b16 %v3313
    %v3509 = vunpack.c.h.b16 %v3313
    %v3510 = vunpack.c.l.b16 %v3314
    %v3511 = vunpack.c.h.b16 %v3314
    %v3512 = vunpack.c.l.b16 %v3315
    %v3513 = vunpack.c.h.b16 %v3315
    %v3514 = vunpack.c.l.b16 %v3316
    %v3515 = vunpack.c.h.b16 %v3316
    %v3516 = vunpack.c.l.b16 %v3317
    %v3517 = vunpack.c.h.b16 %v3317
    %v3518 = vunpack.c.l.b16 %v3318
    %v3519 = vunpack.c.h.b16 %v3318
    %v3520 = vunpack.c.l.b16 %v3319
    %v3521 = vunpack.c.h.b16 %v3319
    %v3522 = vunpack.c.l.b16 %v3320
    %v3523 = vunpack.c.h.b16 %v3320
    %v3524 = vunpack.c.l.b16 %v3321
    %v3525 = vunpack.c.h.b16 %v3321
    %v3526 = vunpack.c.l.b16 %v3322
    %v3527 = vunpack.c.h.b16 %v3322
    %v3528 = vunpack.c.l.b16 %v3323
    %v3529 = vunpack.c.h.b16 %v3323
    %v3530 = vunpack.c.l.b16 %v3324
    %v3531 = vunpack.c.h.b16 %v3324
    %v3532 = vunpack.c.l.b16 %v3325
    %v3533 = vunpack.c.h.b16 %v3325
    %v3534 = vunpack.c.l.b16 %v3326
    %v3535 = vunpack.c.h.b16 %v3326
    %v3536 = vunpack.c.l.b16 %v3327
    %v3537 = vunpack.c.h.b16 %v3327
    %v3538 = vunpack.c.l.b16 %v3328
    %v3539 = vunpack.c.h.b16 %v3328
    %v3540 = vunpack.c.l.b16 %v3329
    %v3541 = vunpack.c.h.b16 %v3329
    %v3542 = vunpack.c.l.b16 %v3330
    %v3543 = vunpack.c.h.b16 %v3330
    %v3544 = vunpack.c.l.b16 %v3331
    %v3545 = vunpack.c.h.b16 %v3331
    %v3546 = vunpack.c.l.b16 %v3332
    %v3547 = vunpack.c.h.b16 %v3332
    %v3548 = vunpack.c.l.b16 %v3333
    %v3549 = vunpack.c.h.b16 %v3333
    %v3550 = vunpack.c.l.b16 %v3334
    %v3551 = vunpack.c.h.b16 %v3334
    %v3552 = vunpack.c.l.b16 %v3335
    %v3553 = vunpack.c.h.b16 %v3335
    %v3554 = vunpack.c.l.b16 %v3336
    %v3555 = vunpack.c.h.b16 %v3336
    %v3556 = vunpack.c.l.b16 %v3337
    %v3557 = vunpack.c.h.b16 %v3337
    %v3558 = vunpack.c.l.b16 %v3338
    %v3559 = vunpack.c.h.b16 %v3338
    %v3560 = vunpack.c.l.b16 %v3339
    %v3561 = vunpack.c.h.b16 %v3339
    %v3562 = vunpack.c.l.b16 %v3340
    %v3563 = vunpack.c.h.b16 %v3340
    %v3564 = vunpack.c.l.b16 %v3341
    %v3565 = vunpack.c.h.b16 %v3341
    %v3566 = vunpack.c.l.b16 %v3342
    %v3567 = vunpack.c.h.b16 %v3342
    %v3568 = vunpack.c.l.b16 %v3343
    %v3569 = vunpack.c.h.b16 %v3343
    %v3570 = vunpack.c.l.b16 %v3344
    %v3571 = vunpack.c.h.b16 %v3344
    %v3572 = vunpack.c.l.b16 %v3345
    %v3573 = vunpack.c.h.b16 %v3345
    %v3574 = vunpack.c.l.b16 %v3346
    %v3575 = vunpack.c.h.b16 %v3346
    %v3576 = vunpack.c.l.b16 %v3347
    %v3577 = vunpack.c.h.b16 %v3347
    %v3578 = vunpack.c.l.b16 %v3348
    %v3579 = vunpack.c.h.b16 %v3348
    %v3580 = vunpack.c.l.b16 %v3349
    %v3581 = vunpack.c.h.b16 %v3349
    %v3582 = vunpack.c.l.b16 %v3350
    %v3583 = vunpack.c.h.b16 %v3350
    %v3584 = vunpack.c.l.b16 %v3351
    %v3585 = vunpack.c.h.b16 %v3351
    %v3586 = vpack.c.b16 %v3466, %v3458
    %v3587 = vpack.c.b16 %v3467, %v3459
    %v3588 = vpack.c.b16 %v3468, %v3460
    %v3589 = vpack.c.b16 %v3469, %v3461
    %v3590 = vpack.c.b16 %v3470, %v3462
    %v3591 = vpack.c.b16 %v3471, %v3463
    %v3592 = vpack.c.b16 %v3472, %v3464
    %v3593 = vpack.c.b16 %v3473, %v3465
    %v3594 = vpack.c.b16 %v3482, %v3474
    %v3595 = vpack.c.b16 %v3483, %v3475
    %v3596 = vpack.c.b16 %v3484, %v3476
    %v3597 = vpack.c.b16 %v3485, %v3477
    %v3598 = vpack.c.b16 %v3486, %v3478
    %v3599 = vpack.c.b16 %v3487, %v3479
    %v3600 = vpack.c.b16 %v3488, %v3480
    %v3601 = vpack.c.b16 %v3489, %v3481
    %v3602 = vpack.c.b16 %v3498, %v3490
    %v3603 = vpack.c.b16 %v3499, %v3491
    %v3604 = vpack.c.b16 %v3500, %v3492
    %v3605 = vpack.c.b16 %v3501, %v3493
    %v3606 = vpack.c.b16 %v3502, %v3494
    %v3607 = vpack.c.b16 %v3503, %v3495
    %v3608 = vpack.c.b16 %v3504, %v3496
    %v3609 = vpack.c.b16 %v3505, %v3497
    %v3610 = vpack.c.b16 %v3514, %v3506
    %v3611 = vpack.c.b16 %v3515, %v3507
    %v3612 = vpack.c.b16 %v3516, %v3508
    %v3613 = vpack.c.b16 %v3517, %v3509
    %v3614 = vpack.c.b16 %v3518, %v3510
    %v3615 = vpack.c.b16 %v3519, %v3511
    %v3616 = vpack.c.b16 %v3520, %v3512
    %v3617 = vpack.c.b16 %v3521, %v3513
    %v3618 = vpack.c.b16 %v3530, %v3522
    %v3619 = vpack.c.b16 %v3531, %v3523
    %v3620 = vpack.c.b16 %v3532, %v3524
    %v3621 = vpack.c.b16 %v3533, %v3525
    %v3622 = vpack.c.b16 %v3534, %v3526
    %v3623 = vpack.c.b16 %v3535, %v3527
    %v3624 = vpack.c.b16 %v3536, %v3528
    %v3625 = vpack.c.b16 %v3537, %v3529
    %v3626 = vpack.c.b16 %v3546, %v3538
    %v3627 = vpack.c.b16 %v3547, %v3539
    %v3628 = vpack.c.b16 %v3548, %v3540
    %v3629 = vpack.c.b16 %v3549, %v3541
    %v3630 = vpack.c.b16 %v3550, %v3542
    %v3631 = vpack.c.b16 %v3551, %v3543
    %v3632 = vpack.c.b16 %v3552, %v3544
    %v3633 = vpack.c.b16 %v3553, %v3545
    %v3634 = vpack.c.b16 %v3562, %v3554
    %v3635 = vpack.c.b16 %v3563, %v3555
    %v3636 = vpack.c.b16 %v3564, %v3556
    %v3637 = vpack.c.b16 %v3565, %v3557
    %v3638 = vpack.c.b16 %v3566, %v3558
    %v3639 = vpack.c.b16 %v3567, %v3559
    %v3640 = vpack.c.b16 %v3568, %v3560
    %v3641 = vpack.c.b16 %v3569, %v3561
    %v3642 = vpack.c.b16 %v3578, %v3570
    %v3643 = vpack.c.b16 %v3579, %v3571
    %v3644 = vpack.c.b16 %v3580, %v3572
    %v3645 = vpack.c.b16 %v3581, %v3573
    %v3646 = vpack.c.b16 %v3582, %v3574
    %v3647 = vpack.c.b16 %v3583, %v3575
    %v3648 = vpack.c.b16 %v3584, %v3576
    %v3649 = vpack.c.b16 %v3585, %v3577
    %3714 = vmatprep.subr.bf16.mxu0 %v3587
    %3715 = vmatpush1.bf16.msra.mxu0 %v3586
    %3716 = vmatprep.subr.bf16.mxu0 %v3595
    %3717 = vmatpush1.bf16.msra.mxu0 %v3594
    %3718 = vmatprep.subr.bf16.mxu0 %v3603
    %3719 = vmatpush1.bf16.msra.mxu0 %v3602
    %3720 = vmatprep.subr.bf16.mxu0 %v3611
    %3721 = vmatpush1.bf16.msra.mxu0 %v3610
    %3722 = vmatprep.subr.bf16.mxu0 %v3619
    %3723 = vmatpush1.bf16.msra.mxu0 %v3618
    %3724 = vmatprep.subr.bf16.mxu0 %v3627
    %3725 = vmatpush1.bf16.msra.mxu0 %v3626
    %3726 = vmatprep.subr.bf16.mxu0 %v3635
    %3727 = vmatpush1.bf16.msra.mxu0 %v3634
    %3728 = vmatprep.subr.bf16.mxu0 %v3643
    %3729 = vmatpush1.bf16.msra.mxu0 %v3642
    %3730 = vmatprep.subr.bf16.mxu0 0
    %3731 = vmatpush1.bf16.msra.mxu0 0
    %3732 = vmatprep.subr.bf16.mxu0 0
    %3733 = vmatpush1.bf16.msra.mxu0 0
    %3734 = vmatprep.subr.bf16.mxu0 0
    %3735 = vmatpush1.bf16.msra.mxu0 0
    %3736 = vmatprep.subr.bf16.mxu0 0
    %3737 = vmatpush1.bf16.msra.mxu0 0
    %3738 = vmatprep.subr.bf16.mxu0 0
    %3739 = vmatpush1.bf16.msra.mxu0 0
    %3740 = vmatprep.subr.bf16.mxu0 0
    %3741 = vmatpush1.bf16.msra.mxu0 0
    %3742 = vmatprep.subr.bf16.mxu0 0
    %3743 = vmatpush1.bf16.msra.mxu0 0
    %3744 = vmatprep.subr.bf16.mxu0 0
    %3745 = vmatpush1.bf16.msra.mxu0 0
    %3746 = vmatprep.mubr.bf16.mxu0 0
    %3747 = vmatmul.mubr.bf16.gmra.mrb[0].mxu0 %v2689
    %v3748 = vpop.f32.mrb[0].mxu0
    %v3749 = vadd.f32 %v3357, %v3748
    %v3750 = vpop.f32.mrb[0].mxu0
    %v3751 = vadd.f32 %v3361, %v3750
    %v3752 = vpop.f32.mrb[0].mxu0
    %v3753 = vadd.f32 %v3357, %v3752
    %v3754 = vpop.f32.mrb[0].mxu0
    %v3755 = vadd.f32 %v3361, %v3754
    %3756 = vdwg.mxu0
    %3757 = vmatprep.subr.bf16.mxu0 %v3589
    %3758 = vmatpush1.bf16.msra.mxu0 %v3588
    %3759 = vmatprep.subr.bf16.mxu0 %v3597
    %3760 = vmatpush1.bf16.msra.mxu0 %v3596
    %3761 = vmatprep.subr.bf16.mxu0 %v3605
    %3762 = vmatpush1.bf16.msra.mxu0 %v3604
    %3763 = vmatprep.subr.bf16.mxu0 %v3613
    %3764 = vmatpush1.bf16.msra.mxu0 %v3612
    %3765 = vmatprep.subr.bf16.mxu0 %v3621
    %3766 = vmatpush1.bf16.msra.mxu0 %v3620
    %3767 = vmatprep.subr.bf16.mxu0 %v3629
    %3768 = vmatpush1.bf16.msra.mxu0 %v3628
    %3769 = vmatprep.subr.bf16.mxu0 %v3637
    %3770 = vmatpush1.bf16.msra.mxu0 %v3636
    %3771 = vmatprep.subr.bf16.mxu0 %v3645
    %3772 = vmatpush1.bf16.msra.mxu0 %v3644
    %3773 = vmatprep.subr.bf16.mxu0 0
    %3774 = vmatpush1.bf16.msra.mxu0 0
    %3775 = vmatprep.subr.bf16.mxu0 0
    %3776 = vmatpush1.bf16.msra.mxu0 0
    %3777 = vmatprep.subr.bf16.mxu0 0
    %3778 = vmatpush1.bf16.msra.mxu0 0
    %3779 = vmatprep.subr.bf16.mxu0 0
    %3780 = vmatpush1.bf16.msra.mxu0 0
    %3781 = vmatprep.subr.bf16.mxu0 0
    %3782 = vmatpush1.bf16.msra.mxu0 0
    %3783 = vmatprep.subr.bf16.mxu0 0
    %3784 = vmatpush1.bf16.msra.mxu0 0
    %3785 = vmatprep.subr.bf16.mxu0 0
    %3786 = vmatpush1.bf16.msra.mxu0 0
    %3787 = vmatprep.subr.bf16.mxu0 0
    %3788 = vmatpush1.bf16.msra.mxu0 0
    %3789 = vmatprep.mubr.bf16.mxu0 0
    %3790 = vmatmul.mubr.bf16.gmra.mrb[0].mxu0 %v2689
    %v3791 = vpop.f32.mrb[0].mxu0
    %v3792 = vadd.f32 %v3365, %v3791
    %v3793 = vpop.f32.mrb[0].mxu0
    %v3794 = vadd.f32 %v3369, %v3793
    %v3795 = vpop.f32.mrb[0].mxu0
    %v3796 = vadd.f32 %v3365, %v3795
    %v3797 = vpop.f32.mrb[0].mxu0
    %v3798 = vadd.f32 %v3369, %v3797
    %3799 = vdwg.mxu0
    %3800 = vmatprep.subr.bf16.mxu0 %v3591
    %3801 = vmatpush1.bf16.msra.mxu0 %v3590
    %3802 = vmatprep.subr.bf16.mxu0 %v3599
    %3803 = vmatpush1.bf16.msra.mxu0 %v3598
    %3804 = vmatprep.subr.bf16.mxu0 %v3607
    %3805 = vmatpush1.bf16.msra.mxu0 %v3606
    %3806 = vmatprep.subr.bf16.mxu0 %v3615
    %3807 = vmatpush1.bf16.msra.mxu0 %v3614
    %3808 = vmatprep.subr.bf16.mxu0 %v3623
    %3809 = vmatpush1.bf16.msra.mxu0 %v3622
    %3810 = vmatprep.subr.bf16.mxu0 %v3631
    %3811 = vmatpush1.bf16.msra.mxu0 %v3630
    %3812 = vmatprep.subr.bf16.mxu0 %v3639
    %3813 = vmatpush1.bf16.msra.mxu0 %v3638
    %3814 = vmatprep.subr.bf16.mxu0 %v3647
    %3815 = vmatpush1.bf16.msra.mxu0 %v3646
    %3816 = vmatprep.subr.bf16.mxu0 0
    %3817 = vmatpush1.bf16.msra.mxu0 0
    %3818 = vmatprep.subr.bf16.mxu0 0
    %3819 = vmatpush1.bf16.msra.mxu0 0
    %3820 = vmatprep.subr.bf16.mxu0 0
    %3821 = vmatpush1.bf16.msra.mxu0 0
    %3822 = vmatprep.subr.bf16.mxu0 0
    %3823 = vmatpush1.bf16.msra.mxu0 0
    %3824 = vmatprep.subr.bf16.mxu0 0
    %3825 = vmatpush1.bf16.msra.mxu0 0
    %3826 = vmatprep.subr.bf16.mxu0 0
    %3827 = vmatpush1.bf16.msra.mxu0 0
    %3828 = vmatprep.subr.bf16.mxu0 0
    %3829 = vmatpush1.bf16.msra.mxu0 0
    %3830 = vmatprep.subr.bf16.mxu0 0
    %3831 = vmatpush1.bf16.msra.mxu0 0
    %3832 = vmatprep.mubr.bf16.mxu0 0
    %3833 = vmatmul.mubr.bf16.gmra.mrb[0].mxu0 %v2689
    %v3834 = vpop.f32.mrb[0].mxu0
    %v3835 = vadd.f32 %v3373, %v3834
    %v3836 = vpop.f32.mrb[0].mxu0
    %v3837 = vadd.f32 %v3377, %v3836
    %v3838 = vpop.f32.mrb[0].mxu0
    %v3839 = vadd.f32 %v3373, %v3838
    %v3840 = vpop.f32.mrb[0].mxu0
    %v3841 = vadd.f32 %v3377, %v3840
    %3842 = vdwg.mxu0
    %3843 = vmatprep.subr.bf16.mxu0 %v3593
    %3844 = vmatpush1.bf16.msra.mxu0 %v3592
    %3845 = vmatprep.subr.bf16.mxu0 %v3601
    %3846 = vmatpush1.bf16.msra.mxu0 %v3600
    %3847 = vmatprep.subr.bf16.mxu0 %v3609
    %3848 = vmatpush1.bf16.msra.mxu0 %v3608
    %3849 = vmatprep.subr.bf16.mxu0 %v3617
    %3850 = vmatpush1.bf16.msra.mxu0 %v3616
    %3851 = vmatprep.subr.bf16.mxu0 %v3625
    %3852 = vmatpush1.bf16.msra.mxu0 %v3624
    %3853 = vmatprep.subr.bf16.mxu0 %v3633
    %3854 = vmatpush1.bf16.msra.mxu0 %v3632
    %3855 = vmatprep.subr.bf16.mxu0 %v3641
    %3856 = vmatpush1.bf16.msra.mxu0 %v3640
    %3857 = vmatprep.subr.bf16.mxu0 %v3649
    %3858 = vmatpush1.bf16.msra.mxu0 %v3648
    %3859 = vmatprep.subr.bf16.mxu0 0
    %3860 = vmatpush1.bf16.msra.mxu0 0
    %3861 = vmatprep.subr.bf16.mxu0 0
    %3862 = vmatpush1.bf16.msra.mxu0 0
    %3863 = vmatprep.subr.bf16.mxu0 0
    %3864 = vmatpush1.bf16.msra.mxu0 0
    %3865 = vmatprep.subr.bf16.mxu0 0
    %3866 = vmatpush1.bf16.msra.mxu0 0
    %3867 = vmatprep.subr.bf16.mxu0 0
    %3868 = vmatpush1.bf16.msra.mxu0 0
    %3869 = vmatprep.subr.bf16.mxu0 0
    %3870 = vmatpush1.bf16.msra.mxu0 0
    %3871 = vmatprep.subr.bf16.mxu0 0
    %3872 = vmatpush1.bf16.msra.mxu0 0
    %3873 = vmatprep.subr.bf16.mxu0 0
    %3874 = vmatpush1.bf16.msra.mxu0 0
    %3875 = vmatprep.mubr.bf16.mxu0 0
    %3876 = vmatmul.mubr.bf16.gmra.mrb[0].mxu0 %v2689
    %v3877 = vpop.f32.mrb[0].mxu0
    %v3878 = vadd.f32 %v3381, %v3877
    %v3879 = vpop.f32.mrb[0].mxu0
    %v3880 = vadd.f32 %v3385, %v3879
    %v3881 = vpop.f32.mrb[0].mxu0
    %v3882 = vadd.f32 %v3381, %v3881
    %v3883 = vpop.f32.mrb[0].mxu0
    %v3884 = vadd.f32 %v3385, %v3883
    %3885 = vdwg.mxu0
    %v3886 = vmul.f32 %v3151, %v3749
    %v3887 = vmul.f32 %v3153, %v3751
    %v3888 = vmul.f32 %v3194, %v3792
    %v3889 = vmul.f32 %v3196, %v3794
    %v3890 = vmul.f32 %v3237, %v3835
    %v3891 = vmul.f32 %v3239, %v3837
    %v3892 = vmul.f32 %v3280, %v3878
    %v3893 = vmul.f32 %v3282, %v3880
    %v3894 = vmul.f32 %v3155, %v3753
    %v3895 = vmul.f32 %v3157, %v3755
    %v3896 = vmul.f32 %v3198, %v3796
    %v3897 = vmul.f32 %v3200, %v3798
    %v3898 = vmul.f32 %v3241, %v3839
    %v3899 = vmul.f32 %v3243, %v3841
    %v3900 = vmul.f32 %v3284, %v3882
    %v3901 = vmul.f32 %v3286, %v3884
    %v3902 = vpack.c.bf16 %v3894, %v3886
    %v3903 = vpack.c.bf16 %v3895, %v3887
    %v3904 = vpack.c.bf16 %v3896, %v3888
    %v3905 = vpack.c.bf16 %v3897, %v3889
    %v3906 = vpack.c.bf16 %v3898, %v3890
    %v3907 = vpack.c.bf16 %v3899, %v3891
    %v3908 = vpack.c.bf16 %v3900, %v3892
    %v3909 = vpack.c.bf16 %v3901, %v3893
    %v3910 = vld [vmem:[#allocation26] sm:$0xf]
    %v3911 = vld [vmem:[#allocation26 + $0x4] sm:$0xf]
    %v3912 = vld [vmem:[#allocation26 + $0x8] sm:$0xf]
    %v3913 = vld [vmem:[#allocation26 + $0xc] sm:$0xf]
    %v3914 = vld [vmem:[#allocation26 + $0x10] sm:$0xf]
    %v3915 = vld [vmem:[#allocation26 + $0x14] sm:$0xf]
    %v3916 = vld [vmem:[#allocation26 + $0x18] sm:$0xf]
    %v3917 = vld [vmem:[#allocation26 + $0x1c] sm:$0xf]
    %v3918 = vld [vmem:[#allocation26 + $0x20] sm:$0xf]
    %v3919 = vld [vmem:[#allocation26 + $0x24] sm:$0xf]
    %v3920 = vld [vmem:[#allocation26 + $0x28] sm:$0xf]
    %v3921 = vld [vmem:[#allocation26 + $0x2c] sm:$0xf]
    %v3922 = vld [vmem:[#allocation26 + $0x30] sm:$0xf]
    %v3923 = vld [vmem:[#allocation26 + $0x34] sm:$0xf]
    %v3924 = vld [vmem:[#allocation26 + $0x38] sm:$0xf]
    %v3925 = vld [vmem:[#allocation26 + $0x3c] sm:$0xf]
    %v3926 = vld [vmem:[#allocation26 + $0x40] sm:$0xf]
    %v3927 = vld [vmem:[#allocation26 + $0x44] sm:$0xf]
    %v3928 = vld [vmem:[#allocation26 + $0x48] sm:$0xf]
    %v3929 = vld [vmem:[#allocation26 + $0x4c] sm:$0xf]
    %v3930 = vld [vmem:[#allocation26 + $0x50] sm:$0xf]
    %v3931 = vld [vmem:[#allocation26 + $0x54] sm:$0xf]
    %v3932 = vld [vmem:[#allocation26 + $0x58] sm:$0xf]
    %v3933 = vld [vmem:[#allocation26 + $0x5c] sm:$0xf]
    %v3934 = vld [vmem:[#allocation26 + $0x60] sm:$0xf]
    %v3935 = vld [vmem:[#allocation26 + $0x64] sm:$0xf]
    %v3936 = vld [vmem:[#allocation26 + $0x68] sm:$0xf]
    %v3937 = vld [vmem:[#allocation26 + $0x6c] sm:$0xf]
    %v3938 = vld [vmem:[#allocation26 + $0x70] sm:$0xf]
    %v3939 = vld [vmem:[#allocation26 + $0x74] sm:$0xf]
    %v3940 = vld [vmem:[#allocation26 + $0x78] sm:$0xf]
    %v3941 = vld [vmem:[#allocation26 + $0x7c] sm:$0xf]
    %v3942 = vld [vmem:[#allocation26 + $0x80] sm:$0xf]
    %v3943 = vld [vmem:[#allocation26 + $0x84] sm:$0xf]
    %v3944 = vld [vmem:[#allocation26 + $0x88] sm:$0xf]
    %v3945 = vld [vmem:[#allocation26 + $0x8c] sm:$0xf]
    %v3946 = vld [vmem:[#allocation26 + $0x90] sm:$0xf]
    %v3947 = vld [vmem:[#allocation26 + $0x94] sm:$0xf]
    %v3948 = vld [vmem:[#allocation26 + $0x98] sm:$0xf]
    %v3949 = vld [vmem:[#allocation26 + $0x9c] sm:$0xf]
    %v3950 = vld [vmem:[#allocation26 + $0xa0] sm:$0xf]
    %v3951 = vld [vmem:[#allocation26 + $0xa4] sm:$0xf]
    %v3952 = vld [vmem:[#allocation26 + $0xa8] sm:$0xf]
    %v3953 = vld [vmem:[#allocation26 + $0xac] sm:$0xf]
    %v3954 = vld [vmem:[#allocation26 + $0xb0] sm:$0xf]
    %v3955 = vld [vmem:[#allocation26 + $0xb4] sm:$0xf]
    %v3956 = vld [vmem:[#allocation26 + $0xb8] sm:$0xf]
    %v3957 = vld [vmem:[#allocation26 + $0xbc] sm:$0xf]
    %v3958 = vld [vmem:[#allocation26 + $0xc0] sm:$0xf]
    %v3959 = vld [vmem:[#allocation26 + $0xc4] sm:$0xf]
    %v3960 = vld [vmem:[#allocation26 + $0xc8] sm:$0xf]
    %v3961 = vld [vmem:[#allocation26 + $0xcc] sm:$0xf]
    %v3962 = vld [vmem:[#allocation26 + $0xd0] sm:$0xf]
    %v3963 = vld [vmem:[#allocation26 + $0xd4] sm:$0xf]
    %v3964 = vld [vmem:[#allocation26 + $0xd8] sm:$0xf]
    %v3965 = vld [vmem:[#allocation26 + $0xdc] sm:$0xf]
    %v3966 = vld [vmem:[#allocation26 + $0xe0] sm:$0xf]
    %v3967 = vld [vmem:[#allocation26 + $0xe4] sm:$0xf]
    %v3968 = vld [vmem:[#allocation26 + $0xe8] sm:$0xf]
    %v3969 = vld [vmem:[#allocation26 + $0xec] sm:$0xf]
    %v3970 = vld [vmem:[#allocation26 + $0xf0] sm:$0xf]
    %v3971 = vld [vmem:[#allocation26 + $0xf4] sm:$0xf]
    %v3972 = vld [vmem:[#allocation26 + $0xf8] sm:$0xf]
    %v3973 = vld [vmem:[#allocation26 + $0xfc] sm:$0xf]
    %v3974 = vld [vmem:[#allocation26 + $0x100] sm:$0xf]
    %v3975 = vld [vmem:[#allocation26 + $0x104] sm:$0xf]
    %v3976 = vld [vmem:[#allocation26 + $0x108] sm:$0xf]
    %v3977 = vld [vmem:[#allocation26 + $0x10c] sm:$0xf]
    %v3978 = vld [vmem:[#allocation26 + $0x110] sm:$0xf]
    %v3979 = vld [vmem:[#allocation26 + $0x114] sm:$0xf]
    %v3980 = vld [vmem:[#allocation26 + $0x118] sm:$0xf]
    %v3981 = vld [vmem:[#allocation26 + $0x11c] sm:$0xf]
    %v3982 = vld [vmem:[#allocation26 + $0x120] sm:$0xf]
    %v3983 = vld [vmem:[#allocation26 + $0x124] sm:$0xf]
    %v3984 = vld [vmem:[#allocation26 + $0x128] sm:$0xf]
    %v3985 = vld [vmem:[#allocation26 + $0x12c] sm:$0xf]
    %v3986 = vld [vmem:[#allocation26 + $0x130] sm:$0xf]
    %v3987 = vld [vmem:[#allocation26 + $0x134] sm:$0xf]
    %v3988 = vld [vmem:[#allocation26 + $0x138] sm:$0xf]
    %v3989 = vld [vmem:[#allocation26 + $0x13c] sm:$0xf]
    %v3990 = vld [vmem:[#allocation26 + $0x140] sm:$0xf]
    %v3991 = vld [vmem:[#allocation26 + $0x144] sm:$0xf]
    %v3992 = vld [vmem:[#allocation26 + $0x148] sm:$0xf]
    %v3993 = vld [vmem:[#allocation26 + $0x14c] sm:$0xf]
    %v3994 = vld [vmem:[#allocation26 + $0x150] sm:$0xf]
    %v3995 = vld [vmem:[#allocation26 + $0x154] sm:$0xf]
    %v3996 = vld [vmem:[#allocation26 + $0x158] sm:$0xf]
    %v3997 = vld [vmem:[#allocation26 + $0x15c] sm:$0xf]
    %v3998 = vld [vmem:[#allocation26 + $0x160] sm:$0xf]
    %v3999 = vld [vmem:[#allocation26 + $0x164] sm:$0xf]
    %v4000 = vld [vmem:[#allocation26 + $0x168] sm:$0xf]
    %v4001 = vld [vmem:[#allocation26 + $0x16c] sm:$0xf]
    %v4002 = vld [vmem:[#allocation26 + $0x170] sm:$0xf]
    %v4003 = vld [vmem:[#allocation26 + $0x174] sm:$0xf]
    %v4004 = vld [vmem:[#allocation26 + $0x178] sm:$0xf]
    %v4005 = vld [vmem:[#allocation26 + $0x17c] sm:$0xf]
    %v4006 = vld [vmem:[#allocation26 + $0x180] sm:$0xf]
    %v4007 = vld [vmem:[#allocation26 + $0x184] sm:$0xf]
    %v4008 = vld [vmem:[#allocation26 + $0x188] sm:$0xf]
    %v4009 = vld [vmem:[#allocation26 + $0x18c] sm:$0xf]
    %v4010 = vld [vmem:[#allocation26 + $0x190] sm:$0xf]
    %v4011 = vld [vmem:[#allocation26 + $0x194] sm:$0xf]
    %v4012 = vld [vmem:[#allocation26 + $0x198] sm:$0xf]
    %v4013 = vld [vmem:[#allocation26 + $0x19c] sm:$0xf]
    %v4014 = vld [vmem:[#allocation26 + $0x1a0] sm:$0xf]
    %v4015 = vld [vmem:[#allocation26 + $0x1a4] sm:$0xf]
    %v4016 = vld [vmem:[#allocation26 + $0x1a8] sm:$0xf]
    %v4017 = vld [vmem:[#allocation26 + $0x1ac] sm:$0xf]
    %v4018 = vld [vmem:[#allocation26 + $0x1b0] sm:$0xf]
    %v4019 = vld [vmem:[#allocation26 + $0x1b4] sm:$0xf]
    %v4020 = vld [vmem:[#allocation26 + $0x1b8] sm:$0xf]
    %v4021 = vld [vmem:[#allocation26 + $0x1bc] sm:$0xf]
    %v4022 = vld [vmem:[#allocation26 + $0x1c0] sm:$0xf]
    %v4023 = vld [vmem:[#allocation26 + $0x1c4] sm:$0xf]
    %v4024 = vld [vmem:[#allocation26 + $0x1c8] sm:$0xf]
    %v4025 = vld [vmem:[#allocation26 + $0x1cc] sm:$0xf]
    %v4026 = vld [vmem:[#allocation26 + $0x1d0] sm:$0xf]
    %v4027 = vld [vmem:[#allocation26 + $0x1d4] sm:$0xf]
    %v4028 = vld [vmem:[#allocation26 + $0x1d8] sm:$0xf]
    %v4029 = vld [vmem:[#allocation26 + $0x1dc] sm:$0xf]
    %v4030 = vld [vmem:[#allocation26 + $0x1e0] sm:$0xf]
    %v4031 = vld [vmem:[#allocation26 + $0x1e4] sm:$0xf]
    %v4032 = vld [vmem:[#allocation26 + $0x1e8] sm:$0xf]
    %v4033 = vld [vmem:[#allocation26 + $0x1ec] sm:$0xf]
    %v4034 = vld [vmem:[#allocation26 + $0x1f0] sm:$0xf]
    %v4035 = vld [vmem:[#allocation26 + $0x1f4] sm:$0xf]
    %v4036 = vld [vmem:[#allocation26 + $0x1f8] sm:$0xf]
    %v4037 = vld [vmem:[#allocation26 + $0x1fc] sm:$0xf]
    %v4166 = vunpack.c.l.b16 %v3910
    %v4167 = vunpack.c.l.b16 %v3911
    %v4168 = vunpack.c.l.b16 %v3912
    %v4169 = vunpack.c.l.b16 %v3913
    %v4170 = vunpack.c.l.b16 %v3914
    %v4171 = vunpack.c.l.b16 %v3915
    %v4172 = vunpack.c.l.b16 %v3916
    %v4173 = vunpack.c.l.b16 %v3917
    %v4174 = vunpack.c.l.b16 %v3918
    %v4175 = vunpack.c.l.b16 %v3919
    %v4176 = vunpack.c.l.b16 %v3920
    %v4177 = vunpack.c.l.b16 %v3921
    %v4178 = vunpack.c.l.b16 %v3922
    %v4179 = vunpack.c.l.b16 %v3923
    %v4180 = vunpack.c.l.b16 %v3924
    %v4181 = vunpack.c.l.b16 %v3925
    %v4182 = vunpack.c.l.b16 %v3926
    %v4183 = vunpack.c.l.b16 %v3927
    %v4184 = vunpack.c.l.b16 %v3928
    %v4185 = vunpack.c.l.b16 %v3929
    %v4186 = vunpack.c.l.b16 %v3930
    %v4187 = vunpack.c.l.b16 %v3931
    %v4188 = vunpack.c.l.b16 %v3932
    %v4189 = vunpack.c.l.b16 %v3933
    %v4190 = vunpack.c.l.b16 %v3934
    %v4191 = vunpack.c.l.b16 %v3935
    %v4192 = vunpack.c.l.b16 %v3936
    %v4193 = vunpack.c.l.b16 %v3937
    %v4194 = vunpack.c.l.b16 %v3938
    %v4195 = vunpack.c.l.b16 %v3939
    %v4196 = vunpack.c.l.b16 %v3940
    %v4197 = vunpack.c.l.b16 %v3941
    %v4198 = vunpack.c.l.b16 %v3942
    %v4199 = vunpack.c.l.b16 %v3943
    %v4200 = vunpack.c.l.b16 %v3944
    %v4201 = vunpack.c.l.b16 %v3945
    %v4202 = vunpack.c.l.b16 %v3946
    %v4203 = vunpack.c.l.b16 %v3947
    %v4204 = vunpack.c.l.b16 %v3948
    %v4205 = vunpack.c.l.b16 %v3949
    %v4206 = vunpack.c.l.b16 %v3950
    %v4207 = vunpack.c.l.b16 %v3951
    %v4208 = vunpack.c.l.b16 %v3952
    %v4209 = vunpack.c.l.b16 %v3953
    %v4210 = vunpack.c.l.b16 %v3954
    %v4211 = vunpack.c.l.b16 %v3955
    %v4212 = vunpack.c.l.b16 %v3956
    %v4213 = vunpack.c.l.b16 %v3957
    %v4214 = vunpack.c.l.b16 %v3958
    %v4215 = vunpack.c.l.b16 %v3959
    %v4216 = vunpack.c.l.b16 %v3960
    %v4217 = vunpack.c.l.b16 %v3961
    %v4218 = vunpack.c.l.b16 %v3962
    %v4219 = vunpack.c.l.b16 %v3963
    %v4220 = vunpack.c.l.b16 %v3964
    %v4221 = vunpack.c.l.b16 %v3965
    %v4222 = vunpack.c.l.b16 %v3966
    %v4223 = vunpack.c.l.b16 %v3967
    %v4224 = vunpack.c.l.b16 %v3968
    %v4225 = vunpack.c.l.b16 %v3969
    %v4226 = vunpack.c.l.b16 %v3970
    %v4227 = vunpack.c.l.b16 %v3971
    %v4228 = vunpack.c.l.b16 %v3972
    %v4229 = vunpack.c.l.b16 %v3973
    %v4230 = vunpack.c.l.b16 %v3974
    %v4231 = vunpack.c.l.b16 %v3975
    %v4232 = vunpack.c.l.b16 %v3976
    %v4233 = vunpack.c.l.b16 %v3977
    %v4234 = vunpack.c.l.b16 %v3978
    %v4235 = vunpack.c.l.b16 %v3979
    %v4236 = vunpack.c.l.b16 %v3980
    %v4237 = vunpack.c.l.b16 %v3981
    %v4238 = vunpack.c.l.b16 %v3982
    %v4239 = vunpack.c.l.b16 %v3983
    %v4240 = vunpack.c.l.b16 %v3984
    %v4241 = vunpack.c.l.b16 %v3985
    %v4242 = vunpack.c.l.b16 %v3986
    %v4243 = vunpack.c.l.b16 %v3987
    %v4244 = vunpack.c.l.b16 %v3988
    %v4245 = vunpack.c.l.b16 %v3989
    %v4246 = vunpack.c.l.b16 %v3990
    %v4247 = vunpack.c.l.b16 %v3991
    %v4248 = vunpack.c.l.b16 %v3992
    %v4249 = vunpack.c.l.b16 %v3993
    %v4250 = vunpack.c.l.b16 %v3994
    %v4251 = vunpack.c.l.b16 %v3995
    %v4252 = vunpack.c.l.b16 %v3996
    %v4253 = vunpack.c.l.b16 %v3997
    %v4254 = vunpack.c.l.b16 %v3998
    %v4255 = vunpack.c.l.b16 %v3999
    %v4256 = vunpack.c.l.b16 %v4000
    %v4257 = vunpack.c.l.b16 %v4001
    %v4258 = vunpack.c.l.b16 %v4002
    %v4259 = vunpack.c.l.b16 %v4003
    %v4260 = vunpack.c.l.b16 %v4004
    %v4261 = vunpack.c.l.b16 %v4005
    %v4262 = vunpack.c.l.b16 %v4006
    %v4263 = vunpack.c.l.b16 %v4007
    %v4264 = vunpack.c.l.b16 %v4008
    %v4265 = vunpack.c.l.b16 %v4009
    %v4266 = vunpack.c.l.b16 %v4010
    %v4267 = vunpack.c.l.b16 %v4011
    %v4268 = vunpack.c.l.b16 %v4012
    %v4269 = vunpack.c.l.b16 %v4013
    %v4270 = vunpack.c.l.b16 %v4014
    %v4271 = vunpack.c.l.b16 %v4015
    %v4272 = vunpack.c.l.b16 %v4016
    %v4273 = vunpack.c.l.b16 %v4017
    %v4274 = vunpack.c.l.b16 %v4018
    %v4275 = vunpack.c.l.b16 %v4019
    %v4276 = vunpack.c.l.b16 %v4020
    %v4277 = vunpack.c.l.b16 %v4021
    %v4278 = vunpack.c.l.b16 %v4022
    %v4279 = vunpack.c.l.b16 %v4023
    %v4280 = vunpack.c.l.b16 %v4024
    %v4281 = vunpack.c.l.b16 %v4025
    %v4282 = vunpack.c.l.b16 %v4026
    %v4283 = vunpack.c.l.b16 %v4027
    %v4284 = vunpack.c.l.b16 %v4028
    %v4285 = vunpack.c.l.b16 %v4029
    %v4286 = vunpack.c.l.b16 %v4030
    %v4287 = vunpack.c.l.b16 %v4031
    %v4288 = vunpack.c.l.b16 %v4032
    %v4289 = vunpack.c.l.b16 %v4033
    %v4290 = vunpack.c.l.b16 %v4034
    %v4291 = vunpack.c.l.b16 %v4035
    %v4292 = vunpack.c.l.b16 %v4036
    %v4293 = vunpack.c.l.b16 %v4037
    %v4294 = vpack.c.b16 %v4167, %v4166
    %v4295 = vpack.c.b16 %v4169, %v4168
    %v4296 = vpack.c.b16 %v4171, %v4170
    %v4297 = vpack.c.b16 %v4173, %v4172
    %v4298 = vpack.c.b16 %v4175, %v4174
    %v4299 = vpack.c.b16 %v4177, %v4176
    %v4300 = vpack.c.b16 %v4179, %v4178
    %v4301 = vpack.c.b16 %v4181, %v4180
    %v4302 = vpack.c.b16 %v4183, %v4182
    %v4303 = vpack.c.b16 %v4185, %v4184
    %v4304 = vpack.c.b16 %v4187, %v4186
    %v4305 = vpack.c.b16 %v4189, %v4188
    %v4306 = vpack.c.b16 %v4191, %v4190
    %v4307 = vpack.c.b16 %v4193, %v4192
    %v4308 = vpack.c.b16 %v4195, %v4194
    %v4309 = vpack.c.b16 %v4197, %v4196
    %v4310 = vpack.c.b16 %v4199, %v4198
    %v4311 = vpack.c.b16 %v4201, %v4200
    %v4312 = vpack.c.b16 %v4203, %v4202
    %v4313 = vpack.c.b16 %v4205, %v4204
    %v4314 = vpack.c.b16 %v4207, %v4206
    %v4315 = vpack.c.b16 %v4209, %v4208
    %v4316 = vpack.c.b16 %v4211, %v4210
    %v4317 = vpack.c.b16 %v4213, %v4212
    %v4318 = vpack.c.b16 %v4215, %v4214
    %v4319 = vpack.c.b16 %v4217, %v4216
    %v4320 = vpack.c.b16 %v4219, %v4218
    %v4321 = vpack.c.b16 %v4221, %v4220
    %v4322 = vpack.c.b16 %v4223, %v4222
    %v4323 = vpack.c.b16 %v4225, %v4224
    %v4324 = vpack.c.b16 %v4227, %v4226
    %v4325 = vpack.c.b16 %v4229, %v4228
    %v4326 = vpack.c.b16 %v4231, %v4230
    %v4327 = vpack.c.b16 %v4233, %v4232
    %v4328 = vpack.c.b16 %v4235, %v4234
    %v4329 = vpack.c.b16 %v4237, %v4236
    %v4330 = vpack.c.b16 %v4239, %v4238
    %v4331 = vpack.c.b16 %v4241, %v4240
    %v4332 = vpack.c.b16 %v4243, %v4242
    %v4333 = vpack.c.b16 %v4245, %v4244
    %v4334 = vpack.c.b16 %v4247, %v4246
    %v4335 = vpack.c.b16 %v4249, %v4248
    %v4336 = vpack.c.b16 %v4251, %v4250
    %v4337 = vpack.c.b16 %v4253, %v4252
    %v4338 = vpack.c.b16 %v4255, %v4254
    %v4339 = vpack.c.b16 %v4257, %v4256
    %v4340 = vpack.c.b16 %v4259, %v4258
    %v4341 = vpack.c.b16 %v4261, %v4260
    %v4342 = vpack.c.b16 %v4263, %v4262
    %v4343 = vpack.c.b16 %v4265, %v4264
    %v4344 = vpack.c.b16 %v4267, %v4266
    %v4345 = vpack.c.b16 %v4269, %v4268
    %v4346 = vpack.c.b16 %v4271, %v4270
    %v4347 = vpack.c.b16 %v4273, %v4272
    %v4348 = vpack.c.b16 %v4275, %v4274
    %v4349 = vpack.c.b16 %v4277, %v4276
    %v4350 = vpack.c.b16 %v4279, %v4278
    %v4351 = vpack.c.b16 %v4281, %v4280
    %v4352 = vpack.c.b16 %v4283, %v4282
    %v4353 = vpack.c.b16 %v4285, %v4284
    %v4354 = vpack.c.b16 %v4287, %v4286
    %v4355 = vpack.c.b16 %v4289, %v4288
    %v4356 = vpack.c.b16 %v4291, %v4290
    %v4357 = vpack.c.b16 %v4293, %v4292
    %4422 = vmatprep.subr.bf16.mxu0 0
    %4423 = vmatpush1.bf16.msra.mxu0 %v4294
    %4424 = vmatprep.subr.bf16.mxu0 0
    %4425 = vmatpush1.bf16.msra.mxu0 %v4295
    %4426 = vmatprep.subr.bf16.mxu0 0
    %4427 = vmatpush1.bf16.msra.mxu0 %v4296
    %4428 = vmatprep.subr.bf16.mxu0 0
    %4429 = vmatpush1.bf16.msra.mxu0 %v4297
    %4430 = vmatprep.subr.bf16.mxu0 0
    %4431 = vmatpush1.bf16.msra.mxu0 %v4298
    %4432 = vmatprep.subr.bf16.mxu0 0
    %4433 = vmatpush1.bf16.msra.mxu0 %v4299
    %4434 = vmatprep.subr.bf16.mxu0 0
    %4435 = vmatpush1.bf16.msra.mxu0 %v4300
    %4436 = vmatprep.subr.bf16.mxu0 0
    %4437 = vmatpush1.bf16.msra.mxu0 %v4301
    %4438 = vmatprep.subr.bf16.mxu0 0
    %4439 = vmatpush1.bf16.msra.mxu0 %v4302
    %4440 = vmatprep.subr.bf16.mxu0 0
    %4441 = vmatpush1.bf16.msra.mxu0 %v4303
    %4442 = vmatprep.subr.bf16.mxu0 0
    %4443 = vmatpush1.bf16.msra.mxu0 %v4304
    %4444 = vmatprep.subr.bf16.mxu0 0
    %4445 = vmatpush1.bf16.msra.mxu0 %v4305
    %4446 = vmatprep.subr.bf16.mxu0 0
    %4447 = vmatpush1.bf16.msra.mxu0 %v4306
    %4448 = vmatprep.subr.bf16.mxu0 0
    %4449 = vmatpush1.bf16.msra.mxu0 %v4307
    %4450 = vmatprep.subr.bf16.mxu0 0
    %4451 = vmatpush1.bf16.msra.mxu0 %v4308
    %4452 = vmatprep.subr.bf16.mxu0 0
    %4453 = vmatpush1.bf16.msra.mxu0 %v4309
    %4454 = vmatprep.mubr.bf16.mxu0 %v3903
    %4455 = vmatmul.mubr.bf16.gmra.mrb[0].mxu0 %v3902
    %v4456 = vpop.f32.mrb[0].mxu0
    %v4457 = vadd.f32 0.0, %v4456
    %v4458 = vpop.f32.mrb[0].mxu0
    %v4459 = vpop.f32.mrb[0].mxu0
    %v4460 = vadd.f32 0.0, %v4459
    %v4461 = vpop.f32.mrb[0].mxu0
    %4462 = vdwg.mxu0
    %4463 = vmatprep.subr.bf16.mxu0 0
    %4464 = vmatpush1.bf16.msra.mxu0 %v4310
    %4465 = vmatprep.subr.bf16.mxu0 0
    %4466 = vmatpush1.bf16.msra.mxu0 %v4311
    %4467 = vmatprep.subr.bf16.mxu0 0
    %4468 = vmatpush1.bf16.msra.mxu0 %v4312
    %4469 = vmatprep.subr.bf16.mxu0 0
    %4470 = vmatpush1.bf16.msra.mxu0 %v4313
    %4471 = vmatprep.subr.bf16.mxu0 0
    %4472 = vmatpush1.bf16.msra.mxu0 %v4314
    %4473 = vmatprep.subr.bf16.mxu0 0
    %4474 = vmatpush1.bf16.msra.mxu0 %v4315
    %4475 = vmatprep.subr.bf16.mxu0 0
    %4476 = vmatpush1.bf16.msra.mxu0 %v4316
    %4477 = vmatprep.subr.bf16.mxu0 0
    %4478 = vmatpush1.bf16.msra.mxu0 %v4317
    %4479 = vmatprep.subr.bf16.mxu0 0
    %4480 = vmatpush1.bf16.msra.mxu0 %v4318
    %4481 = vmatprep.subr.bf16.mxu0 0
    %4482 = vmatpush1.bf16.msra.mxu0 %v4319
    %4483 = vmatprep.subr.bf16.mxu0 0
    %4484 = vmatpush1.bf16.msra.mxu0 %v4320
    %4485 = vmatprep.subr.bf16.mxu0 0
    %4486 = vmatpush1.bf16.msra.mxu0 %v4321
    %4487 = vmatprep.subr.bf16.mxu0 0
    %4488 = vmatpush1.bf16.msra.mxu0 %v4322
    %4489 = vmatprep.subr.bf16.mxu0 0
    %4490 = vmatpush1.bf16.msra.mxu0 %v4323
    %4491 = vmatprep.subr.bf16.mxu0 0
    %4492 = vmatpush1.bf16.msra.mxu0 %v4324
    %4493 = vmatprep.subr.bf16.mxu0 0
    %4494 = vmatpush1.bf16.msra.mxu0 %v4325
    %4495 = vmatprep.mubr.bf16.mxu0 %v3905
    %4496 = vmatmul.mubr.bf16.gmra.mrb[0].mxu0 %v3904
    %v4497 = vpop.f32.mrb[0].mxu0
    %v4498 = vadd.f32 %v4457, %v4497
    %v4499 = vpop.f32.mrb[0].mxu0
    %v4500 = vpop.f32.mrb[0].mxu0
    %v4501 = vadd.f32 %v4460, %v4500
    %v4502 = vpop.f32.mrb[0].mxu0
    %4503 = vdwg.mxu0
    %4504 = vmatprep.subr.bf16.mxu0 0
    %4505 = vmatpush1.bf16.msra.mxu0 %v4326
    %4506 = vmatprep.subr.bf16.mxu0 0
    %4507 = vmatpush1.bf16.msra.mxu0 %v4327
    %4508 = vmatprep.subr.bf16.mxu0 0
    %4509 = vmatpush1.bf16.msra.mxu0 %v4328
    %4510 = vmatprep.subr.bf16.mxu0 0
    %4511 = vmatpush1.bf16.msra.mxu0 %v4329
    %4512 = vmatprep.subr.bf16.mxu0 0
    %4513 = vmatpush1.bf16.msra.mxu0 %v4330
    %4514 = vmatprep.subr.bf16.mxu0 0
    %4515 = vmatpush1.bf16.msra.mxu0 %v4331
    %4516 = vmatprep.subr.bf16.mxu0 0
    %4517 = vmatpush1.bf16.msra.mxu0 %v4332
    %4518 = vmatprep.subr.bf16.mxu0 0
    %4519 = vmatpush1.bf16.msra.mxu0 %v4333
    %4520 = vmatprep.subr.bf16.mxu0 0
    %4521 = vmatpush1.bf16.msra.mxu0 %v4334
    %4522 = vmatprep.subr.bf16.mxu0 0
    %4523 = vmatpush1.bf16.msra.mxu0 %v4335
    %4524 = vmatprep.subr.bf16.mxu0 0
    %4525 = vmatpush1.bf16.msra.mxu0 %v4336
    %4526 = vmatprep.subr.bf16.mxu0 0
    %4527 = vmatpush1.bf16.msra.mxu0 %v4337
    %4528 = vmatprep.subr.bf16.mxu0 0
    %4529 = vmatpush1.bf16.msra.mxu0 %v4338
    %4530 = vmatprep.subr.bf16.mxu0 0
    %4531 = vmatpush1.bf16.msra.mxu0 %v4339
    %4532 = vmatprep.subr.bf16.mxu0 0
    %4533 = vmatpush1.bf16.msra.mxu0 %v4340
    %4534 = vmatprep.subr.bf16.mxu0 0
    %4535 = vmatpush1.bf16.msra.mxu0 %v4341
    %4536 = vmatprep.mubr.bf16.mxu0 %v3907
    %4537 = vmatmul.mubr.bf16.gmra.mrb[0].mxu0 %v3906
    %v4538 = vpop.f32.mrb[0].mxu0
    %v4539 = vadd.f32 %v4498, %v4538
    %v4540 = vpop.f32.mrb[0].mxu0
    %v4541 = vpop.f32.mrb[0].mxu0
    %v4542 = vadd.f32 %v4501, %v4541
    %v4543 = vpop.f32.mrb[0].mxu0
    %4544 = vdwg.mxu0
    %4545 = vmatprep.subr.bf16.mxu0 0
    %4546 = vmatpush1.bf16.msra.mxu0 %v4342
    %4547 = vmatprep.subr.bf16.mxu0 0
    %4548 = vmatpush1.bf16.msra.mxu0 %v4343
    %4549 = vmatprep.subr.bf16.mxu0 0
    %4550 = vmatpush1.bf16.msra.mxu0 %v4344
    %4551 = vmatprep.subr.bf16.mxu0 0
    %4552 = vmatpush1.bf16.msra.mxu0 %v4345
    %4553 = vmatprep.subr.bf16.mxu0 0
    %4554 = vmatpush1.bf16.msra.mxu0 %v4346
    %4555 = vmatprep.subr.bf16.mxu0 0
    %4556 = vmatpush1.bf16.msra.mxu0 %v4347
    %4557 = vmatprep.subr.bf16.mxu0 0
    %4558 = vmatpush1.bf16.msra.mxu0 %v4348
    %4559 = vmatprep.subr.bf16.mxu0 0
    %4560 = vmatpush1.bf16.msra.mxu0 %v4349
    %4561 = vmatprep.subr.bf16.mxu0 0
    %4562 = vmatpush1.bf16.msra.mxu0 %v4350
    %4563 = vmatprep.subr.bf16.mxu0 0
    %4564 = vmatpush1.bf16.msra.mxu0 %v4351
    %4565 = vmatprep.subr.bf16.mxu0 0
    %4566 = vmatpush1.bf16.msra.mxu0 %v4352
    %4567 = vmatprep.subr.bf16.mxu0 0
    %4568 = vmatpush1.bf16.msra.mxu0 %v4353
    %4569 = vmatprep.subr.bf16.mxu0 0
    %4570 = vmatpush1.bf16.msra.mxu0 %v4354
    %4571 = vmatprep.subr.bf16.mxu0 0
    %4572 = vmatpush1.bf16.msra.mxu0 %v4355
    %4573 = vmatprep.subr.bf16.mxu0 0
    %4574 = vmatpush1.bf16.msra.mxu0 %v4356
    %4575 = vmatprep.subr.bf16.mxu0 0
    %4576 = vmatpush1.bf16.msra.mxu0 %v4357
    %4577 = vmatprep.mubr.bf16.mxu0 %v3909
    %4578 = vmatmul.mubr.bf16.gmra.mrb[0].mxu0 %v3908
    %v4579 = vpop.f32.mrb[0].mxu0
    %v4580 = vadd.f32 %v4539, %v4579
    %v4581 = vpop.f32.mrb[0].mxu0
    %v4582 = vpop.f32.mrb[0].mxu0
    %v4583 = vadd.f32 %v4542, %v4582
    %v4584 = vpop.f32.mrb[0].mxu0
    %4585 = vdwg.mxu0
    %v4586 = vld [vmem:[%s51] sm:$0xff]
    %v4587 = vld [vmem:[%s51 + $0x8] sm:$0xff]
    %v4588 = vld [vmem:[%s51 + $0x10] sm:$0xff]
    %v4589 = vld [vmem:[%s51 + $0x18] sm:$0xff]
    %v4590 = vld [vmem:[%s51 + $0x20] sm:$0xff]
    %v4591 = vld [vmem:[%s51 + $0x28] sm:$0xff]
    %v4592 = vld [vmem:[%s51 + $0x30] sm:$0xff]
    %v4593 = vld [vmem:[%s51 + $0x38] sm:$0xff]
    %v4594 = vld [vmem:[%s51 + $0x40] sm:$0xff]
    %v4595 = vld [vmem:[%s51 + $0x48] sm:$0xff]
    %v4596 = vld [vmem:[%s51 + $0x50] sm:$0xff]
    %v4597 = vld [vmem:[%s51 + $0x58] sm:$0xff]
    %v4598 = vld [vmem:[%s51 + $0x60] sm:$0xff]
    %v4599 = vld [vmem:[%s51 + $0x68] sm:$0xff]
    %v4600 = vld [vmem:[%s51 + $0x70] sm:$0xff]
    %v4601 = vld [vmem:[%s51 + $0x78] sm:$0xff]
    %4602 = vmatprep.subr.mxu0 0.0
    %4603 = vmatpush1.msra.mxu0 %v4586
    %4604 = vmatprep.subr.mxu0 0.0
    %4605 = vmatpush1.msra.mxu0 %v4587
    %4606 = vmatprep.subr.mxu0 0.0
    %4607 = vmatpush1.msra.mxu0 %v4588
    %4608 = vmatprep.subr.mxu0 0.0
    %4609 = vmatpush1.msra.mxu0 %v4589
    %4610 = vmatprep.subr.mxu0 0.0
    %4611 = vmatpush1.msra.mxu0 %v4590
    %4612 = vmatprep.subr.mxu0 0.0
    %4613 = vmatpush1.msra.mxu0 %v4591
    %4614 = vmatprep.subr.mxu0 0.0
    %4615 = vmatpush1.msra.mxu0 %v4592
    %4616 = vmatprep.subr.mxu0 0.0
    %4617 = vmatpush1.msra.mxu0 %v4593
    %4618 = vmatprep.subr.mxu0 0.0
    %4619 = vmatpush1.msra.mxu0 %v4594
    %4620 = vmatprep.subr.mxu0 0.0
    %4621 = vmatpush1.msra.mxu0 %v4595
    %4622 = vmatprep.subr.mxu0 0.0
    %4623 = vmatpush1.msra.mxu0 %v4596
    %4624 = vmatprep.subr.mxu0 0.0
    %4625 = vmatpush1.msra.mxu0 %v4597
    %4626 = vmatprep.subr.mxu0 0.0
    %4627 = vmatpush1.msra.mxu0 %v4598
    %4628 = vmatprep.subr.mxu0 0.0
    %4629 = vmatpush1.msra.mxu0 %v4599
    %4630 = vmatprep.subr.mxu0 0.0
    %4631 = vmatpush1.msra.mxu0 %v4600
    %4632 = vmatprep.subr.mxu0 0.0
    %4633 = vmatpush1.msra.mxu0 %v4601
    %4634 = vmatprep.subr.mxu0 0.0
    %4635 = vmatpush1.msra.mxu0 0.0
    %4636 = vmatprep.subr.mxu0 0.0
    %4637 = vmatpush1.msra.mxu0 0.0
    %4638 = vmatprep.subr.mxu0 0.0
    %4639 = vmatpush1.msra.mxu0 0.0
    %4640 = vmatprep.subr.mxu0 0.0
    %4641 = vmatpush1.msra.mxu0 0.0
    %4642 = vmatprep.subr.mxu0 0.0
    %4643 = vmatpush1.msra.mxu0 0.0
    %4644 = vmatprep.subr.mxu0 0.0
    %4645 = vmatpush1.msra.mxu0 0.0
    %4646 = vmatprep.subr.mxu0 0.0
    %4647 = vmatpush1.msra.mxu0 0.0
    %4648 = vmatprep.subr.mxu0 0.0
    %4649 = vmatpush1.msra.mxu0 0.0
    %4650 = vmatprep.subr.mxu0 0.0
    %4651 = vmatpush1.msra.mxu0 0.0
    %4652 = vmatprep.subr.mxu0 0.0
    %4653 = vmatpush1.msra.mxu0 0.0
    %4654 = vmatprep.subr.mxu0 0.0
    %4655 = vmatpush1.msra.mxu0 0.0
    %4656 = vmatprep.subr.mxu0 0.0
    %4657 = vmatpush1.msra.mxu0 0.0
    %4658 = vmatprep.subr.mxu0 0.0
    %4659 = vmatpush1.msra.mxu0 0.0
    %4660 = vmatprep.subr.mxu0 0.0
    %4661 = vmatpush1.msra.mxu0 0.0
    %4662 = vmatprep.subr.mxu0 0.0
    %4663 = vmatpush1.msra.mxu0 0.0
    %4664 = vmatprep.subr.mxu0 0.0
    %4665 = vmatpush1.msra.mxu0 0.0
    %4666 = vmatprep.mubr.f32.mxu0 0.0
    %4667 = vmatmul.mubr.f32.gmra.mrb[0].mxu0 %v4580
    %v4668 = vpop.f32.mrb[0].mxu0
    %v4669 = vadd.f32 0.0, %v4668
    %v4670 = vpop.f32.mrb[0].mxu0
    %4671 = vmatprep.mubr.f32.mxu0 0.0
    %4672 = vmatmul.mubr.f32.gmra.mrb[0].mxu0 %v4583
    %v4673 = vpop.f32.mrb[0].mxu0
    %v4674 = vadd.f32 0.0, %v4673
    %v4675 = vpop.f32.mrb[0].mxu0
    %4676 = vdwg.mxu0
    %v4677 = vmul.f32 %v4669, %v4669
    %v4678 = vmul.f32 %v4674, %v4674
    %v4679 = vmul.f32 %v4669, %v4677
    %v4680 = vmul.f32 %v4674, %v4678
    %v4681 = vmul.f32 %v4679, 0.044715
    %v4682 = vmul.f32 %v4680, 0.044715
    %v4683 = vadd.f32 %v4669, %v4681
    %v4684 = vadd.f32 %v4674, %v4682
    %v4685 = vmul.f32 %v4683, 0.7978846
    %v4686 = vmul.f32 %v4684, 0.7978846
    %v4687 = vtanh.pop %v4685
    %v4688 = vtanh.pop %v4686
    %v4689 = vadd.f32 %v4687, 1.0
    %v4690 = vadd.f32 %v4688, 1.0
    %v4691 = vmul.f32 %v4689, 0.5
    %v4692 = vmul.f32 %v4690, 0.5
    %v4693 = vmul.f32 %v4669, %v4691
    %v4694 = vmul.f32 %v4674, %v4692
    %v4695 = vld [vmem:[%s53] sm:$0xff]
    %v4697 = vsel %vm444, %v4693, 0
    %v4700 = vsel %vm444, %v4694, 0
    %4702 = vmatprep.subr.mxu0 0.0
    %4703 = vmatpush1.msra.mxu0 %v4695
    %4704 = vmatprep.subr.mxu0 0.0
    %4705 = vmatpush1.msra.mxu0 0.0
    %4706 = vmatprep.subr.mxu0 0.0
    %4707 = vmatpush1.msra.mxu0 0.0
    %4708 = vmatprep.subr.mxu0 0.0
    %4709 = vmatpush1.msra.mxu0 0.0
    %4710 = vmatprep.subr.mxu0 0.0
    %4711 = vmatpush1.msra.mxu0 0.0
    %4712 = vmatprep.subr.mxu0 0.0
    %4713 = vmatpush1.msra.mxu0 0.0
    %4714 = vmatprep.subr.mxu0 0.0
    %4715 = vmatpush1.msra.mxu0 0.0
    %4716 = vmatprep.subr.mxu0 0.0
    %4717 = vmatpush1.msra.mxu0 0.0
    %4718 = vmatprep.subr.mxu0 0.0
    %4719 = vmatpush1.msra.mxu0 0.0
    %4720 = vmatprep.subr.mxu0 0.0
    %4721 = vmatpush1.msra.mxu0 0.0
    %4722 = vmatprep.subr.mxu0 0.0
    %4723 = vmatpush1.msra.mxu0 0.0
    %4724 = vmatprep.subr.mxu0 0.0
    %4725 = vmatpush1.msra.mxu0 0.0
    %4726 = vmatprep.subr.mxu0 0.0
    %4727 = vmatpush1.msra.mxu0 0.0
    %4728 = vmatprep.subr.mxu0 0.0
    %4729 = vmatpush1.msra.mxu0 0.0
    %4730 = vmatprep.subr.mxu0 0.0
    %4731 = vmatpush1.msra.mxu0 0.0
    %4732 = vmatprep.subr.mxu0 0.0
    %4733 = vmatpush1.msra.mxu0 0.0
    %4734 = vmatprep.subr.mxu0 0.0
    %4735 = vmatpush1.msra.mxu0 0.0
    %4736 = vmatprep.subr.mxu0 0.0
    %4737 = vmatpush1.msra.mxu0 0.0
    %4738 = vmatprep.subr.mxu0 0.0
    %4739 = vmatpush1.msra.mxu0 0.0
    %4740 = vmatprep.subr.mxu0 0.0
    %4741 = vmatpush1.msra.mxu0 0.0
    %4742 = vmatprep.subr.mxu0 0.0
    %4743 = vmatpush1.msra.mxu0 0.0
    %4744 = vmatprep.subr.mxu0 0.0
    %4745 = vmatpush1.msra.mxu0 0.0
    %4746 = vmatprep.subr.mxu0 0.0
    %4747 = vmatpush1.msra.mxu0 0.0
    %4748 = vmatprep.subr.mxu0 0.0
    %4749 = vmatpush1.msra.mxu0 0.0
    %4750 = vmatprep.subr.mxu0 0.0
    %4751 = vmatpush1.msra.mxu0 0.0
    %4752 = vmatprep.subr.mxu0 0.0
    %4753 = vmatpush1.msra.mxu0 0.0
    %4754 = vmatprep.subr.mxu0 0.0
    %4755 = vmatpush1.msra.mxu0 0.0
    %4756 = vmatprep.subr.mxu0 0.0
    %4757 = vmatpush1.msra.mxu0 0.0
    %4758 = vmatprep.subr.mxu0 0.0
    %4759 = vmatpush1.msra.mxu0 0.0
    %4760 = vmatprep.subr.mxu0 0.0
    %4761 = vmatpush1.msra.mxu0 0.0
    %4762 = vmatprep.subr.mxu0 0.0
    %4763 = vmatpush1.msra.mxu0 0.0
    %4764 = vmatprep.subr.mxu0 0.0
    %4765 = vmatpush1.msra.mxu0 0.0
    %4766 = vmatprep.mubr.f32.mxu0 0.0
    %4767 = vmatmul.mubr.f32.gmra.mrb[0].mxu0 %v4697
    %v4768 = vpop.f32.mrb[0].mxu0
    %v4769 = vadd.f32 0.0, %v4768
    %v4770 = vpop.f32.mrb[0].mxu0
    %4771 = vmatprep.mubr.f32.mxu0 0.0
    %4772 = vmatmul.mubr.f32.gmra.mrb[0].mxu0 %v4700
    %v4773 = vpop.f32.mrb[0].mxu0
    %v4774 = vadd.f32 0.0, %v4773
    %v4775 = vpop.f32.mrb[0].mxu0
    %4776 = vdwg.mxu0
    %v4777 = vld [vmem:[%s45] sm:$0xf]
    %v4778 = vld [vmem:[%s45 + $0x4] sm:$0xf]
    %v4779 = vld [vmem:[%s45 + $0x8] sm:$0xf]
    %v4780 = vld [vmem:[%s45 + $0xc] sm:$0xf]
    %v4781 = vld [vmem:[%s45 + $0x10] sm:$0xf]
    %v4782 = vld [vmem:[%s45 + $0x14] sm:$0xf]
    %v4783 = vld [vmem:[%s45 + $0x18] sm:$0xf]
    %v4784 = vld [vmem:[%s45 + $0x1c] sm:$0xf]
    %v4785 = vld [vmem:[%s45 + $0x20] sm:$0xf]
    %v4786 = vld [vmem:[%s45 + $0x24] sm:$0xf]
    %v4787 = vld [vmem:[%s45 + $0x28] sm:$0xf]
    %v4788 = vld [vmem:[%s45 + $0x2c] sm:$0xf]
    %v4789 = vld [vmem:[%s45 + $0x30] sm:$0xf]
    %v4790 = vld [vmem:[%s45 + $0x34] sm:$0xf]
    %v4791 = vld [vmem:[%s45 + $0x38] sm:$0xf]
    %v4792 = vld [vmem:[%s45 + $0x3c] sm:$0xf]
    %v4793 = vld [vmem:[%s47] sm:$0x1]
    %v4795 = vlaneseq
    %v4796 = vshrl.u32 %v4795, 7
    %v4797 = vsub.s32 0, %v4796
    %v4798 = vrot.slane %v4793, %v4797
    %v4816 = vunpack.c.l.b16 %v4777
    %v4817 = vunpack.c.l.b16 %v4778
    %v4818 = vunpack.c.l.b16 %v4779
    %v4819 = vunpack.c.l.b16 %v4780
    %v4820 = vunpack.c.l.b16 %v4781
    %v4821 = vunpack.c.l.b16 %v4782
    %v4822 = vunpack.c.l.b16 %v4783
    %v4823 = vunpack.c.l.b16 %v4784
    %v4824 = vunpack.c.l.b16 %v4785
    %v4825 = vunpack.c.l.b16 %v4786
    %v4826 = vunpack.c.l.b16 %v4787
    %v4827 = vunpack.c.l.b16 %v4788
    %v4828 = vunpack.c.l.b16 %v4789
    %v4829 = vunpack.c.l.b16 %v4790
    %v4830 = vunpack.c.l.b16 %v4791
    %v4831 = vunpack.c.l.b16 %v4792
    %v4832 = vpack.c.b16 %v4817, %v4816
    %v4833 = vpack.c.b16 %v4819, %v4818
    %v4834 = vpack.c.b16 %v4821, %v4820
    %v4835 = vpack.c.b16 %v4823, %v4822
    %v4836 = vpack.c.b16 %v4825, %v4824
    %v4837 = vpack.c.b16 %v4827, %v4826
    %v4838 = vpack.c.b16 %v4829, %v4828
    %v4839 = vpack.c.b16 %v4831, %v4830
    %4848 = vmatprep.subr.bf16.mxu0 0
    %4849 = vmatpush1.bf16.msra.mxu0 %v4832
    %4850 = vmatprep.subr.bf16.mxu0 0
    %4851 = vmatpush1.bf16.msra.mxu0 %v4833
    %4852 = vmatprep.subr.bf16.mxu0 0
    %4853 = vmatpush1.bf16.msra.mxu0 %v4834
    %4854 = vmatprep.subr.bf16.mxu0 0
    %4855 = vmatpush1.bf16.msra.mxu0 %v4835
    %4856 = vmatprep.subr.bf16.mxu0 0
    %4857 = vmatpush1.bf16.msra.mxu0 %v4836
    %4858 = vmatprep.subr.bf16.mxu0 0
    %4859 = vmatpush1.bf16.msra.mxu0 %v4837
    %4860 = vmatprep.subr.bf16.mxu0 0
    %4861 = vmatpush1.bf16.msra.mxu0 %v4838
    %4862 = vmatprep.subr.bf16.mxu0 0
    %4863 = vmatpush1.bf16.msra.mxu0 %v4839
    %4864 = vmatprep.subr.bf16.mxu0 0
    %4865 = vmatpush1.bf16.msra.mxu0 0
    %4866 = vmatprep.subr.bf16.mxu0 0
    %4867 = vmatpush1.bf16.msra.mxu0 0
    %4868 = vmatprep.subr.bf16.mxu0 0
    %4869 = vmatpush1.bf16.msra.mxu0 0
    %4870 = vmatprep.subr.bf16.mxu0 0
    %4871 = vmatpush1.bf16.msra.mxu0 0
    %4872 = vmatprep.subr.bf16.mxu0 0
    %4873 = vmatpush1.bf16.msra.mxu0 0
    %4874 = vmatprep.subr.bf16.mxu0 0
    %4875 = vmatpush1.bf16.msra.mxu0 0
    %4876 = vmatprep.subr.bf16.mxu0 0
    %4877 = vmatpush1.bf16.msra.mxu0 0
    %4878 = vmatprep.subr.bf16.mxu0 0
    %4879 = vmatpush1.bf16.msra.mxu0 0
    %4880 = vmatprep.mubr.bf16.mxu0 0
    %4881 = vmatmul.mubr.bf16.gmra.mrb[0].mxu0 %v2689
    %v4882 = vpop.f32.mrb[0].mxu0
    %v4883 = vadd.f32 %v4798, %v4882
    %v4884 = vpop.f32.mrb[0].mxu0
    %v4885 = vpop.f32.mrb[0].mxu0
    %v4886 = vadd.f32 %v4798, %v4885
    %v4887 = vpop.f32.mrb[0].mxu0
    %4888 = vdwg.mxu0
    %v4889 = vmul.f32 %v4883, %v4883
    %v4890 = vmul.f32 %v4886, %v4886
    %v4891 = vmul.f32 %v4883, %v4889
    %v4892 = vmul.f32 %v4886, %v4890
    %v4893 = vmul.f32 %v4891, 0.044715
    %v4894 = vmul.f32 %v4892, 0.044715
    %v4895 = vadd.f32 %v4883, %v4893
    %v4896 = vadd.f32 %v4886, %v4894
    %v4897 = vmul.f32 %v4895, 0.7978846
    %v4898 = vmul.f32 %v4896, 0.7978846
    %v4899 = vtanh.pop %v4897
    %v4900 = vtanh.pop %v4898
    %v4901 = vadd.f32 %v4899, 1.0
    %v4902 = vadd.f32 %v4900, 1.0
    %v4903 = vmul.f32 %v4901, 0.5
    %v4904 = vmul.f32 %v4902, 0.5
    %v4905 = vmul.f32 %v4883, %v4903
    %v4906 = vmul.f32 %v4886, %v4904
    %v4907 = vmul.f32 %v4769, %v4580
    %v4908 = vmul.f32 %v4774, %v4583
    %v4909 = vadd.f32 %v4907, %v4905
    %v4910 = vadd.f32 %v4908, %v4906
    %v4911 = vpack.c.bf16 %v4910, %v4909
    %v4912 = vld [vmem:[#allocation28] sm:$0xf]
    %v4913 = vld [vmem:[#allocation28 + $0x4] sm:$0xf]
    %v4914 = vld [vmem:[#allocation28 + $0x8] sm:$0xf]
    %v4915 = vld [vmem:[#allocation28 + $0xc] sm:$0xf]
    %v4916 = vld [vmem:[#allocation28 + $0x10] sm:$0xf]
    %v4917 = vld [vmem:[#allocation28 + $0x14] sm:$0xf]
    %v4918 = vld [vmem:[#allocation28 + $0x18] sm:$0xf]
    %v4919 = vld [vmem:[#allocation28 + $0x1c] sm:$0xf]
    %v4920 = vld [vmem:[#allocation28 + $0x20] sm:$0xf]
    %v4921 = vld [vmem:[#allocation28 + $0x24] sm:$0xf]
    %v4922 = vld [vmem:[#allocation28 + $0x28] sm:$0xf]
    %v4923 = vld [vmem:[#allocation28 + $0x2c] sm:$0xf]
    %v4924 = vld [vmem:[#allocation28 + $0x30] sm:$0xf]
    %v4925 = vld [vmem:[#allocation28 + $0x34] sm:$0xf]
    %v4926 = vld [vmem:[#allocation28 + $0x38] sm:$0xf]
    %v4927 = vld [vmem:[#allocation28 + $0x3c] sm:$0xf]
    %v4944 = vunpack.c.l.b16 %v4912
    %v4945 = vunpack.c.l.b16 %v4913
    %v4946 = vunpack.c.l.b16 %v4914
    %v4947 = vunpack.c.l.b16 %v4915
    %v4948 = vunpack.c.l.b16 %v4916
    %v4949 = vunpack.c.l.b16 %v4917
    %v4950 = vunpack.c.l.b16 %v4918
    %v4951 = vunpack.c.l.b16 %v4919
    %v4952 = vunpack.c.l.b16 %v4920
    %v4953 = vunpack.c.l.b16 %v4921
    %v4954 = vunpack.c.l.b16 %v4922
    %v4955 = vunpack.c.l.b16 %v4923
    %v4956 = vunpack.c.l.b16 %v4924
    %v4957 = vunpack.c.l.b16 %v4925
    %v4958 = vunpack.c.l.b16 %v4926
    %v4959 = vunpack.c.l.b16 %v4927
    %v4960 = vpack.c.b16 %v4945, %v4944
    %v4961 = vpack.c.b16 %v4947, %v4946
    %v4962 = vpack.c.b16 %v4949, %v4948
    %v4963 = vpack.c.b16 %v4951, %v4950
    %v4964 = vpack.c.b16 %v4953, %v4952
    %v4965 = vpack.c.b16 %v4955, %v4954
    %v4966 = vpack.c.b16 %v4957, %v4956
    %v4967 = vpack.c.b16 %v4959, %v4958
    %4976 = vmatprep.subr.bf16.mxu0 0
    %4977 = vmatpush1.bf16.msra.mxu0 %v4960
    %4978 = vmatprep.subr.bf16.mxu0 0
    %4979 = vmatpush1.bf16.msra.mxu0 %v4961
    %4980 = vmatprep.subr.bf16.mxu0 0
    %4981 = vmatpush1.bf16.msra.mxu0 %v4962
    %4982 = vmatprep.subr.bf16.mxu0 0
    %4983 = vmatpush1.bf16.msra.mxu0 %v4963
    %4984 = vmatprep.subr.bf16.mxu0 0
    %4985 = vmatpush1.bf16.msra.mxu0 %v4964
    %4986 = vmatprep.subr.bf16.mxu0 0
    %4987 = vmatpush1.bf16.msra.mxu0 %v4965
    %4988 = vmatprep.subr.bf16.mxu0 0
    %4989 = vmatpush1.bf16.msra.mxu0 %v4966
    %4990 = vmatprep.subr.bf16.mxu0 0
    %4991 = vmatpush1.bf16.msra.mxu0 %v4967
    %4992 = vmatprep.subr.bf16.mxu0 0
    %4993 = vmatpush1.bf16.msra.mxu0 0
    %4994 = vmatprep.subr.bf16.mxu0 0
    %4995 = vmatpush1.bf16.msra.mxu0 0
    %4996 = vmatprep.subr.bf16.mxu0 0
    %4997 = vmatpush1.bf16.msra.mxu0 0
    %4998 = vmatprep.subr.bf16.mxu0 0
    %4999 = vmatpush1.bf16.msra.mxu0 0
    %5000 = vmatprep.subr.bf16.mxu0 0
    %5001 = vmatpush1.bf16.msra.mxu0 0
    %5002 = vmatprep.subr.bf16.mxu0 0
    %5003 = vmatpush1.bf16.msra.mxu0 0
    %5004 = vmatprep.subr.bf16.mxu0 0
    %5005 = vmatpush1.bf16.msra.mxu0 0
    %5006 = vmatprep.subr.bf16.mxu0 0
    %5007 = vmatpush1.bf16.msra.mxu0 0
    %5008 = vmatprep.mubr.bf16.mxu0 0
    %5009 = vmatmul.mubr.bf16.gmra.mrb[0].mxu0 %v4911
    %v5010 = vpop.f32.mrb[0].mxu0
    %v5011 = vadd.f32 0.0, %v5010
    %v5012 = vpop.f32.mrb[0].mxu0
    %v5013 = vpop.f32.mrb[0].mxu0
    %v5014 = vadd.f32 0.0, %v5013
    %v5015 = vpop.f32.mrb[0].mxu0
    %5016 = vdwg.mxu0
    %v5017 = vadd.f32 %v2564, %v5011
    %v5018 = vadd.f32 %v2565, %v5014
    %v5019 = vld [vmem:[%s57] sm:$0x1]
    %v5021 = vlaneseq
    %v5022 = vshrl.u32 %v5021, 7
    %v5023 = vsub.s32 0, %v5022
    %v5024 = vrot.slane %v5019, %v5023
    %v5026 = vadd.f32 %v5017, %v5024
    %v5027 = vadd.f32 %v5018, %v5024
    %5028 = vst [vmem:[#allocation29] sm:$0xff] %v5026
    %5029 = vst [vmem:[#allocation29 + $0x8] sm:$0xff] %v5027
    // Predicated region
    $region186: #{tpu_custom_call.1} parent=1 // pred_check
      _
    $region187: #{tpu_custom_call.1} parent=1 // pred_check_branch
      %5031 = sbr.rel (0) target = $region189
    $region188: #{tpu_custom_call.1} parent=1 // pred_region
      %s5033 = ssub.s32 256, 256
      %5034 = vsyncadd [#allocation4], %s5033
      %s5035 = sshll.u32 [#allocation29], 4
      %s5036 = int_to_ptr.vmem [resolvable:$true] %s5035
      %5041 = dma.vmem_to_hbm [thread:$0]  %s5036, 256, %s59, [#allocation4], 128, 128, 8
    $region189: #{tpu_custom_call.1} parent=1 // pred_fallthru
      _
    // Predicated region
    $region190: #{tpu_custom_call.1} parent=1 // pred_check
      _
    $region191: #{tpu_custom_call.1} parent=1 // pred_check_branch
      %5043 = sbr.rel (0) target = $region193
    $region192: #{tpu_custom_call.1} parent=1 // pred_region
      %5044 = dma.done [#allocation4], 256
    $region193: #{tpu_custom_call.1} parent=1 // pred_fallthru
      _
    %5045 = vsyncpa [#allocation3], 1
    %5046 = vsyncpa [#allocation6], 1
    %5047 = vsyncpa [#allocation9], 1
    %5048 = vsyncpa [#allocation12], 1
    %5049 = vsyncpa [#allocation15], 1
    %5050 = vsyncpa [#allocation18], 1
    %5051 = vsyncpa [#allocation21], 1
    %5052 = vsyncpa [#allocation24], 1
    %5053 = vsyncpa [#allocation27], 1
    %5054 = vsyncpa [#allocation4], 1

</llo_original>
